<compile_context>
chip_gen: v7x
topology: tpu7x:2x2x1
jax: 0.10.0
libtpu: 0.0.40
codegen_flags: <defaults>
</compile_context>

<pallas_src>
import jax
import jax.numpy as jnp
from jax import lax
from jax.experimental import pallas as pl
from jax.experimental.pallas import tpu as pltpu


BP = 8     # batch padded to a full sublane extent
LP = 128   # lane-dense label / logit width


# ============================ Pallas kernels ============================

def _bilstm_linear_kernel(x_ref, wih2_ref, wrec_ref, b2_ref, h0_ref, c0_ref,
                          wlin_ref, blin_ref, logits_ref, gx_scr, out_scr):
    """Fused bidirectional LSTM (PyTorch nn.LSTM semantics) + output Linear.

    layout (all f32, batch padded to Bp=8 sublanes):
      x_ref      (S*Bp, E)   time-major rows [t*Bp + b]
      wih2_ref   (E, 8H)     input weights; gate blocks [i|f|g|o], each [fwd H | bwd H]
      wrec_ref   (2H, 8H)    block-diagonal recurrent weights (rows: [h_fwd ; h_bwd])
      b2_ref     (1, 8H)     bias_ih + bias_hh, same gate-block layout
      h0/c0_ref  (Bp, 2H)    initial state, layout [fwd | bwd]
      wlin_ref   (2H, LP)    Linear weight.T, lane-padded to LP
      blin_ref   (1, LP)
      logits_ref (S*Bp, LP)  lane-dense logits output
      gx_scr     (S*Bp, 8H)  hoisted input projection for both directions
      out_scr    (S*Bp, 2H)  BiLSTM hidden states [h_fwd_t | h_bwd_t]
    """
    SB, _ = x_ref.shape
    Bp, H2 = h0_ref.shape
    H = H2 // 2
    G8 = wih2_ref.shape[1]
    S = SB // Bp

    # (1) input projection for BOTH directions hoisted out of the recurrent loop.
    gx_scr[...] = jnp.dot(x_ref[...], wih2_ref[...],
                          preferred_element_type=jnp.float32)

    b2 = b2_ref[...]
    lane = lax.broadcasted_iota(jnp.int32, (1, G8), 1)
    fwd_lanes = (lane % H2) < H      # first H lanes of each 2H gate block = forward dir

    h = h0_ref[...]                  # (Bp, 2H) layout [fwd | bwd]
    c = c0_ref[...]

    # (2) short recurrent loop, fully unrolled. Backward direction indexes the
    #     precomputed projections at time S-1-t (in-kernel reversal).
    for t in range(S):
        rt = S - 1 - t
        # one recurrent matmul covers both directions (block-diagonal W_rec)
        grec = jnp.dot(h, wrec_ref[...], preferred_element_type=jnp.float32)   # (Bp, 8H)
        gx_t = gx_scr[t * Bp:(t + 1) * Bp, :]
        gx_r = gx_scr[rt * Bp:(rt + 1) * Bp, :]
        gates = grec + jnp.where(fwd_lanes, gx_t, gx_r) + b2
        # (3) two full-width transcendental passes, then 2H-wide slices whose
        #     [fwd | bwd] layout matches h / c directly.
        sig = jax.nn.sigmoid(gates)
        tnh = jnp.tanh(gates)
        i_g = sig[:, 0 * H2:1 * H2]
        f_g = sig[:, 1 * H2:2 * H2]
        g_g = tnh[:, 2 * H2:3 * H2]
        o_g = sig[:, 3 * H2:4 * H2]
        c = f_g * c + i_g * g_g
        h = o_g * jnp.tanh(c)
        # forward hidden belongs to time t, backward hidden to time rt
        out_scr[t * Bp:(t + 1) * Bp, 0:H] = h[:, 0:H]
        out_scr[rt * Bp:(rt + 1) * Bp, H:H2] = h[:, H:H2]

    # (4) fused output Linear over all timesteps at once, lane-dense store.
    logits_ref[...] = (jnp.dot(out_scr[...], wlin_ref[...],
                               preferred_element_type=jnp.float32) + blin_ref[...])


def bilstm_linear_pallas(x2d, wih2, wrec, b2, h0, c0, wlin_p, blin_p):
    SB = x2d.shape[0]
    Lp = wlin_p.shape[1]
    G8 = wih2.shape[1]
    H2 = h0.shape[1]
    return pl.pallas_call(
        _bilstm_linear_kernel,
        out_shape=jax.ShapeDtypeStruct((SB, Lp), jnp.float32),
        in_specs=[pl.BlockSpec(memory_space=pltpu.MemorySpace.VMEM)] * 8,
        out_specs=pl.BlockSpec(memory_space=pltpu.MemorySpace.VMEM),
        scratch_shapes=[pltpu.VMEM((SB, G8), jnp.float32),
                        pltpu.VMEM((SB, H2), jnp.float32)],
    )(x2d, wih2, wrec, b2, h0, c0, wlin_p, blin_p)


def _crf_loglik_kernel(logits_ref, oh_tags_ref, mask_ref, oh_last_ref,
                       trans_ref, exp_trans_ref, start_ref, end_ref, out_ref):
    """AllenNLP ConditionalRandomField log-likelihood (gold score - log partition).

    All tensors are lane/sublane-padded:
      logits_ref    (S, Bp, LP)  emissions (0 in padded lanes/rows)
      oh_tags_ref   (S, Bp, LP)  one-hot gold tags
      mask_ref      (S, Bp, LP)  mask broadcast across lanes
      oh_last_ref   (Bp, LP)     one-hot of last valid tag per row
      trans_ref     (LP, LP)     transitions, 0-padded (only gathered at real tags)
      exp_trans_ref (LP, LP)     exp(transitions), exact 0 in padded rows/cols
      start/end_ref (1, LP)      start/end scores, -1e9 in padded lanes
      out_ref       (Bp, LP)     per-row log-likelihood broadcast across lanes
    """
    S, Bp, Lp = logits_ref.shape
    start = start_ref[...]
    end = end_ref[...]
    oh_last = oh_last_ref[...]

    # ---------- numerator: gold path score, accumulated per-lane ----------
    svec = start * oh_tags_ref[0]                                    # (Bp, LP)
    for i in range(S - 1):                       # fully unrolled (short & static)
        oh_cur = oh_tags_ref[i]
        oh_nxt = oh_tags_ref[i + 1]
        emit = logits_ref[i] * oh_cur * mask_ref[i]
        trans_row = jnp.dot(oh_cur, trans_ref[...],                  # gather trans[tags[i], :]
                            preferred_element_type=jnp.float32)
        svec = svec + emit + trans_row * oh_nxt * mask_ref[i + 1]
    svec = svec + end * oh_last + logits_ref[S - 1] * oh_last * mask_ref[S - 1]
    score = jnp.sum(svec, axis=1, keepdims=True)                     # (Bp, 1)

    # ---------- denominator: forward algorithm, exp-space matmul LSE ----------
    alpha = start + logits_ref[0]                                    # (Bp, LP)
    for t in range(1, S):                        # fully unrolled
        m = jnp.max(alpha, axis=1, keepdims=True)
        ealpha = jnp.exp(alpha - m)
        summed = jnp.dot(ealpha, exp_trans_ref[...],                 # LSE_i(alpha_i + trans_ij)
                         preferred_element_type=jnp.float32)
        new_alpha = jnp.log(summed + 1e-30) + m + logits_ref[t]
        alpha = jnp.where(mask_ref[t] > 0.5, new_alpha, alpha)
    stops = alpha + end
    mx = jnp.max(stops, axis=1, keepdims=True)
    denom = jnp.log(jnp.sum(jnp.exp(stops - mx), axis=1, keepdims=True)) + mx

    out_ref[...] = jnp.broadcast_to(score - denom, (Bp, Lp))


def crf_loglik_pallas(logits_tm, oh_tags_tm, mask_tm, oh_last,
                      trans_p, exp_trans_p, start_p, end_p):
    _, Bp, Lp = logits_tm.shape
    return pl.pallas_call(
        _crf_loglik_kernel,
        out_shape=jax.ShapeDtypeStruct((Bp, Lp), jnp.float32),
        in_specs=[pl.BlockSpec(memory_space=pltpu.MemorySpace.VMEM)] * 8,
        out_specs=pl.BlockSpec(memory_space=pltpu.MemorySpace.VMEM),
    )(logits_tm, oh_tags_tm, mask_tm, oh_last, trans_p, exp_trans_p, start_p, end_p)


# ============================ JAX glue ============================

# BIO constraint mask for labels ('O', 'B-KEY', 'I-KEY'),
# = allennlp allowed_transitions('BIO', {0:'O', 1:'B-KEY', 2:'I-KEY'}).
_BIO_TRANS_ALLOWED = jnp.array([[1., 1., 0.],
                                [1., 1., 1.],
                                [1., 1., 1.]], jnp.float32)
_BIO_START_ALLOWED = jnp.array([1., 1., 0.], jnp.float32)
_BIO_END_ALLOWED = jnp.array([1., 1., 1.], jnp.float32)
_NEG = -10000.0


def _interleave_gate_blocks(wf_t, wb_t):
    """(X, 4H) fwd + (X, 4H) bwd -> (X, 8H) with per-gate [fwd | bwd] column blocks."""
    X, G = wf_t.shape
    H = G // 4
    return jnp.concatenate([wf_t.reshape(X, 4, H), wb_t.reshape(X, 4, H)],
                           axis=2).reshape(X, 8 * H)


def clear_subtokens(logits, labels, mask):
    """Compact non-(-100) label positions to the front of each row (== torch version)."""
    B, S, L = logits.shape
    valid = labels != -100
    counts = jnp.sum(valid, axis=1)
    order = jnp.argsort(jnp.logical_not(valid), axis=1)       # stable: valid positions first
    pos = jnp.arange(S)[None, :]
    keep = pos < counts[:, None]
    clear_labels = jnp.where(keep, jnp.take_along_axis(labels, order, axis=1), 0)
    clear_logits = jnp.where(keep[..., None],
                             jnp.take_along_axis(logits, order[..., None], axis=1), 0.0)
    clear_mask = keep.astype(mask.dtype)
    return clear_logits, clear_labels, clear_mask, order, valid, counts


def viterbi_decode(logits, mask, trans_c, start_c, end_c):
    """Batched constrained Viterbi (AllenNLP viterbi_tags, top_k=1). JAX glue (backtrace)."""
    B, S, L = logits.shape
    m = mask.astype(bool)
    ident = jnp.arange(L, dtype=jnp.int32)
    score0 = start_c[None, :] + logits[:, 0, :]

    def fwd(score, xs):
        e_t, m_t = xs
        brd = score[:, :, None] + trans_c[None, :, :]          # (B, from, to)
        best_prev = jnp.argmax(brd, axis=1).astype(jnp.int32)
        new_score = jnp.max(brd, axis=1) + e_t
        score = jnp.where(m_t[:, None], new_score, score)
        bp = jnp.where(m_t[:, None], best_prev, ident[None, :])
        return score, bp

    xs = (jnp.transpose(logits[:, 1:, :], (1, 0, 2)), jnp.transpose(m[:, 1:], (1, 0)))
    score_f, bps = lax.scan(fwd, score0, xs)
    last_tag = jnp.argmax(score_f + end_c[None, :], axis=1).astype(jnp.int32)

    def bwd(cur, bp_t):
        prev = jnp.take_along_axis(bp_t, cur[:, None], axis=1)[:, 0]
        return prev, cur

    first_tag, rest = lax.scan(bwd, last_tag, bps, reverse=True)
    path = jnp.concatenate([first_tag[None, :], rest], axis=0)   # (S, B)
    return jnp.transpose(path, (1, 0))


def init_params(key, vocab, E, H, L, B):
    ks = jax.random.split(key, 18)
    s = 0.1
    p = {}
    p['embed'] = jax.random.normal(ks[0], (vocab, E), jnp.float32) * 0.5
    # nn.LSTM(E, H, bidirectional=True): forward + reverse weights
    p['w_ih_f'] = jax.random.normal(ks[1], (4 * H, E), jnp.float32) * s
    p['w_hh_f'] = jax.random.normal(ks[2], (4 * H, H), jnp.float32) * s
    p['b_ih_f'] = jax.random.normal(ks[3], (4 * H,), jnp.float32) * s
    p['b_hh_f'] = jax.random.normal(ks[4], (4 * H,), jnp.float32) * s
    p['w_ih_b'] = jax.random.normal(ks[5], (4 * H, E), jnp.float32) * s
    p['w_hh_b'] = jax.random.normal(ks[6], (4 * H, H), jnp.float32) * s
    p['b_ih_b'] = jax.random.normal(ks[7], (4 * H,), jnp.float32) * s
    p['b_hh_b'] = jax.random.normal(ks[8], (4 * H,), jnp.float32) * s
    # nn.Linear(2H, L)
    p['w_lin'] = jax.random.normal(ks[9], (L, 2 * H), jnp.float32) * s
    p['b_lin'] = jax.random.normal(ks[10], (L,), jnp.float32) * s
    # ConditionalRandomField
    p['crf_trans'] = jax.random.normal(ks[11], (L, L), jnp.float32) * s
    p['crf_start'] = jax.random.normal(ks[12], (L,), jnp.float32) * s
    p['crf_end'] = jax.random.normal(ks[13], (L,), jnp.float32) * s
    # rand_init_hidden (torch.randn in the original forward) -> deterministic here
    p['h0'] = jax.random.normal(ks[14], (2, B, H), jnp.float32)
    p['c0'] = jax.random.normal(ks[15], (2, B, H), jnp.float32)
    return p


def bert_lstm_crf_forward(params, input_ids, attention_mask, labels):
    B, S = input_ids.shape
    H = params['w_hh_f'].shape[1]
    L = params['w_lin'].shape[0]
    Bp, Lp = BP, LP

    # TODO(synk): the external `bert_model` encoder is stubbed as a deterministic embedding lookup.
    seq_out = jnp.take(params['embed'], input_ids, axis=0)               # (B, S, E)

    # ---- fused BiLSTM + Linear (one Pallas call, time-major, batch padded to 8) ----
    x_tm = jnp.transpose(seq_out, (1, 0, 2)).astype(jnp.float32)         # (S, B, E)
    x2d = jnp.pad(x_tm, ((0, 0), (0, Bp - B), (0, 0))).reshape(S * Bp, -1)

    wih2 = _interleave_gate_blocks(params['w_ih_f'].T, params['w_ih_b'].T)      # (E, 8H)
    zH = jnp.zeros_like(params['w_hh_f'].T)
    wrec = jnp.concatenate([_interleave_gate_blocks(params['w_hh_f'].T, zH),
                            _interleave_gate_blocks(zH, params['w_hh_b'].T)],
                           axis=0)                                        # (2H, 8H)
    b2 = _interleave_gate_blocks((params['b_ih_f'] + params['b_hh_f'])[None, :],
                                 (params['b_ih_b'] + params['b_hh_b'])[None, :])  # (1, 8H)
    h0 = jnp.pad(jnp.concatenate([params['h0'][0], params['h0'][1]], axis=1),
                 ((0, Bp - B), (0, 0)))
    c0 = jnp.pad(jnp.concatenate([params['c0'][0], params['c0'][1]], axis=1),
                 ((0, Bp - B), (0, 0)))
    wlin_p = jnp.pad(params['w_lin'].T, ((0, 0), (0, Lp - L)))           # (2H, LP)
    blin_p = jnp.pad(params['b_lin'][None, :], ((0, 0), (0, Lp - L)))

    # output_dropout: identity (eval mode)
    logits2d = bilstm_linear_pallas(x2d, wih2, wrec, b2, h0, c0, wlin_p, blin_p)
    logits = jnp.transpose(logits2d.reshape(S, Bp, Lp)[:, :B, :L], (1, 0, 2))   # (B, S, L)

    clear_logits, clear_labels, clear_mask, order, valid, counts = clear_subtokens(
        logits, labels, attention_mask)

    # ---- CRF Viterbi decode with BIO constraints (JAX glue: data-dependent backtrace) ----
    trans_c = params['crf_trans'] * _BIO_TRANS_ALLOWED + _NEG * (1.0 - _BIO_TRANS_ALLOWED)
    start_c = params['crf_start'] * _BIO_START_ALLOWED + _NEG * (1.0 - _BIO_START_ALLOWED)
    end_c = params['crf_end'] * _BIO_END_ALLOWED + _NEG * (1.0 - _BIO_END_ALLOWED)
    preds = viterbi_decode(clear_logits, clear_mask, trans_c, start_c, end_c)

    # ---- CRF log-likelihood (Pallas, lane/sublane-padded to (Bp, LP)) ----
    PAD_NEG = -1e9
    cl_tm = jnp.pad(jnp.transpose(clear_logits, (1, 0, 2)),
                    ((0, 0), (0, Bp - B), (0, Lp - L)))                  # (S, Bp, LP)
    oh_tags = jax.nn.one_hot(clear_labels, Lp, dtype=jnp.float32)        # (B, S, LP)
    oh_tags_tm = jnp.pad(jnp.transpose(oh_tags, (1, 0, 2)), ((0, 0), (0, Bp - B), (0, 0)))
    mask_f = clear_mask.astype(jnp.float32)
    mask_tm = jnp.pad(jnp.broadcast_to(jnp.transpose(mask_f, (1, 0))[:, :, None], (S, B, Lp)),
                      ((0, 0), (0, Bp - B), (0, 0)))
    last_idx = jnp.maximum(counts - 1, 0).astype(jnp.int32)
    # TODO(synk): a row with zero valid labels falls back to tag 0 here (AllenNLP behavior differs).
    last_tags = jnp.take_along_axis(clear_labels, last_idx[:, None], axis=1)[:, 0]
    oh_last = jnp.pad(jax.nn.one_hot(last_tags, Lp, dtype=jnp.float32), ((0, Bp - B), (0, 0)))

    trans_p = jnp.zeros((Lp, Lp), jnp.float32).at[:L, :L].set(params['crf_trans'])
    exp_trans_p = jnp.zeros((Lp, Lp), jnp.float32).at[:L, :L].set(jnp.exp(params['crf_trans']))
    start_p = jnp.full((1, Lp), PAD_NEG, jnp.float32).at[0, :L].set(params['crf_start'])
    end_p = jnp.full((1, Lp), PAD_NEG, jnp.float32).at[0, :L].set(params['crf_end'])

    ll = crf_loglik_pallas(cl_tm, oh_tags_tm, mask_tm, oh_last,
                           trans_p, exp_trans_p, start_p, end_p)          # (Bp, LP)
    loss = -jnp.sum(ll[:B, 0])

    # scatter predicted tags back onto the original (non -100) positions
    inv_order = jnp.argsort(order, axis=1)
    correct_preds = jnp.take_along_axis(preds, inv_order, axis=1) * valid.astype(preds.dtype)
    return loss, logits, correct_preds


# ============================ pure-JAX reference (for validation) ============================

def _lstm_dir_ref(x_tm, wih_t, whh_t, b, h0, c0):
    H = h0.shape[1]

    def step(carry, x_t):
        h, c = carry
        g = x_t @ wih_t + h @ whh_t + b[0]
        i = jax.nn.sigmoid(g[:, :H]); f = jax.nn.sigmoid(g[:, H:2 * H])
        gg = jnp.tanh(g[:, 2 * H:3 * H]); o = jax.nn.sigmoid(g[:, 3 * H:])
        c = f * c + i * gg
        h = o * jnp.tanh(c)
        return (h, c), h

    _, hs = lax.scan(step, (h0, c0), x_tm)
    return hs


def _crf_ll_ref(logits, tags, mask, trans, start, end):
    B, S, L = logits.shape
    lt = jnp.transpose(logits, (1, 0, 2)); tt = jnp.transpose(tags, (1, 0))
    mt = jnp.transpose(mask, (1, 0))
    score = start[tt[0]]

    def nb(i, s):
        cur = tt[i]; nxt = tt[i + 1]
        ts = trans[cur, nxt]
        es = lt[i][jnp.arange(B), cur]
        return s + ts * mt[i + 1] + es * mt[i]

    score = lax.fori_loop(0, S - 1, nb, score)
    last_idx = jnp.sum(mt, axis=0).astype(jnp.int32) - 1
    last_tags = tt[last_idx, jnp.arange(B)]
    score = score + end[last_tags] + lt[S - 1][jnp.arange(B), last_tags] * mt[S - 1]

    alpha = start[None, :] + lt[0]

    def db(t, alpha):
        inner = alpha[:, :, None] + lt[t][:, None, :] + trans[None, :, :]
        na = jax.scipy.special.logsumexp(inner, axis=1)
        m = mt[t][:, None]
        return na * m + alpha * (1.0 - m)

    alpha = lax.fori_loop(1, S, db, alpha)
    denom = jax.scipy.special.logsumexp(alpha + end[None, :], axis=1)
    return jnp.sum(score - denom)


def reference_forward(params, input_ids, attention_mask, labels):
    B, S = input_ids.shape
    H = params['w_hh_f'].shape[1]
    L = params['w_lin'].shape[0]
    seq_out = jnp.take(params['embed'], input_ids, axis=0)
    x_tm = jnp.transpose(seq_out, (1, 0, 2)).astype(jnp.float32)
    wf = (params['w_ih_f'].T, params['w_hh_f'].T, (params['b_ih_f'] + params['b_hh_f'])[None, :])
    wb = (params['w_ih_b'].T, params['w_hh_b'].T, (params['b_ih_b'] + params['b_hh_b'])[None, :])
    hf = _lstm_dir_ref(x_tm, *wf, params['h0'][0], params['c0'][0])
    hb = _lstm_dir_ref(x_tm[::-1], *wb, params['h0'][1], params['c0'][1])[::-1]
    out = jnp.concatenate([hf, hb], axis=-1)
    flat = jnp.transpose(out, (1, 0, 2)).reshape(B * S, 2 * H)
    logits = (flat @ params['w_lin'].T + params['b_lin']).reshape(B, S, L)
    cl, clab, cm, _, _, _ = clear_subtokens(logits, labels, attention_mask)
    ll = _crf_ll_ref(cl, clab, cm.astype(jnp.float32),
                     params['crf_trans'], params['crf_start'], params['crf_end'])
    return -ll, logits


# ============================ main ============================

if __name__ == "__main__":
    B, S, E, H, L, V = 2, 8, 32, 32, 3, 50
    key = jax.random.PRNGKey(0)
    pkey, ikey = jax.random.split(key)
    params = init_params(pkey, V, E, H, L, B)

    input_ids = jax.random.randint(ikey, (B, S), 0, V, dtype=jnp.int32)
    attention_mask = jnp.array([[1, 1, 1, 1, 1, 1, 1, 1],
                                [1, 1, 1, 1, 1, 1, 0, 0]], jnp.int32)
    labels = jnp.array([[0, 1, 2, -100, 0, -100, 1, 2],
                        [1, -100, 2, 0, 1, 0, -100, -100]], jnp.int32)

    loss, logits, correct_preds = jax.jit(bert_lstm_crf_forward)(
        params, input_ids, attention_mask, labels)
    jax.block_until_ready((loss, logits, correct_preds))

    ref_loss, ref_logits = jax.jit(reference_forward)(params, input_ids, attention_mask, labels)
    jax.block_until_ready((ref_loss, ref_logits))

    assert logits.shape == (B, S, L)
    assert correct_preds.shape == (B, S)
    assert bool(jnp.isfinite(loss))
    assert bool(jnp.allclose(logits, ref_logits, atol=2e-2, rtol=2e-2))
    assert bool(jnp.allclose(loss, ref_loss, atol=2e-2, rtol=2e-2))

    print("KERNEL_OK")
</pallas_src>

<mosaic_0001>
module attributes {stable_mosaic.version = 11 : i64} {
  func.func @_bilstm_linear_kernel(%arg0: memref<64x32xf32, #tpu.memory_space<vmem>>, %arg1: memref<32x256xf32, #tpu.memory_space<vmem>>, %arg2: memref<64x256xf32, #tpu.memory_space<vmem>>, %arg3: memref<1x256xf32, #tpu.memory_space<vmem>>, %arg4: memref<8x64xf32, #tpu.memory_space<vmem>>, %arg5: memref<8x64xf32, #tpu.memory_space<vmem>>, %arg6: memref<64x128xf32, #tpu.memory_space<vmem>>, %arg7: memref<1x128xf32, #tpu.memory_space<vmem>>, %arg8: memref<64x128xf32, #tpu.memory_space<vmem>>, %arg9: memref<64x256xf32, #tpu.memory_space<vmem>>, %arg10: memref<64x64xf32, #tpu.memory_space<vmem>>) attributes {dimension_semantics = [], scalar_prefetch = 0 : i64, scratch_operands = 2 : i64, tpu.core_type = #tpu.core_type<tc>} {
    %c0 = arith.constant 0 : index
    %c0_0 = arith.constant 0 : index
    %0 = vector.load %arg0[%c0, %c0_0] : memref<64x32xf32, #tpu.memory_space<vmem>>, vector<64x32xf32>
    %c0_1 = arith.constant 0 : index
    %c0_2 = arith.constant 0 : index
    %1 = vector.load %arg1[%c0_1, %c0_2] : memref<32x256xf32, #tpu.memory_space<vmem>>, vector<32x256xf32>
    %cst = arith.constant dense<0.000000e+00> : vector<64x256xf32>
    %2 = tpu.matmul %0, %1, %cst {dimension_numbers = #tpu.dot_dimension_numbers<[1], [0], [0], [1], [0, 0, 1, 1], [], []>} : vector<64x32xf32>, vector<32x256xf32>, vector<64x256xf32> -> vector<64x256xf32>
    %c0_3 = arith.constant 0 : index
    %c0_4 = arith.constant 0 : index
    %3 = vector.load %arg9[%c0_3, %c0_4] : memref<64x256xf32, #tpu.memory_space<vmem>>, vector<64x256xf32>
    tpu.vector_store %arg9[%c0_3, %c0_4], %2 {strides = array<i32>} : memref<64x256xf32, #tpu.memory_space<vmem>>, vector<64x256xf32>,
    %c0_5 = arith.constant 0 : index
    %c0_6 = arith.constant 0 : index
    %4 = vector.load %arg3[%c0_5, %c0_6] : memref<1x256xf32, #tpu.memory_space<vmem>>, vector<1x256xf32>
    %5 = tpu.iota {dimensions = array<i32: 1>} : vector<1x256xi32>
    %c64_i32 = arith.constant 64 : i32
    %c0_i32 = arith.constant 0 : i32
    %6 = arith.cmpi eq, %c64_i32, %c0_i32 : i32
    %c1_i32 = arith.constant 1 : i32
    %7 = arith.select %6, %c1_i32, %c64_i32 : i32
    %8 = vector.broadcast %7 : i32 to vector<1x256xi32>
    %9 = arith.remsi %5, %8 : vector<1x256xi32>
    %c0_i32_7 = arith.constant 0 : i32
    %10 = vector.broadcast %c0_i32_7 : i32 to vector<1x256xi32>
    %11 = arith.cmpi ne, %9, %10 : vector<1x256xi32>
    %c0_i32_8 = arith.constant 0 : i32
    %12 = vector.broadcast %c0_i32_8 : i32 to vector<1x256xi32>
    %13 = arith.cmpi slt, %9, %12 : vector<1x256xi32>
    %c0_i32_9 = arith.constant 0 : i32
    %14 = arith.cmpi slt, %7, %c0_i32_9 : i32
    %15 = vector.broadcast %14 : i1 to vector<1x256xi1>
    %16 = vector.broadcast %15 : vector<1x256xi1> to vector<1x256xi1>
    %17 = arith.xori %13, %16 : vector<1x256xi1>
    %18 = arith.andi %17, %11 : vector<1x256xi1>
    %19 = vector.broadcast %7 : i32 to vector<1x256xi32>
    %20 = arith.addi %9, %19 : vector<1x256xi32>
    %21 = arith.select %18, %20, %9 : vector<1x256xi1>, vector<1x256xi32>
    %c32_i32 = arith.constant 32 : i32
    %22 = vector.broadcast %c32_i32 : i32 to vector<1x256xi32>
    %23 = arith.cmpi slt, %21, %22 : vector<1x256xi32>
    %c0_10 = arith.constant 0 : index
    %c0_11 = arith.constant 0 : index
    %24 = vector.load %arg4[%c0_10, %c0_11] : memref<8x64xf32, #tpu.memory_space<vmem>>, vector<8x64xf32>
    %c0_12 = arith.constant 0 : index
    %c0_13 = arith.constant 0 : index
    %25 = vector.load %arg5[%c0_12, %c0_13] : memref<8x64xf32, #tpu.memory_space<vmem>>, vector<8x64xf32>
    %c0_14 = arith.constant 0 : index
    %c0_15 = arith.constant 0 : index
    %26 = vector.load %arg2[%c0_14, %c0_15] : memref<64x256xf32, #tpu.memory_space<vmem>>, vector<64x256xf32>
    %cst_16 = arith.constant dense<0.000000e+00> : vector<8x256xf32>
    %27 = tpu.matmul %24, %26, %cst_16 {dimension_numbers = #tpu.dot_dimension_numbers<[1], [0], [0], [1], [0, 0, 1, 1], [], []>} : vector<8x64xf32>, vector<64x256xf32>, vector<8x256xf32> -> vector<8x256xf32>
    %c0_17 = arith.constant 0 : index
    %c0_18 = arith.constant 0 : index
    %28 = vector.load %arg9[%c0_17, %c0_18] : memref<64x256xf32, #tpu.memory_space<vmem>>, vector<8x256xf32>
    %c56 = arith.constant 56 : index
    %c0_19 = arith.constant 0 : index
    %29 = vector.load %arg9[%c56, %c0_19] : memref<64x256xf32, #tpu.memory_space<vmem>>, vector<8x256xf32>
    %30 = vector.shape_cast %23 : vector<1x256xi1> to vector<1x256xi1>
    %31 = vector.broadcast %30 : vector<1x256xi1> to vector<8x256xi1>
    %32 = arith.select %31, %28, %29 : vector<8x256xi1>, vector<8x256xf32>
    %33 = arith.addf %27, %32 : vector<8x256xf32>
    %34 = vector.broadcast %4 : vector<1x256xf32> to vector<8x256xf32>
    %35 = arith.addf %33, %34 : vector<8x256xf32>
    %36 = arith.negf %35 : vector<8x256xf32>
    %37 = math.exp %36 : vector<8x256xf32>
    %cst_20 = arith.constant 1.000000e+00 : f32
    %38 = vector.broadcast %cst_20 : f32 to vector<8x256xf32>
    %39 = arith.addf %38, %37 : vector<8x256xf32>
    %40 = arith.divf %38, %39 : vector<8x256xf32>
    %41 = math.tanh %35 : vector<8x256xf32>
    %42 = vector.extract_strided_slice %40 {offsets = [0, 0], sizes = [8, 64], strides = [1, 1]} : vector<8x256xf32> to vector<8x64xf32>
    %43 = vector.extract_strided_slice %40 {offsets = [0, 64], sizes = [8, 64], strides = [1, 1]} : vector<8x256xf32> to vector<8x64xf32>
    %44 = vector.extract_strided_slice %41 {offsets = [0, 128], sizes = [8, 64], strides = [1, 1]} : vector<8x256xf32> to vector<8x64xf32>
    %45 = vector.extract_strided_slice %40 {offsets = [0, 192], sizes = [8, 64], strides = [1, 1]} : vector<8x256xf32> to vector<8x64xf32>
    %46 = arith.mulf %43, %25 : vector<8x64xf32>
    %47 = arith.mulf %42, %44 : vector<8x64xf32>
    %48 = arith.addf %46, %47 : vector<8x64xf32>
    %49 = math.tanh %48 : vector<8x64xf32>
    %50 = arith.mulf %45, %49 : vector<8x64xf32>
    %51 = vector.extract_strided_slice %50 {offsets = [0, 0], sizes = [8, 32], strides = [1, 1]} : vector<8x64xf32> to vector<8x32xf32>
    %c0_21 = arith.constant 0 : index
    %c0_22 = arith.constant 0 : index
    %52 = vector.load %arg10[%c0_21, %c0_22] : memref<64x64xf32, #tpu.memory_space<vmem>>, vector<8x32xf32>
    tpu.vector_store %arg10[%c0_21, %c0_22], %51 {strides = array<i32>} : memref<64x64xf32, #tpu.memory_space<vmem>>, vector<8x32xf32>,
    %53 = vector.extract_strided_slice %50 {offsets = [0, 32], sizes = [8, 32], strides = [1, 1]} : vector<8x64xf32> to vector<8x32xf32>
    %c56_23 = arith.constant 56 : index
    %c32 = arith.constant 32 : index
    %54 = vector.load %arg10[%c56_23, %c32] : memref<64x64xf32, #tpu.memory_space<vmem>>, vector<8x32xf32>
    tpu.vector_store %arg10[%c56_23, %c32], %53 {strides = array<i32>} : memref<64x64xf32, #tpu.memory_space<vmem>>, vector<8x32xf32>,
    %c0_24 = arith.constant 0 : index
    %c0_25 = arith.constant 0 : index
    %55 = vector.load %arg2[%c0_24, %c0_25] : memref<64x256xf32, #tpu.memory_space<vmem>>, vector<64x256xf32>
    %cst_26 = arith.constant dense<0.000000e+00> : vector<8x256xf32>
    %56 = tpu.matmul %50, %55, %cst_26 {dimension_numbers = #tpu.dot_dimension_numbers<[1], [0], [0], [1], [0, 0, 1, 1], [], []>} : vector<8x64xf32>, vector<64x256xf32>, vector<8x256xf32> -> vector<8x256xf32>
    %c8 = arith.constant 8 : index
    %c0_27 = arith.constant 0 : index
    %57 = vector.load %arg9[%c8, %c0_27] : memref<64x256xf32, #tpu.memory_space<vmem>>, vector<8x256xf32>
    %c48 = arith.constant 48 : index
    %c0_28 = arith.constant 0 : index
    %58 = vector.load %arg9[%c48, %c0_28] : memref<64x256xf32, #tpu.memory_space<vmem>>, vector<8x256xf32>
    %59 = vector.shape_cast %23 : vector<1x256xi1> to vector<1x256xi1>
    %60 = vector.broadcast %59 : vector<1x256xi1> to vector<8x256xi1>
    %61 = arith.select %60, %57, %58 : vector<8x256xi1>, vector<8x256xf32>
    %62 = arith.addf %56, %61 : vector<8x256xf32>
    %63 = vector.broadcast %4 : vector<1x256xf32> to vector<8x256xf32>
    %64 = arith.addf %62, %63 : vector<8x256xf32>
    %65 = arith.negf %64 : vector<8x256xf32>
    %66 = math.exp %65 : vector<8x256xf32>
    %cst_29 = arith.constant 1.000000e+00 : f32
    %67 = vector.broadcast %cst_29 : f32 to vector<8x256xf32>
    %68 = arith.addf %67, %66 : vector<8x256xf32>
    %69 = arith.divf %67, %68 : vector<8x256xf32>
    %70 = math.tanh %64 : vector<8x256xf32>
    %71 = vector.extract_strided_slice %69 {offsets = [0, 0], sizes = [8, 64], strides = [1, 1]} : vector<8x256xf32> to vector<8x64xf32>
    %72 = vector.extract_strided_slice %69 {offsets = [0, 64], sizes = [8, 64], strides = [1, 1]} : vector<8x256xf32> to vector<8x64xf32>
    %73 = vector.extract_strided_slice %70 {offsets = [0, 128], sizes = [8, 64], strides = [1, 1]} : vector<8x256xf32> to vector<8x64xf32>
    %74 = vector.extract_strided_slice %69 {offsets = [0, 192], sizes = [8, 64], strides = [1, 1]} : vector<8x256xf32> to vector<8x64xf32>
    %75 = arith.mulf %72, %48 : vector<8x64xf32>
    %76 = arith.mulf %71, %73 : vector<8x64xf32>
    %77 = arith.addf %75, %76 : vector<8x64xf32>
    %78 = math.tanh %77 : vector<8x64xf32>
    %79 = arith.mulf %74, %78 : vector<8x64xf32>
    %80 = vector.extract_strided_slice %79 {offsets = [0, 0], sizes = [8, 32], strides = [1, 1]} : vector<8x64xf32> to vector<8x32xf32>
    %c8_30 = arith.constant 8 : index
    %c0_31 = arith.constant 0 : index
    %81 = vector.load %arg10[%c8_30, %c0_31] : memref<64x64xf32, #tpu.memory_space<vmem>>, vector<8x32xf32>
    tpu.vector_store %arg10[%c8_30, %c0_31], %80 {strides = array<i32>} : memref<64x64xf32, #tpu.memory_space<vmem>>, vector<8x32xf32>,
    %82 = vector.extract_strided_slice %79 {offsets = [0, 32], sizes = [8, 32], strides = [1, 1]} : vector<8x64xf32> to vector<8x32xf32>
    %c48_32 = arith.constant 48 : index
    %c32_33 = arith.constant 32 : index
    %83 = vector.load %arg10[%c48_32, %c32_33] : memref<64x64xf32, #tpu.memory_space<vmem>>, vector<8x32xf32>
    tpu.vector_store %arg10[%c48_32, %c32_33], %82 {strides = array<i32>} : memref<64x64xf32, #tpu.memory_space<vmem>>, vector<8x32xf32>,
    %c0_34 = arith.constant 0 : index
    %c0_35 = arith.constant 0 : index
    %84 = vector.load %arg2[%c0_34, %c0_35] : memref<64x256xf32, #tpu.memory_space<vmem>>, vector<64x256xf32>
    %cst_36 = arith.constant dense<0.000000e+00> : vector<8x256xf32>
    %85 = tpu.matmul %79, %84, %cst_36 {dimension_numbers = #tpu.dot_dimension_numbers<[1], [0], [0], [1], [0, 0, 1, 1], [], []>} : vector<8x64xf32>, vector<64x256xf32>, vector<8x256xf32> -> vector<8x256xf32>
    %c16 = arith.constant 16 : index
    %c0_37 = arith.constant 0 : index
    %86 = vector.load %arg9[%c16, %c0_37] : memref<64x256xf32, #tpu.memory_space<vmem>>, vector<8x256xf32>
    %c40 = arith.constant 40 : index
    %c0_38 = arith.constant 0 : index
    %87 = vector.load %arg9[%c40, %c0_38] : memref<64x256xf32, #tpu.memory_space<vmem>>, vector<8x256xf32>
    %88 = vector.shape_cast %23 : vector<1x256xi1> to vector<1x256xi1>
    %89 = vector.broadcast %88 : vector<1x256xi1> to vector<8x256xi1>
    %90 = arith.select %89, %86, %87 : vector<8x256xi1>, vector<8x256xf32>
    %91 = arith.addf %85, %90 : vector<8x256xf32>
    %92 = vector.broadcast %4 : vector<1x256xf32> to vector<8x256xf32>
    %93 = arith.addf %91, %92 : vector<8x256xf32>
    %94 = arith.negf %93 : vector<8x256xf32>
    %95 = math.exp %94 : vector<8x256xf32>
    %cst_39 = arith.constant 1.000000e+00 : f32
    %96 = vector.broadcast %cst_39 : f32 to vector<8x256xf32>
    %97 = arith.addf %96, %95 : vector<8x256xf32>
    %98 = arith.divf %96, %97 : vector<8x256xf32>
    %99 = math.tanh %93 : vector<8x256xf32>
    %100 = vector.extract_strided_slice %98 {offsets = [0, 0], sizes = [8, 64], strides = [1, 1]} : vector<8x256xf32> to vector<8x64xf32>
    %101 = vector.extract_strided_slice %98 {offsets = [0, 64], sizes = [8, 64], strides = [1, 1]} : vector<8x256xf32> to vector<8x64xf32>
    %102 = vector.extract_strided_slice %99 {offsets = [0, 128], sizes = [8, 64], strides = [1, 1]} : vector<8x256xf32> to vector<8x64xf32>
    %103 = vector.extract_strided_slice %98 {offsets = [0, 192], sizes = [8, 64], strides = [1, 1]} : vector<8x256xf32> to vector<8x64xf32>
    %104 = arith.mulf %101, %77 : vector<8x64xf32>
    %105 = arith.mulf %100, %102 : vector<8x64xf32>
    %106 = arith.addf %104, %105 : vector<8x64xf32>
    %107 = math.tanh %106 : vector<8x64xf32>
    %108 = arith.mulf %103, %107 : vector<8x64xf32>
    %109 = vector.extract_strided_slice %108 {offsets = [0, 0], sizes = [8, 32], strides = [1, 1]} : vector<8x64xf32> to vector<8x32xf32>
    %c16_40 = arith.constant 16 : index
    %c0_41 = arith.constant 0 : index
    %110 = vector.load %arg10[%c16_40, %c0_41] : memref<64x64xf32, #tpu.memory_space<vmem>>, vector<8x32xf32>
    tpu.vector_store %arg10[%c16_40, %c0_41], %109 {strides = array<i32>} : memref<64x64xf32, #tpu.memory_space<vmem>>, vector<8x32xf32>,
    %111 = vector.extract_strided_slice %108 {offsets = [0, 32], sizes = [8, 32], strides = [1, 1]} : vector<8x64xf32> to vector<8x32xf32>
    %c40_42 = arith.constant 40 : index
    %c32_43 = arith.constant 32 : index
    %112 = vector.load %arg10[%c40_42, %c32_43] : memref<64x64xf32, #tpu.memory_space<vmem>>, vector<8x32xf32>
    tpu.vector_store %arg10[%c40_42, %c32_43], %111 {strides = array<i32>} : memref<64x64xf32, #tpu.memory_space<vmem>>, vector<8x32xf32>,
    %c0_44 = arith.constant 0 : index
    %c0_45 = arith.constant 0 : index
    %113 = vector.load %arg2[%c0_44, %c0_45] : memref<64x256xf32, #tpu.memory_space<vmem>>, vector<64x256xf32>
    %cst_46 = arith.constant dense<0.000000e+00> : vector<8x256xf32>
    %114 = tpu.matmul %108, %113, %cst_46 {dimension_numbers = #tpu.dot_dimension_numbers<[1], [0], [0], [1], [0, 0, 1, 1], [], []>} : vector<8x64xf32>, vector<64x256xf32>, vector<8x256xf32> -> vector<8x256xf32>
    %c24 = arith.constant 24 : index
    %c0_47 = arith.constant 0 : index
    %115 = vector.load %arg9[%c24, %c0_47] : memref<64x256xf32, #tpu.memory_space<vmem>>, vector<8x256xf32>
    %c32_48 = arith.constant 32 : index
    %c0_49 = arith.constant 0 : index
    %116 = vector.load %arg9[%c32_48, %c0_49] : memref<64x256xf32, #tpu.memory_space<vmem>>, vector<8x256xf32>
    %117 = vector.shape_cast %23 : vector<1x256xi1> to vector<1x256xi1>
    %118 = vector.broadcast %117 : vector<1x256xi1> to vector<8x256xi1>
    %119 = arith.select %118, %115, %116 : vector<8x256xi1>, vector<8x256xf32>
    %120 = arith.addf %114, %119 : vector<8x256xf32>
    %121 = vector.broadcast %4 : vector<1x256xf32> to vector<8x256xf32>
    %122 = arith.addf %120, %121 : vector<8x256xf32>
    %123 = arith.negf %122 : vector<8x256xf32>
    %124 = math.exp %123 : vector<8x256xf32>
    %cst_50 = arith.constant 1.000000e+00 : f32
    %125 = vector.broadcast %cst_50 : f32 to vector<8x256xf32>
    %126 = arith.addf %125, %124 : vector<8x256xf32>
    %127 = arith.divf %125, %126 : vector<8x256xf32>
    %128 = math.tanh %122 : vector<8x256xf32>
    %129 = vector.extract_strided_slice %127 {offsets = [0, 0], sizes = [8, 64], strides = [1, 1]} : vector<8x256xf32> to vector<8x64xf32>
    %130 = vector.extract_strided_slice %127 {offsets = [0, 64], sizes = [8, 64], strides = [1, 1]} : vector<8x256xf32> to vector<8x64xf32>
    %131 = vector.extract_strided_slice %128 {offsets = [0, 128], sizes = [8, 64], strides = [1, 1]} : vector<8x256xf32> to vector<8x64xf32>
    %132 = vector.extract_strided_slice %127 {offsets = [0, 192], sizes = [8, 64], strides = [1, 1]} : vector<8x256xf32> to vector<8x64xf32>
    %133 = arith.mulf %130, %106 : vector<8x64xf32>
    %134 = arith.mulf %129, %131 : vector<8x64xf32>
    %135 = arith.addf %133, %134 : vector<8x64xf32>
    %136 = math.tanh %135 : vector<8x64xf32>
    %137 = arith.mulf %132, %136 : vector<8x64xf32>
    %138 = vector.extract_strided_slice %137 {offsets = [0, 0], sizes = [8, 32], strides = [1, 1]} : vector<8x64xf32> to vector<8x32xf32>
    %c24_51 = arith.constant 24 : index
    %c0_52 = arith.constant 0 : index
    %139 = vector.load %arg10[%c24_51, %c0_52] : memref<64x64xf32, #tpu.memory_space<vmem>>, vector<8x32xf32>
    tpu.vector_store %arg10[%c24_51, %c0_52], %138 {strides = array<i32>} : memref<64x64xf32, #tpu.memory_space<vmem>>, vector<8x32xf32>,
    %140 = vector.extract_strided_slice %137 {offsets = [0, 32], sizes = [8, 32], strides = [1, 1]} : vector<8x64xf32> to vector<8x32xf32>
    %c32_53 = arith.constant 32 : index
    %c32_54 = arith.constant 32 : index
    %141 = vector.load %arg10[%c32_53, %c32_54] : memref<64x64xf32, #tpu.memory_space<vmem>>, vector<8x32xf32>
    tpu.vector_store %arg10[%c32_53, %c32_54], %140 {strides = array<i32>} : memref<64x64xf32, #tpu.memory_space<vmem>>, vector<8x32xf32>,
    %c0_55 = arith.constant 0 : index
    %c0_56 = arith.constant 0 : index
    %142 = vector.load %arg2[%c0_55, %c0_56] : memref<64x256xf32, #tpu.memory_space<vmem>>, vector<64x256xf32>
    %cst_57 = arith.constant dense<0.000000e+00> : vector<8x256xf32>
    %143 = tpu.matmul %137, %142, %cst_57 {dimension_numbers = #tpu.dot_dimension_numbers<[1], [0], [0], [1], [0, 0, 1, 1], [], []>} : vector<8x64xf32>, vector<64x256xf32>, vector<8x256xf32> -> vector<8x256xf32>
    %c32_58 = arith.constant 32 : index
    %c0_59 = arith.constant 0 : index
    %144 = vector.load %arg9[%c32_58, %c0_59] : memref<64x256xf32, #tpu.memory_space<vmem>>, vector<8x256xf32>
    %c24_60 = arith.constant 24 : index
    %c0_61 = arith.constant 0 : index
    %145 = vector.load %arg9[%c24_60, %c0_61] : memref<64x256xf32, #tpu.memory_space<vmem>>, vector<8x256xf32>
    %146 = vector.shape_cast %23 : vector<1x256xi1> to vector<1x256xi1>
    %147 = vector.broadcast %146 : vector<1x256xi1> to vector<8x256xi1>
    %148 = arith.select %147, %144, %145 : vector<8x256xi1>, vector<8x256xf32>
    %149 = arith.addf %143, %148 : vector<8x256xf32>
    %150 = vector.broadcast %4 : vector<1x256xf32> to vector<8x256xf32>
    %151 = arith.addf %149, %150 : vector<8x256xf32>
    %152 = arith.negf %151 : vector<8x256xf32>
    %153 = math.exp %152 : vector<8x256xf32>
    %cst_62 = arith.constant 1.000000e+00 : f32
    %154 = vector.broadcast %cst_62 : f32 to vector<8x256xf32>
    %155 = arith.addf %154, %153 : vector<8x256xf32>
    %156 = arith.divf %154, %155 : vector<8x256xf32>
    %157 = math.tanh %151 : vector<8x256xf32>
    %158 = vector.extract_strided_slice %156 {offsets = [0, 0], sizes = [8, 64], strides = [1, 1]} : vector<8x256xf32> to vector<8x64xf32>
    %159 = vector.extract_strided_slice %156 {offsets = [0, 64], sizes = [8, 64], strides = [1, 1]} : vector<8x256xf32> to vector<8x64xf32>
    %160 = vector.extract_strided_slice %157 {offsets = [0, 128], sizes = [8, 64], strides = [1, 1]} : vector<8x256xf32> to vector<8x64xf32>
    %161 = vector.extract_strided_slice %156 {offsets = [0, 192], sizes = [8, 64], strides = [1, 1]} : vector<8x256xf32> to vector<8x64xf32>
    %162 = arith.mulf %159, %135 : vector<8x64xf32>
    %163 = arith.mulf %158, %160 : vector<8x64xf32>
    %164 = arith.addf %162, %163 : vector<8x64xf32>
    %165 = math.tanh %164 : vector<8x64xf32>
    %166 = arith.mulf %161, %165 : vector<8x64xf32>
    %167 = vector.extract_strided_slice %166 {offsets = [0, 0], sizes = [8, 32], strides = [1, 1]} : vector<8x64xf32> to vector<8x32xf32>
    %c32_63 = arith.constant 32 : index
    %c0_64 = arith.constant 0 : index
    %168 = vector.load %arg10[%c32_63, %c0_64] : memref<64x64xf32, #tpu.memory_space<vmem>>, vector<8x32xf32>
    tpu.vector_store %arg10[%c32_63, %c0_64], %167 {strides = array<i32>} : memref<64x64xf32, #tpu.memory_space<vmem>>, vector<8x32xf32>,
    %169 = vector.extract_strided_slice %166 {offsets = [0, 32], sizes = [8, 32], strides = [1, 1]} : vector<8x64xf32> to vector<8x32xf32>
    %c24_65 = arith.constant 24 : index
    %c32_66 = arith.constant 32 : index
    %170 = vector.load %arg10[%c24_65, %c32_66] : memref<64x64xf32, #tpu.memory_space<vmem>>, vector<8x32xf32>
    tpu.vector_store %arg10[%c24_65, %c32_66], %169 {strides = array<i32>} : memref<64x64xf32, #tpu.memory_space<vmem>>, vector<8x32xf32>,
    %c0_67 = arith.constant 0 : index
    %c0_68 = arith.constant 0 : index
    %171 = vector.load %arg2[%c0_67, %c0_68] : memref<64x256xf32, #tpu.memory_space<vmem>>, vector<64x256xf32>
    %cst_69 = arith.constant dense<0.000000e+00> : vector<8x256xf32>
    %172 = tpu.matmul %166, %171, %cst_69 {dimension_numbers = #tpu.dot_dimension_numbers<[1], [0], [0], [1], [0, 0, 1, 1], [], []>} : vector<8x64xf32>, vector<64x256xf32>, vector<8x256xf32> -> vector<8x256xf32>
    %c40_70 = arith.constant 40 : index
    %c0_71 = arith.constant 0 : index
    %173 = vector.load %arg9[%c40_70, %c0_71] : memref<64x256xf32, #tpu.memory_space<vmem>>, vector<8x256xf32>
    %c16_72 = arith.constant 16 : index
    %c0_73 = arith.constant 0 : index
    %174 = vector.load %arg9[%c16_72, %c0_73] : memref<64x256xf32, #tpu.memory_space<vmem>>, vector<8x256xf32>
    %175 = vector.shape_cast %23 : vector<1x256xi1> to vector<1x256xi1>
    %176 = vector.broadcast %175 : vector<1x256xi1> to vector<8x256xi1>
    %177 = arith.select %176, %173, %174 : vector<8x256xi1>, vector<8x256xf32>
    %178 = arith.addf %172, %177 : vector<8x256xf32>
    %179 = vector.broadcast %4 : vector<1x256xf32> to vector<8x256xf32>
    %180 = arith.addf %178, %179 : vector<8x256xf32>
    %181 = arith.negf %180 : vector<8x256xf32>
    %182 = math.exp %181 : vector<8x256xf32>
    %cst_74 = arith.constant 1.000000e+00 : f32
    %183 = vector.broadcast %cst_74 : f32 to vector<8x256xf32>
    %184 = arith.addf %183, %182 : vector<8x256xf32>
    %185 = arith.divf %183, %184 : vector<8x256xf32>
    %186 = math.tanh %180 : vector<8x256xf32>
    %187 = vector.extract_strided_slice %185 {offsets = [0, 0], sizes = [8, 64], strides = [1, 1]} : vector<8x256xf32> to vector<8x64xf32>
    %188 = vector.extract_strided_slice %185 {offsets = [0, 64], sizes = [8, 64], strides = [1, 1]} : vector<8x256xf32> to vector<8x64xf32>
    %189 = vector.extract_strided_slice %186 {offsets = [0, 128], sizes = [8, 64], strides = [1, 1]} : vector<8x256xf32> to vector<8x64xf32>
    %190 = vector.extract_strided_slice %185 {offsets = [0, 192], sizes = [8, 64], strides = [1, 1]} : vector<8x256xf32> to vector<8x64xf32>
    %191 = arith.mulf %188, %164 : vector<8x64xf32>
    %192 = arith.mulf %187, %189 : vector<8x64xf32>
    %193 = arith.addf %191, %192 : vector<8x64xf32>
    %194 = math.tanh %193 : vector<8x64xf32>
    %195 = arith.mulf %190, %194 : vector<8x64xf32>
    %196 = vector.extract_strided_slice %195 {offsets = [0, 0], sizes = [8, 32], strides = [1, 1]} : vector<8x64xf32> to vector<8x32xf32>
    %c40_75 = arith.constant 40 : index
    %c0_76 = arith.constant 0 : index
    %197 = vector.load %arg10[%c40_75, %c0_76] : memref<64x64xf32, #tpu.memory_space<vmem>>, vector<8x32xf32>
    tpu.vector_store %arg10[%c40_75, %c0_76], %196 {strides = array<i32>} : memref<64x64xf32, #tpu.memory_space<vmem>>, vector<8x32xf32>,
    %198 = vector.extract_strided_slice %195 {offsets = [0, 32], sizes = [8, 32], strides = [1, 1]} : vector<8x64xf32> to vector<8x32xf32>
    %c16_77 = arith.constant 16 : index
    %c32_78 = arith.constant 32 : index
    %199 = vector.load %arg10[%c16_77, %c32_78] : memref<64x64xf32, #tpu.memory_space<vmem>>, vector<8x32xf32>
    tpu.vector_store %arg10[%c16_77, %c32_78], %198 {strides = array<i32>} : memref<64x64xf32, #tpu.memory_space<vmem>>, vector<8x32xf32>,
    %c0_79 = arith.constant 0 : index
    %c0_80 = arith.constant 0 : index
    %200 = vector.load %arg2[%c0_79, %c0_80] : memref<64x256xf32, #tpu.memory_space<vmem>>, vector<64x256xf32>
    %cst_81 = arith.constant dense<0.000000e+00> : vector<8x256xf32>
    %201 = tpu.matmul %195, %200, %cst_81 {dimension_numbers = #tpu.dot_dimension_numbers<[1], [0], [0], [1], [0, 0, 1, 1], [], []>} : vector<8x64xf32>, vector<64x256xf32>, vector<8x256xf32> -> vector<8x256xf32>
    %c48_82 = arith.constant 48 : index
    %c0_83 = arith.constant 0 : index
    %202 = vector.load %arg9[%c48_82, %c0_83] : memref<64x256xf32, #tpu.memory_space<vmem>>, vector<8x256xf32>
    %c8_84 = arith.constant 8 : index
    %c0_85 = arith.constant 0 : index
    %203 = vector.load %arg9[%c8_84, %c0_85] : memref<64x256xf32, #tpu.memory_space<vmem>>, vector<8x256xf32>
    %204 = vector.shape_cast %23 : vector<1x256xi1> to vector<1x256xi1>
    %205 = vector.broadcast %204 : vector<1x256xi1> to vector<8x256xi1>
    %206 = arith.select %205, %202, %203 : vector<8x256xi1>, vector<8x256xf32>
    %207 = arith.addf %201, %206 : vector<8x256xf32>
    %208 = vector.broadcast %4 : vector<1x256xf32> to vector<8x256xf32>
    %209 = arith.addf %207, %208 : vector<8x256xf32>
    %210 = arith.negf %209 : vector<8x256xf32>
    %211 = math.exp %210 : vector<8x256xf32>
    %cst_86 = arith.constant 1.000000e+00 : f32
    %212 = vector.broadcast %cst_86 : f32 to vector<8x256xf32>
    %213 = arith.addf %212, %211 : vector<8x256xf32>
    %214 = arith.divf %212, %213 : vector<8x256xf32>
    %215 = math.tanh %209 : vector<8x256xf32>
    %216 = vector.extract_strided_slice %214 {offsets = [0, 0], sizes = [8, 64], strides = [1, 1]} : vector<8x256xf32> to vector<8x64xf32>
    %217 = vector.extract_strided_slice %214 {offsets = [0, 64], sizes = [8, 64], strides = [1, 1]} : vector<8x256xf32> to vector<8x64xf32>
    %218 = vector.extract_strided_slice %215 {offsets = [0, 128], sizes = [8, 64], strides = [1, 1]} : vector<8x256xf32> to vector<8x64xf32>
    %219 = vector.extract_strided_slice %214 {offsets = [0, 192], sizes = [8, 64], strides = [1, 1]} : vector<8x256xf32> to vector<8x64xf32>
    %220 = arith.mulf %217, %193 : vector<8x64xf32>
    %221 = arith.mulf %216, %218 : vector<8x64xf32>
    %222 = arith.addf %220, %221 : vector<8x64xf32>
    %223 = math.tanh %222 : vector<8x64xf32>
    %224 = arith.mulf %219, %223 : vector<8x64xf32>
    %225 = vector.extract_strided_slice %224 {offsets = [0, 0], sizes = [8, 32], strides = [1, 1]} : vector<8x64xf32> to vector<8x32xf32>
    %c48_87 = arith.constant 48 : index
    %c0_88 = arith.constant 0 : index
    %226 = vector.load %arg10[%c48_87, %c0_88] : memref<64x64xf32, #tpu.memory_space<vmem>>, vector<8x32xf32>
    tpu.vector_store %arg10[%c48_87, %c0_88], %225 {strides = array<i32>} : memref<64x64xf32, #tpu.memory_space<vmem>>, vector<8x32xf32>,
    %227 = vector.extract_strided_slice %224 {offsets = [0, 32], sizes = [8, 32], strides = [1, 1]} : vector<8x64xf32> to vector<8x32xf32>
    %c8_89 = arith.constant 8 : index
    %c32_90 = arith.constant 32 : index
    %228 = vector.load %arg10[%c8_89, %c32_90] : memref<64x64xf32, #tpu.memory_space<vmem>>, vector<8x32xf32>
    tpu.vector_store %arg10[%c8_89, %c32_90], %227 {strides = array<i32>} : memref<64x64xf32, #tpu.memory_space<vmem>>, vector<8x32xf32>,
    %c0_91 = arith.constant 0 : index
    %c0_92 = arith.constant 0 : index
    %229 = vector.load %arg2[%c0_91, %c0_92] : memref<64x256xf32, #tpu.memory_space<vmem>>, vector<64x256xf32>
    %cst_93 = arith.constant dense<0.000000e+00> : vector<8x256xf32>
    %230 = tpu.matmul %224, %229, %cst_93 {dimension_numbers = #tpu.dot_dimension_numbers<[1], [0], [0], [1], [0, 0, 1, 1], [], []>} : vector<8x64xf32>, vector<64x256xf32>, vector<8x256xf32> -> vector<8x256xf32>
    %c56_94 = arith.constant 56 : index
    %c0_95 = arith.constant 0 : index
    %231 = vector.load %arg9[%c56_94, %c0_95] : memref<64x256xf32, #tpu.memory_space<vmem>>, vector<8x256xf32>
    %c0_96 = arith.constant 0 : index
    %c0_97 = arith.constant 0 : index
    %232 = vector.load %arg9[%c0_96, %c0_97] : memref<64x256xf32, #tpu.memory_space<vmem>>, vector<8x256xf32>
    %233 = vector.shape_cast %23 : vector<1x256xi1> to vector<1x256xi1>
    %234 = vector.broadcast %233 : vector<1x256xi1> to vector<8x256xi1>
    %235 = arith.select %234, %231, %232 : vector<8x256xi1>, vector<8x256xf32>
    %236 = arith.addf %230, %235 : vector<8x256xf32>
    %237 = vector.broadcast %4 : vector<1x256xf32> to vector<8x256xf32>
    %238 = arith.addf %236, %237 : vector<8x256xf32>
    %239 = arith.negf %238 : vector<8x256xf32>
    %240 = math.exp %239 : vector<8x256xf32>
    %cst_98 = arith.constant 1.000000e+00 : f32
    %241 = vector.broadcast %cst_98 : f32 to vector<8x256xf32>
    %242 = arith.addf %241, %240 : vector<8x256xf32>
    %243 = arith.divf %241, %242 : vector<8x256xf32>
    %244 = math.tanh %238 : vector<8x256xf32>
    %245 = vector.extract_strided_slice %243 {offsets = [0, 0], sizes = [8, 64], strides = [1, 1]} : vector<8x256xf32> to vector<8x64xf32>
    %246 = vector.extract_strided_slice %243 {offsets = [0, 64], sizes = [8, 64], strides = [1, 1]} : vector<8x256xf32> to vector<8x64xf32>
    %247 = vector.extract_strided_slice %244 {offsets = [0, 128], sizes = [8, 64], strides = [1, 1]} : vector<8x256xf32> to vector<8x64xf32>
    %248 = vector.extract_strided_slice %243 {offsets = [0, 192], sizes = [8, 64], strides = [1, 1]} : vector<8x256xf32> to vector<8x64xf32>
    %249 = arith.mulf %246, %222 : vector<8x64xf32>
    %250 = arith.mulf %245, %247 : vector<8x64xf32>
    %251 = arith.addf %249, %250 : vector<8x64xf32>
    %252 = math.tanh %251 : vector<8x64xf32>
    %253 = arith.mulf %248, %252 : vector<8x64xf32>
    %254 = vector.extract_strided_slice %253 {offsets = [0, 0], sizes = [8, 32], strides = [1, 1]} : vector<8x64xf32> to vector<8x32xf32>
    %c56_99 = arith.constant 56 : index
    %c0_100 = arith.constant 0 : index
    %255 = vector.load %arg10[%c56_99, %c0_100] : memref<64x64xf32, #tpu.memory_space<vmem>>, vector<8x32xf32>
    tpu.vector_store %arg10[%c56_99, %c0_100], %254 {strides = array<i32>} : memref<64x64xf32, #tpu.memory_space<vmem>>, vector<8x32xf32>,
    %256 = vector.extract_strided_slice %253 {offsets = [0, 32], sizes = [8, 32], strides = [1, 1]} : vector<8x64xf32> to vector<8x32xf32>
    %c0_101 = arith.constant 0 : index
    %c32_102 = arith.constant 32 : index
    %257 = vector.load %arg10[%c0_101, %c32_102] : memref<64x64xf32, #tpu.memory_space<vmem>>, vector<8x32xf32>
    tpu.vector_store %arg10[%c0_101, %c32_102], %256 {strides = array<i32>} : memref<64x64xf32, #tpu.memory_space<vmem>>, vector<8x32xf32>,
    %c0_103 = arith.constant 0 : index
    %c0_104 = arith.constant 0 : index
    %258 = vector.load %arg10[%c0_103, %c0_104] : memref<64x64xf32, #tpu.memory_space<vmem>>, vector<64x64xf32>
    %c0_105 = arith.constant 0 : index
    %c0_106 = arith.constant 0 : index
    %259 = vector.load %arg6[%c0_105, %c0_106] : memref<64x128xf32, #tpu.memory_space<vmem>>, vector<64x128xf32>
    %cst_107 = arith.constant dense<0.000000e+00> : vector<64x128xf32>
    %260 = tpu.matmul %258, %259, %cst_107 {dimension_numbers = #tpu.dot_dimension_numbers<[1], [0], [0], [1], [0, 0, 1, 1], [], []>} : vector<64x64xf32>, vector<64x128xf32>, vector<64x128xf32> -> vector<64x128xf32>
    %c0_108 = arith.constant 0 : index
    %c0_109 = arith.constant 0 : index
    %261 = vector.load %arg7[%c0_108, %c0_109] : memref<1x128xf32, #tpu.memory_space<vmem>>, vector<1x128xf32>
    %262 = vector.broadcast %261 : vector<1x128xf32> to vector<64x128xf32>
    %263 = arith.addf %260, %262 : vector<64x128xf32>
    %c0_110 = arith.constant 0 : index
    %c0_111 = arith.constant 0 : index
    %264 = vector.load %arg8[%c0_110, %c0_111] : memref<64x128xf32, #tpu.memory_space<vmem>>, vector<64x128xf32>
    tpu.vector_store %arg8[%c0_110, %c0_111], %263 {strides = array<i32>} : memref<64x128xf32, #tpu.memory_space<vmem>>, vector<64x128xf32>,
    return
  }
}

module attributes {stable_mosaic.version = 11 : i64} {
  func.func @_crf_loglik_kernel(%arg0: memref<8x8x128xf32, #tpu.memory_space<vmem>>, %arg1: memref<8x8x128xf32, #tpu.memory_space<vmem>>, %arg2: memref<8x8x128xf32, #tpu.memory_space<vmem>>, %arg3: memref<8x128xf32, #tpu.memory_space<vmem>>, %arg4: memref<128x128xf32, #tpu.memory_space<vmem>>, %arg5: memref<128x128xf32, #tpu.memory_space<vmem>>, %arg6: memref<1x128xf32, #tpu.memory_space<vmem>>, %arg7: memref<1x128xf32, #tpu.memory_space<vmem>>, %arg8: memref<8x128xf32, #tpu.memory_space<vmem>>) attributes {dimension_semantics = [], scalar_prefetch = 0 : i64, scratch_operands = 0 : i64, tpu.core_type = #tpu.core_type<tc>} {
    %c0 = arith.constant 0 : index
    %c0_0 = arith.constant 0 : index
    %0 = vector.load %arg6[%c0, %c0_0] : memref<1x128xf32, #tpu.memory_space<vmem>>, vector<1x128xf32>
    %c0_1 = arith.constant 0 : index
    %c0_2 = arith.constant 0 : index
    %1 = vector.load %arg7[%c0_1, %c0_2] : memref<1x128xf32, #tpu.memory_space<vmem>>, vector<1x128xf32>
    %c0_3 = arith.constant 0 : index
    %c0_4 = arith.constant 0 : index
    %2 = vector.load %arg3[%c0_3, %c0_4] : memref<8x128xf32, #tpu.memory_space<vmem>>, vector<8x128xf32>
    %c0_5 = arith.constant 0 : index
    %c0_6 = arith.constant 0 : index
    %c0_7 = arith.constant 0 : index
    %3 = vector.load %arg1[%c0_5, %c0_6, %c0_7] : memref<8x8x128xf32, #tpu.memory_space<vmem>>, vector<1x8x128xf32>
    %4 = vector.shape_cast %3 : vector<1x8x128xf32> to vector<8x128xf32>
    %5 = vector.broadcast %0 : vector<1x128xf32> to vector<8x128xf32>
    %6 = arith.mulf %5, %4 : vector<8x128xf32>
    %c0_8 = arith.constant 0 : index
    %c0_9 = arith.constant 0 : index
    %c0_10 = arith.constant 0 : index
    %7 = vector.load %arg1[%c0_8, %c0_9, %c0_10] : memref<8x8x128xf32, #tpu.memory_space<vmem>>, vector<1x8x128xf32>
    %8 = vector.shape_cast %7 : vector<1x8x128xf32> to vector<8x128xf32>
    %c1 = arith.constant 1 : index
    %c0_11 = arith.constant 0 : index
    %c0_12 = arith.constant 0 : index
    %9 = vector.load %arg1[%c1, %c0_11, %c0_12] : memref<8x8x128xf32, #tpu.memory_space<vmem>>, vector<1x8x128xf32>
    %10 = vector.shape_cast %9 : vector<1x8x128xf32> to vector<8x128xf32>
    %c0_13 = arith.constant 0 : index
    %c0_14 = arith.constant 0 : index
    %c0_15 = arith.constant 0 : index
    %11 = vector.load %arg0[%c0_13, %c0_14, %c0_15] : memref<8x8x128xf32, #tpu.memory_space<vmem>>, vector<1x8x128xf32>
    %12 = vector.shape_cast %11 : vector<1x8x128xf32> to vector<8x128xf32>
    %13 = arith.mulf %12, %8 : vector<8x128xf32>
    %c0_16 = arith.constant 0 : index
    %c0_17 = arith.constant 0 : index
    %c0_18 = arith.constant 0 : index
    %14 = vector.load %arg2[%c0_16, %c0_17, %c0_18] : memref<8x8x128xf32, #tpu.memory_space<vmem>>, vector<1x8x128xf32>
    %15 = vector.shape_cast %14 : vector<1x8x128xf32> to vector<8x128xf32>
    %16 = arith.mulf %13, %15 : vector<8x128xf32>
    %c0_19 = arith.constant 0 : index
    %c0_20 = arith.constant 0 : index
    %17 = vector.load %arg4[%c0_19, %c0_20] : memref<128x128xf32, #tpu.memory_space<vmem>>, vector<128x128xf32>
    %cst = arith.constant dense<0.000000e+00> : vector<8x128xf32>
    %18 = tpu.matmul %8, %17, %cst {dimension_numbers = #tpu.dot_dimension_numbers<[1], [0], [0], [1], [0, 0, 1, 1], [], []>} : vector<8x128xf32>, vector<128x128xf32>, vector<8x128xf32> -> vector<8x128xf32>
    %19 = arith.addf %6, %16 : vector<8x128xf32>
    %20 = arith.mulf %18, %10 : vector<8x128xf32>
    %c1_21 = arith.constant 1 : index
    %c0_22 = arith.constant 0 : index
    %c0_23 = arith.constant 0 : index
    %21 = vector.load %arg2[%c1_21, %c0_22, %c0_23] : memref<8x8x128xf32, #tpu.memory_space<vmem>>, vector<1x8x128xf32>
    %22 = vector.shape_cast %21 : vector<1x8x128xf32> to vector<8x128xf32>
    %23 = arith.mulf %20, %22 : vector<8x128xf32>
    %24 = arith.addf %19, %23 : vector<8x128xf32>
    %c1_24 = arith.constant 1 : index
    %c0_25 = arith.constant 0 : index
    %c0_26 = arith.constant 0 : index
    %25 = vector.load %arg1[%c1_24, %c0_25, %c0_26] : memref<8x8x128xf32, #tpu.memory_space<vmem>>, vector<1x8x128xf32>
    %26 = vector.shape_cast %25 : vector<1x8x128xf32> to vector<8x128xf32>
    %c2 = arith.constant 2 : index
    %c0_27 = arith.constant 0 : index
    %c0_28 = arith.constant 0 : index
    %27 = vector.load %arg1[%c2, %c0_27, %c0_28] : memref<8x8x128xf32, #tpu.memory_space<vmem>>, vector<1x8x128xf32>
    %28 = vector.shape_cast %27 : vector<1x8x128xf32> to vector<8x128xf32>
    %c1_29 = arith.constant 1 : index
    %c0_30 = arith.constant 0 : index
    %c0_31 = arith.constant 0 : index
    %29 = vector.load %arg0[%c1_29, %c0_30, %c0_31] : memref<8x8x128xf32, #tpu.memory_space<vmem>>, vector<1x8x128xf32>
    %30 = vector.shape_cast %29 : vector<1x8x128xf32> to vector<8x128xf32>
    %31 = arith.mulf %30, %26 : vector<8x128xf32>
    %c1_32 = arith.constant 1 : index
    %c0_33 = arith.constant 0 : index
    %c0_34 = arith.constant 0 : index
    %32 = vector.load %arg2[%c1_32, %c0_33, %c0_34] : memref<8x8x128xf32, #tpu.memory_space<vmem>>, vector<1x8x128xf32>
    %33 = vector.shape_cast %32 : vector<1x8x128xf32> to vector<8x128xf32>
    %34 = arith.mulf %31, %33 : vector<8x128xf32>
    %c0_35 = arith.constant 0 : index
    %c0_36 = arith.constant 0 : index
    %35 = vector.load %arg4[%c0_35, %c0_36] : memref<128x128xf32, #tpu.memory_space<vmem>>, vector<128x128xf32>
    %cst_37 = arith.constant dense<0.000000e+00> : vector<8x128xf32>
    %36 = tpu.matmul %26, %35, %cst_37 {dimension_numbers = #tpu.dot_dimension_numbers<[1], [0], [0], [1], [0, 0, 1, 1], [], []>} : vector<8x128xf32>, vector<128x128xf32>, vector<8x128xf32> -> vector<8x128xf32>
    %37 = arith.addf %24, %34 : vector<8x128xf32>
    %38 = arith.mulf %36, %28 : vector<8x128xf32>
    %c2_38 = arith.constant 2 : index
    %c0_39 = arith.constant 0 : index
    %c0_40 = arith.constant 0 : index
    %39 = vector.load %arg2[%c2_38, %c0_39, %c0_40] : memref<8x8x128xf32, #tpu.memory_space<vmem>>, vector<1x8x128xf32>
    %40 = vector.shape_cast %39 : vector<1x8x128xf32> to vector<8x128xf32>
    %41 = arith.mulf %38, %40 : vector<8x128xf32>
    %42 = arith.addf %37, %41 : vector<8x128xf32>
    %c2_41 = arith.constant 2 : index
    %c0_42 = arith.constant 0 : index
    %c0_43 = arith.constant 0 : index
    %43 = vector.load %arg1[%c2_41, %c0_42, %c0_43] : memref<8x8x128xf32, #tpu.memory_space<vmem>>, vector<1x8x128xf32>
    %44 = vector.shape_cast %43 : vector<1x8x128xf32> to vector<8x128xf32>
    %c3 = arith.constant 3 : index
    %c0_44 = arith.constant 0 : index
    %c0_45 = arith.constant 0 : index
    %45 = vector.load %arg1[%c3, %c0_44, %c0_45] : memref<8x8x128xf32, #tpu.memory_space<vmem>>, vector<1x8x128xf32>
    %46 = vector.shape_cast %45 : vector<1x8x128xf32> to vector<8x128xf32>
    %c2_46 = arith.constant 2 : index
    %c0_47 = arith.constant 0 : index
    %c0_48 = arith.constant 0 : index
    %47 = vector.load %arg0[%c2_46, %c0_47, %c0_48] : memref<8x8x128xf32, #tpu.memory_space<vmem>>, vector<1x8x128xf32>
    %48 = vector.shape_cast %47 : vector<1x8x128xf32> to vector<8x128xf32>
    %49 = arith.mulf %48, %44 : vector<8x128xf32>
    %c2_49 = arith.constant 2 : index
    %c0_50 = arith.constant 0 : index
    %c0_51 = arith.constant 0 : index
    %50 = vector.load %arg2[%c2_49, %c0_50, %c0_51] : memref<8x8x128xf32, #tpu.memory_space<vmem>>, vector<1x8x128xf32>
    %51 = vector.shape_cast %50 : vector<1x8x128xf32> to vector<8x128xf32>
    %52 = arith.mulf %49, %51 : vector<8x128xf32>
    %c0_52 = arith.constant 0 : index
    %c0_53 = arith.constant 0 : index
    %53 = vector.load %arg4[%c0_52, %c0_53] : memref<128x128xf32, #tpu.memory_space<vmem>>, vector<128x128xf32>
    %cst_54 = arith.constant dense<0.000000e+00> : vector<8x128xf32>
    %54 = tpu.matmul %44, %53, %cst_54 {dimension_numbers = #tpu.dot_dimension_numbers<[1], [0], [0], [1], [0, 0, 1, 1], [], []>} : vector<8x128xf32>, vector<128x128xf32>, vector<8x128xf32> -> vector<8x128xf32>
    %55 = arith.addf %42, %52 : vector<8x128xf32>
    %56 = arith.mulf %54, %46 : vector<8x128xf32>
    %c3_55 = arith.constant 3 : index
    %c0_56 = arith.constant 0 : index
    %c0_57 = arith.constant 0 : index
    %57 = vector.load %arg2[%c3_55, %c0_56, %c0_57] : memref<8x8x128xf32, #tpu.memory_space<vmem>>, vector<1x8x128xf32>
    %58 = vector.shape_cast %57 : vector<1x8x128xf32> to vector<8x128xf32>
    %59 = arith.mulf %56, %58 : vector<8x128xf32>
    %60 = arith.addf %55, %59 : vector<8x128xf32>
    %c3_58 = arith.constant 3 : index
    %c0_59 = arith.constant 0 : index
    %c0_60 = arith.constant 0 : index
    %61 = vector.load %arg1[%c3_58, %c0_59, %c0_60] : memref<8x8x128xf32, #tpu.memory_space<vmem>>, vector<1x8x128xf32>
    %62 = vector.shape_cast %61 : vector<1x8x128xf32> to vector<8x128xf32>
    %c4 = arith.constant 4 : index
    %c0_61 = arith.constant 0 : index
    %c0_62 = arith.constant 0 : index
    %63 = vector.load %arg1[%c4, %c0_61, %c0_62] : memref<8x8x128xf32, #tpu.memory_space<vmem>>, vector<1x8x128xf32>
    %64 = vector.shape_cast %63 : vector<1x8x128xf32> to vector<8x128xf32>
    %c3_63 = arith.constant 3 : index
    %c0_64 = arith.constant 0 : index
    %c0_65 = arith.constant 0 : index
    %65 = vector.load %arg0[%c3_63, %c0_64, %c0_65] : memref<8x8x128xf32, #tpu.memory_space<vmem>>, vector<1x8x128xf32>
    %66 = vector.shape_cast %65 : vector<1x8x128xf32> to vector<8x128xf32>
    %67 = arith.mulf %66, %62 : vector<8x128xf32>
    %c3_66 = arith.constant 3 : index
    %c0_67 = arith.constant 0 : index
    %c0_68 = arith.constant 0 : index
    %68 = vector.load %arg2[%c3_66, %c0_67, %c0_68] : memref<8x8x128xf32, #tpu.memory_space<vmem>>, vector<1x8x128xf32>
    %69 = vector.shape_cast %68 : vector<1x8x128xf32> to vector<8x128xf32>
    %70 = arith.mulf %67, %69 : vector<8x128xf32>
    %c0_69 = arith.constant 0 : index
    %c0_70 = arith.constant 0 : index
    %71 = vector.load %arg4[%c0_69, %c0_70] : memref<128x128xf32, #tpu.memory_space<vmem>>, vector<128x128xf32>
    %cst_71 = arith.constant dense<0.000000e+00> : vector<8x128xf32>
    %72 = tpu.matmul %62, %71, %cst_71 {dimension_numbers = #tpu.dot_dimension_numbers<[1], [0], [0], [1], [0, 0, 1, 1], [], []>} : vector<8x128xf32>, vector<128x128xf32>, vector<8x128xf32> -> vector<8x128xf32>
    %73 = arith.addf %60, %70 : vector<8x128xf32>
    %74 = arith.mulf %72, %64 : vector<8x128xf32>
    %c4_72 = arith.constant 4 : index
    %c0_73 = arith.constant 0 : index
    %c0_74 = arith.constant 0 : index
    %75 = vector.load %arg2[%c4_72, %c0_73, %c0_74] : memref<8x8x128xf32, #tpu.memory_space<vmem>>, vector<1x8x128xf32>
    %76 = vector.shape_cast %75 : vector<1x8x128xf32> to vector<8x128xf32>
    %77 = arith.mulf %74, %76 : vector<8x128xf32>
    %78 = arith.addf %73, %77 : vector<8x128xf32>
    %c4_75 = arith.constant 4 : index
    %c0_76 = arith.constant 0 : index
    %c0_77 = arith.constant 0 : index
    %79 = vector.load %arg1[%c4_75, %c0_76, %c0_77] : memref<8x8x128xf32, #tpu.memory_space<vmem>>, vector<1x8x128xf32>
    %80 = vector.shape_cast %79 : vector<1x8x128xf32> to vector<8x128xf32>
    %c5 = arith.constant 5 : index
    %c0_78 = arith.constant 0 : index
    %c0_79 = arith.constant 0 : index
    %81 = vector.load %arg1[%c5, %c0_78, %c0_79] : memref<8x8x128xf32, #tpu.memory_space<vmem>>, vector<1x8x128xf32>
    %82 = vector.shape_cast %81 : vector<1x8x128xf32> to vector<8x128xf32>
    %c4_80 = arith.constant 4 : index
    %c0_81 = arith.constant 0 : index
    %c0_82 = arith.constant 0 : index
    %83 = vector.load %arg0[%c4_80, %c0_81, %c0_82] : memref<8x8x128xf32, #tpu.memory_space<vmem>>, vector<1x8x128xf32>
    %84 = vector.shape_cast %83 : vector<1x8x128xf32> to vector<8x128xf32>
    %85 = arith.mulf %84, %80 : vector<8x128xf32>
    %c4_83 = arith.constant 4 : index
    %c0_84 = arith.constant 0 : index
    %c0_85 = arith.constant 0 : index
    %86 = vector.load %arg2[%c4_83, %c0_84, %c0_85] : memref<8x8x128xf32, #tpu.memory_space<vmem>>, vector<1x8x128xf32>
    %87 = vector.shape_cast %86 : vector<1x8x128xf32> to vector<8x128xf32>
    %88 = arith.mulf %85, %87 : vector<8x128xf32>
    %c0_86 = arith.constant 0 : index
    %c0_87 = arith.constant 0 : index
    %89 = vector.load %arg4[%c0_86, %c0_87] : memref<128x128xf32, #tpu.memory_space<vmem>>, vector<128x128xf32>
    %cst_88 = arith.constant dense<0.000000e+00> : vector<8x128xf32>
    %90 = tpu.matmul %80, %89, %cst_88 {dimension_numbers = #tpu.dot_dimension_numbers<[1], [0], [0], [1], [0, 0, 1, 1], [], []>} : vector<8x128xf32>, vector<128x128xf32>, vector<8x128xf32> -> vector<8x128xf32>
    %91 = arith.addf %78, %88 : vector<8x128xf32>
    %92 = arith.mulf %90, %82 : vector<8x128xf32>
    %c5_89 = arith.constant 5 : index
    %c0_90 = arith.constant 0 : index
    %c0_91 = arith.constant 0 : index
    %93 = vector.load %arg2[%c5_89, %c0_90, %c0_91] : memref<8x8x128xf32, #tpu.memory_space<vmem>>, vector<1x8x128xf32>
    %94 = vector.shape_cast %93 : vector<1x8x128xf32> to vector<8x128xf32>
    %95 = arith.mulf %92, %94 : vector<8x128xf32>
    %96 = arith.addf %91, %95 : vector<8x128xf32>
    %c5_92 = arith.constant 5 : index
    %c0_93 = arith.constant 0 : index
    %c0_94 = arith.constant 0 : index
    %97 = vector.load %arg1[%c5_92, %c0_93, %c0_94] : memref<8x8x128xf32, #tpu.memory_space<vmem>>, vector<1x8x128xf32>
    %98 = vector.shape_cast %97 : vector<1x8x128xf32> to vector<8x128xf32>
    %c6 = arith.constant 6 : index
    %c0_95 = arith.constant 0 : index
    %c0_96 = arith.constant 0 : index
    %99 = vector.load %arg1[%c6, %c0_95, %c0_96] : memref<8x8x128xf32, #tpu.memory_space<vmem>>, vector<1x8x128xf32>
    %100 = vector.shape_cast %99 : vector<1x8x128xf32> to vector<8x128xf32>
    %c5_97 = arith.constant 5 : index
    %c0_98 = arith.constant 0 : index
    %c0_99 = arith.constant 0 : index
    %101 = vector.load %arg0[%c5_97, %c0_98, %c0_99] : memref<8x8x128xf32, #tpu.memory_space<vmem>>, vector<1x8x128xf32>
    %102 = vector.shape_cast %101 : vector<1x8x128xf32> to vector<8x128xf32>
    %103 = arith.mulf %102, %98 : vector<8x128xf32>
    %c5_100 = arith.constant 5 : index
    %c0_101 = arith.constant 0 : index
    %c0_102 = arith.constant 0 : index
    %104 = vector.load %arg2[%c5_100, %c0_101, %c0_102] : memref<8x8x128xf32, #tpu.memory_space<vmem>>, vector<1x8x128xf32>
    %105 = vector.shape_cast %104 : vector<1x8x128xf32> to vector<8x128xf32>
    %106 = arith.mulf %103, %105 : vector<8x128xf32>
    %c0_103 = arith.constant 0 : index
    %c0_104 = arith.constant 0 : index
    %107 = vector.load %arg4[%c0_103, %c0_104] : memref<128x128xf32, #tpu.memory_space<vmem>>, vector<128x128xf32>
    %cst_105 = arith.constant dense<0.000000e+00> : vector<8x128xf32>
    %108 = tpu.matmul %98, %107, %cst_105 {dimension_numbers = #tpu.dot_dimension_numbers<[1], [0], [0], [1], [0, 0, 1, 1], [], []>} : vector<8x128xf32>, vector<128x128xf32>, vector<8x128xf32> -> vector<8x128xf32>
    %109 = arith.addf %96, %106 : vector<8x128xf32>
    %110 = arith.mulf %108, %100 : vector<8x128xf32>
    %c6_106 = arith.constant 6 : index
    %c0_107 = arith.constant 0 : index
    %c0_108 = arith.constant 0 : index
    %111 = vector.load %arg2[%c6_106, %c0_107, %c0_108] : memref<8x8x128xf32, #tpu.memory_space<vmem>>, vector<1x8x128xf32>
    %112 = vector.shape_cast %111 : vector<1x8x128xf32> to vector<8x128xf32>
    %113 = arith.mulf %110, %112 : vector<8x128xf32>
    %114 = arith.addf %109, %113 : vector<8x128xf32>
    %c6_109 = arith.constant 6 : index
    %c0_110 = arith.constant 0 : index
    %c0_111 = arith.constant 0 : index
    %115 = vector.load %arg1[%c6_109, %c0_110, %c0_111] : memref<8x8x128xf32, #tpu.memory_space<vmem>>, vector<1x8x128xf32>
    %116 = vector.shape_cast %115 : vector<1x8x128xf32> to vector<8x128xf32>
    %c7 = arith.constant 7 : index
    %c0_112 = arith.constant 0 : index
    %c0_113 = arith.constant 0 : index
    %117 = vector.load %arg1[%c7, %c0_112, %c0_113] : memref<8x8x128xf32, #tpu.memory_space<vmem>>, vector<1x8x128xf32>
    %118 = vector.shape_cast %117 : vector<1x8x128xf32> to vector<8x128xf32>
    %c6_114 = arith.constant 6 : index
    %c0_115 = arith.constant 0 : index
    %c0_116 = arith.constant 0 : index
    %119 = vector.load %arg0[%c6_114, %c0_115, %c0_116] : memref<8x8x128xf32, #tpu.memory_space<vmem>>, vector<1x8x128xf32>
    %120 = vector.shape_cast %119 : vector<1x8x128xf32> to vector<8x128xf32>
    %121 = arith.mulf %120, %116 : vector<8x128xf32>
    %c6_117 = arith.constant 6 : index
    %c0_118 = arith.constant 0 : index
    %c0_119 = arith.constant 0 : index
    %122 = vector.load %arg2[%c6_117, %c0_118, %c0_119] : memref<8x8x128xf32, #tpu.memory_space<vmem>>, vector<1x8x128xf32>
    %123 = vector.shape_cast %122 : vector<1x8x128xf32> to vector<8x128xf32>
    %124 = arith.mulf %121, %123 : vector<8x128xf32>
    %c0_120 = arith.constant 0 : index
    %c0_121 = arith.constant 0 : index
    %125 = vector.load %arg4[%c0_120, %c0_121] : memref<128x128xf32, #tpu.memory_space<vmem>>, vector<128x128xf32>
    %cst_122 = arith.constant dense<0.000000e+00> : vector<8x128xf32>
    %126 = tpu.matmul %116, %125, %cst_122 {dimension_numbers = #tpu.dot_dimension_numbers<[1], [0], [0], [1], [0, 0, 1, 1], [], []>} : vector<8x128xf32>, vector<128x128xf32>, vector<8x128xf32> -> vector<8x128xf32>
    %127 = arith.addf %114, %124 : vector<8x128xf32>
    %128 = arith.mulf %126, %118 : vector<8x128xf32>
    %c7_123 = arith.constant 7 : index
    %c0_124 = arith.constant 0 : index
    %c0_125 = arith.constant 0 : index
    %129 = vector.load %arg2[%c7_123, %c0_124, %c0_125] : memref<8x8x128xf32, #tpu.memory_space<vmem>>, vector<1x8x128xf32>
    %130 = vector.shape_cast %129 : vector<1x8x128xf32> to vector<8x128xf32>
    %131 = arith.mulf %128, %130 : vector<8x128xf32>
    %132 = arith.addf %127, %131 : vector<8x128xf32>
    %133 = vector.broadcast %1 : vector<1x128xf32> to vector<8x128xf32>
    %134 = arith.mulf %133, %2 : vector<8x128xf32>
    %135 = arith.addf %132, %134 : vector<8x128xf32>
    %c7_126 = arith.constant 7 : index
    %c0_127 = arith.constant 0 : index
    %c0_128 = arith.constant 0 : index
    %136 = vector.load %arg0[%c7_126, %c0_127, %c0_128] : memref<8x8x128xf32, #tpu.memory_space<vmem>>, vector<1x8x128xf32>
    %137 = vector.shape_cast %136 : vector<1x8x128xf32> to vector<8x128xf32>
    %138 = arith.mulf %137, %2 : vector<8x128xf32>
    %c7_129 = arith.constant 7 : index
    %c0_130 = arith.constant 0 : index
    %c0_131 = arith.constant 0 : index
    %139 = vector.load %arg2[%c7_129, %c0_130, %c0_131] : memref<8x8x128xf32, #tpu.memory_space<vmem>>, vector<1x8x128xf32>
    %140 = vector.shape_cast %139 : vector<1x8x128xf32> to vector<8x128xf32>
    %141 = arith.mulf %138, %140 : vector<8x128xf32>
    %142 = arith.addf %135, %141 : vector<8x128xf32>
    %cst_132 = arith.constant dense<0.000000e+00> : vector<8xf32>
    %143 = vector.multi_reduction <add>, %142, %cst_132 [1] : vector<8x128xf32> to vector<8xf32>
    %144 = vector.shape_cast %143 : vector<8xf32> to vector<8x1xf32>
    %c0_133 = arith.constant 0 : index
    %c0_134 = arith.constant 0 : index
    %c0_135 = arith.constant 0 : index
    %145 = vector.load %arg0[%c0_133, %c0_134, %c0_135] : memref<8x8x128xf32, #tpu.memory_space<vmem>>, vector<1x8x128xf32>
    %146 = vector.shape_cast %145 : vector<1x8x128xf32> to vector<8x128xf32>
    %147 = vector.broadcast %0 : vector<1x128xf32> to vector<8x128xf32>
    %148 = arith.addf %147, %146 : vector<8x128xf32>
    %cst_136 = arith.constant dense<0xFF800000> : vector<8xf32>
    %149 = vector.multi_reduction <maximumf>, %148, %cst_136 [1] : vector<8x128xf32> to vector<8xf32>
    %150 = vector.shape_cast %149 : vector<8xf32> to vector<8x1xf32>
    %151 = vector.broadcast %150 : vector<8x1xf32> to vector<8x128xf32>
    %152 = arith.subf %148, %151 : vector<8x128xf32>
    %153 = math.exp %152 : vector<8x128xf32>
    %c0_137 = arith.constant 0 : index
    %c0_138 = arith.constant 0 : index
    %154 = vector.load %arg5[%c0_137, %c0_138] : memref<128x128xf32, #tpu.memory_space<vmem>>, vector<128x128xf32>
    %cst_139 = arith.constant dense<0.000000e+00> : vector<8x128xf32>
    %155 = tpu.matmul %153, %154, %cst_139 {dimension_numbers = #tpu.dot_dimension_numbers<[1], [0], [0], [1], [0, 0, 1, 1], [], []>} : vector<8x128xf32>, vector<128x128xf32>, vector<8x128xf32> -> vector<8x128xf32>
    %cst_140 = arith.constant 1.000000e-30 : f32
    %156 = vector.broadcast %cst_140 : f32 to vector<8x128xf32>
    %157 = arith.addf %155, %156 : vector<8x128xf32>
    %158 = math.log %157 : vector<8x128xf32>
    %159 = vector.broadcast %150 : vector<8x1xf32> to vector<8x128xf32>
    %160 = arith.addf %158, %159 : vector<8x128xf32>
    %c1_141 = arith.constant 1 : index
    %c0_142 = arith.constant 0 : index
    %c0_143 = arith.constant 0 : index
    %161 = vector.load %arg0[%c1_141, %c0_142, %c0_143] : memref<8x8x128xf32, #tpu.memory_space<vmem>>, vector<1x8x128xf32>
    %162 = vector.shape_cast %161 : vector<1x8x128xf32> to vector<8x128xf32>
    %163 = arith.addf %160, %162 : vector<8x128xf32>
    %c1_144 = arith.constant 1 : index
    %c0_145 = arith.constant 0 : index
    %c0_146 = arith.constant 0 : index
    %164 = vector.load %arg2[%c1_144, %c0_145, %c0_146] : memref<8x8x128xf32, #tpu.memory_space<vmem>>, vector<1x8x128xf32>
    %165 = vector.shape_cast %164 : vector<1x8x128xf32> to vector<8x128xf32>
    %cst_147 = arith.constant 5.000000e-01 : f32
    %166 = vector.broadcast %cst_147 : f32 to vector<8x128xf32>
    %167 = arith.cmpf ogt, %165, %166 : vector<8x128xf32>
    %168 = arith.select %167, %163, %148 : vector<8x128xi1>, vector<8x128xf32>
    %cst_148 = arith.constant dense<0xFF800000> : vector<8xf32>
    %169 = vector.multi_reduction <maximumf>, %168, %cst_148 [1] : vector<8x128xf32> to vector<8xf32>
    %170 = vector.shape_cast %169 : vector<8xf32> to vector<8x1xf32>
    %171 = vector.broadcast %170 : vector<8x1xf32> to vector<8x128xf32>
    %172 = arith.subf %168, %171 : vector<8x128xf32>
    %173 = math.exp %172 : vector<8x128xf32>
    %c0_149 = arith.constant 0 : index
    %c0_150 = arith.constant 0 : index
    %174 = vector.load %arg5[%c0_149, %c0_150] : memref<128x128xf32, #tpu.memory_space<vmem>>, vector<128x128xf32>
    %cst_151 = arith.constant dense<0.000000e+00> : vector<8x128xf32>
    %175 = tpu.matmul %173, %174, %cst_151 {dimension_numbers = #tpu.dot_dimension_numbers<[1], [0], [0], [1], [0, 0, 1, 1], [], []>} : vector<8x128xf32>, vector<128x128xf32>, vector<8x128xf32> -> vector<8x128xf32>
    %cst_152 = arith.constant 1.000000e-30 : f32
    %176 = vector.broadcast %cst_152 : f32 to vector<8x128xf32>
    %177 = arith.addf %175, %176 : vector<8x128xf32>
    %178 = math.log %177 : vector<8x128xf32>
    %179 = vector.broadcast %170 : vector<8x1xf32> to vector<8x128xf32>
    %180 = arith.addf %178, %179 : vector<8x128xf32>
    %c2_153 = arith.constant 2 : index
    %c0_154 = arith.constant 0 : index
    %c0_155 = arith.constant 0 : index
    %181 = vector.load %arg0[%c2_153, %c0_154, %c0_155] : memref<8x8x128xf32, #tpu.memory_space<vmem>>, vector<1x8x128xf32>
    %182 = vector.shape_cast %181 : vector<1x8x128xf32> to vector<8x128xf32>
    %183 = arith.addf %180, %182 : vector<8x128xf32>
    %c2_156 = arith.constant 2 : index
    %c0_157 = arith.constant 0 : index
    %c0_158 = arith.constant 0 : index
    %184 = vector.load %arg2[%c2_156, %c0_157, %c0_158] : memref<8x8x128xf32, #tpu.memory_space<vmem>>, vector<1x8x128xf32>
    %185 = vector.shape_cast %184 : vector<1x8x128xf32> to vector<8x128xf32>
    %cst_159 = arith.constant 5.000000e-01 : f32
    %186 = vector.broadcast %cst_159 : f32 to vector<8x128xf32>
    %187 = arith.cmpf ogt, %185, %186 : vector<8x128xf32>
    %188 = arith.select %187, %183, %168 : vector<8x128xi1>, vector<8x128xf32>
    %cst_160 = arith.constant dense<0xFF800000> : vector<8xf32>
    %189 = vector.multi_reduction <maximumf>, %188, %cst_160 [1] : vector<8x128xf32> to vector<8xf32>
    %190 = vector.shape_cast %189 : vector<8xf32> to vector<8x1xf32>
    %191 = vector.broadcast %190 : vector<8x1xf32> to vector<8x128xf32>
    %192 = arith.subf %188, %191 : vector<8x128xf32>
    %193 = math.exp %192 : vector<8x128xf32>
    %c0_161 = arith.constant 0 : index
    %c0_162 = arith.constant 0 : index
    %194 = vector.load %arg5[%c0_161, %c0_162] : memref<128x128xf32, #tpu.memory_space<vmem>>, vector<128x128xf32>
    %cst_163 = arith.constant dense<0.000000e+00> : vector<8x128xf32>
    %195 = tpu.matmul %193, %194, %cst_163 {dimension_numbers = #tpu.dot_dimension_numbers<[1], [0], [0], [1], [0, 0, 1, 1], [], []>} : vector<8x128xf32>, vector<128x128xf32>, vector<8x128xf32> -> vector<8x128xf32>
    %cst_164 = arith.constant 1.000000e-30 : f32
    %196 = vector.broadcast %cst_164 : f32 to vector<8x128xf32>
    %197 = arith.addf %195, %196 : vector<8x128xf32>
    %198 = math.log %197 : vector<8x128xf32>
    %199 = vector.broadcast %190 : vector<8x1xf32> to vector<8x128xf32>
    %200 = arith.addf %198, %199 : vector<8x128xf32>
    %c3_165 = arith.constant 3 : index
    %c0_166 = arith.constant 0 : index
    %c0_167 = arith.constant 0 : index
    %201 = vector.load %arg0[%c3_165, %c0_166, %c0_167] : memref<8x8x128xf32, #tpu.memory_space<vmem>>, vector<1x8x128xf32>
    %202 = vector.shape_cast %201 : vector<1x8x128xf32> to vector<8x128xf32>
    %203 = arith.addf %200, %202 : vector<8x128xf32>
    %c3_168 = arith.constant 3 : index
    %c0_169 = arith.constant 0 : index
    %c0_170 = arith.constant 0 : index
    %204 = vector.load %arg2[%c3_168, %c0_169, %c0_170] : memref<8x8x128xf32, #tpu.memory_space<vmem>>, vector<1x8x128xf32>
    %205 = vector.shape_cast %204 : vector<1x8x128xf32> to vector<8x128xf32>
    %cst_171 = arith.constant 5.000000e-01 : f32
    %206 = vector.broadcast %cst_171 : f32 to vector<8x128xf32>
    %207 = arith.cmpf ogt, %205, %206 : vector<8x128xf32>
    %208 = arith.select %207, %203, %188 : vector<8x128xi1>, vector<8x128xf32>
    %cst_172 = arith.constant dense<0xFF800000> : vector<8xf32>
    %209 = vector.multi_reduction <maximumf>, %208, %cst_172 [1] : vector<8x128xf32> to vector<8xf32>
    %210 = vector.shape_cast %209 : vector<8xf32> to vector<8x1xf32>
    %211 = vector.broadcast %210 : vector<8x1xf32> to vector<8x128xf32>
    %212 = arith.subf %208, %211 : vector<8x128xf32>
    %213 = math.exp %212 : vector<8x128xf32>
    %c0_173 = arith.constant 0 : index
    %c0_174 = arith.constant 0 : index
    %214 = vector.load %arg5[%c0_173, %c0_174] : memref<128x128xf32, #tpu.memory_space<vmem>>, vector<128x128xf32>
    %cst_175 = arith.constant dense<0.000000e+00> : vector<8x128xf32>
    %215 = tpu.matmul %213, %214, %cst_175 {dimension_numbers = #tpu.dot_dimension_numbers<[1], [0], [0], [1], [0, 0, 1, 1], [], []>} : vector<8x128xf32>, vector<128x128xf32>, vector<8x128xf32> -> vector<8x128xf32>
    %cst_176 = arith.constant 1.000000e-30 : f32
    %216 = vector.broadcast %cst_176 : f32 to vector<8x128xf32>
    %217 = arith.addf %215, %216 : vector<8x128xf32>
    %218 = math.log %217 : vector<8x128xf32>
    %219 = vector.broadcast %210 : vector<8x1xf32> to vector<8x128xf32>
    %220 = arith.addf %218, %219 : vector<8x128xf32>
    %c4_177 = arith.constant 4 : index
    %c0_178 = arith.constant 0 : index
    %c0_179 = arith.constant 0 : index
    %221 = vector.load %arg0[%c4_177, %c0_178, %c0_179] : memref<8x8x128xf32, #tpu.memory_space<vmem>>, vector<1x8x128xf32>
    %222 = vector.shape_cast %221 : vector<1x8x128xf32> to vector<8x128xf32>
    %223 = arith.addf %220, %222 : vector<8x128xf32>
    %c4_180 = arith.constant 4 : index
    %c0_181 = arith.constant 0 : index
    %c0_182 = arith.constant 0 : index
    %224 = vector.load %arg2[%c4_180, %c0_181, %c0_182] : memref<8x8x128xf32, #tpu.memory_space<vmem>>, vector<1x8x128xf32>
    %225 = vector.shape_cast %224 : vector<1x8x128xf32> to vector<8x128xf32>
    %cst_183 = arith.constant 5.000000e-01 : f32
    %226 = vector.broadcast %cst_183 : f32 to vector<8x128xf32>
    %227 = arith.cmpf ogt, %225, %226 : vector<8x128xf32>
    %228 = arith.select %227, %223, %208 : vector<8x128xi1>, vector<8x128xf32>
    %cst_184 = arith.constant dense<0xFF800000> : vector<8xf32>
    %229 = vector.multi_reduction <maximumf>, %228, %cst_184 [1] : vector<8x128xf32> to vector<8xf32>
    %230 = vector.shape_cast %229 : vector<8xf32> to vector<8x1xf32>
    %231 = vector.broadcast %230 : vector<8x1xf32> to vector<8x128xf32>
    %232 = arith.subf %228, %231 : vector<8x128xf32>
    %233 = math.exp %232 : vector<8x128xf32>
    %c0_185 = arith.constant 0 : index
    %c0_186 = arith.constant 0 : index
    %234 = vector.load %arg5[%c0_185, %c0_186] : memref<128x128xf32, #tpu.memory_space<vmem>>, vector<128x128xf32>
    %cst_187 = arith.constant dense<0.000000e+00> : vector<8x128xf32>
    %235 = tpu.matmul %233, %234, %cst_187 {dimension_numbers = #tpu.dot_dimension_numbers<[1], [0], [0], [1], [0, 0, 1, 1], [], []>} : vector<8x128xf32>, vector<128x128xf32>, vector<8x128xf32> -> vector<8x128xf32>
    %cst_188 = arith.constant 1.000000e-30 : f32
    %236 = vector.broadcast %cst_188 : f32 to vector<8x128xf32>
    %237 = arith.addf %235, %236 : vector<8x128xf32>
    %238 = math.log %237 : vector<8x128xf32>
    %239 = vector.broadcast %230 : vector<8x1xf32> to vector<8x128xf32>
    %240 = arith.addf %238, %239 : vector<8x128xf32>
    %c5_189 = arith.constant 5 : index
    %c0_190 = arith.constant 0 : index
    %c0_191 = arith.constant 0 : index
    %241 = vector.load %arg0[%c5_189, %c0_190, %c0_191] : memref<8x8x128xf32, #tpu.memory_space<vmem>>, vector<1x8x128xf32>
    %242 = vector.shape_cast %241 : vector<1x8x128xf32> to vector<8x128xf32>
    %243 = arith.addf %240, %242 : vector<8x128xf32>
    %c5_192 = arith.constant 5 : index
    %c0_193 = arith.constant 0 : index
    %c0_194 = arith.constant 0 : index
    %244 = vector.load %arg2[%c5_192, %c0_193, %c0_194] : memref<8x8x128xf32, #tpu.memory_space<vmem>>, vector<1x8x128xf32>
    %245 = vector.shape_cast %244 : vector<1x8x128xf32> to vector<8x128xf32>
    %cst_195 = arith.constant 5.000000e-01 : f32
    %246 = vector.broadcast %cst_195 : f32 to vector<8x128xf32>
    %247 = arith.cmpf ogt, %245, %246 : vector<8x128xf32>
    %248 = arith.select %247, %243, %228 : vector<8x128xi1>, vector<8x128xf32>
    %cst_196 = arith.constant dense<0xFF800000> : vector<8xf32>
    %249 = vector.multi_reduction <maximumf>, %248, %cst_196 [1] : vector<8x128xf32> to vector<8xf32>
    %250 = vector.shape_cast %249 : vector<8xf32> to vector<8x1xf32>
    %251 = vector.broadcast %250 : vector<8x1xf32> to vector<8x128xf32>
    %252 = arith.subf %248, %251 : vector<8x128xf32>
    %253 = math.exp %252 : vector<8x128xf32>
    %c0_197 = arith.constant 0 : index
    %c0_198 = arith.constant 0 : index
    %254 = vector.load %arg5[%c0_197, %c0_198] : memref<128x128xf32, #tpu.memory_space<vmem>>, vector<128x128xf32>
    %cst_199 = arith.constant dense<0.000000e+00> : vector<8x128xf32>
    %255 = tpu.matmul %253, %254, %cst_199 {dimension_numbers = #tpu.dot_dimension_numbers<[1], [0], [0], [1], [0, 0, 1, 1], [], []>} : vector<8x128xf32>, vector<128x128xf32>, vector<8x128xf32> -> vector<8x128xf32>
    %cst_200 = arith.constant 1.000000e-30 : f32
    %256 = vector.broadcast %cst_200 : f32 to vector<8x128xf32>
    %257 = arith.addf %255, %256 : vector<8x128xf32>
    %258 = math.log %257 : vector<8x128xf32>
    %259 = vector.broadcast %250 : vector<8x1xf32> to vector<8x128xf32>
    %260 = arith.addf %258, %259 : vector<8x128xf32>
    %c6_201 = arith.constant 6 : index
    %c0_202 = arith.constant 0 : index
    %c0_203 = arith.constant 0 : index
    %261 = vector.load %arg0[%c6_201, %c0_202, %c0_203] : memref<8x8x128xf32, #tpu.memory_space<vmem>>, vector<1x8x128xf32>
    %262 = vector.shape_cast %261 : vector<1x8x128xf32> to vector<8x128xf32>
    %263 = arith.addf %260, %262 : vector<8x128xf32>
    %c6_204 = arith.constant 6 : index
    %c0_205 = arith.constant 0 : index
    %c0_206 = arith.constant 0 : index
    %264 = vector.load %arg2[%c6_204, %c0_205, %c0_206] : memref<8x8x128xf32, #tpu.memory_space<vmem>>, vector<1x8x128xf32>
    %265 = vector.shape_cast %264 : vector<1x8x128xf32> to vector<8x128xf32>
    %cst_207 = arith.constant 5.000000e-01 : f32
    %266 = vector.broadcast %cst_207 : f32 to vector<8x128xf32>
    %267 = arith.cmpf ogt, %265, %266 : vector<8x128xf32>
    %268 = arith.select %267, %263, %248 : vector<8x128xi1>, vector<8x128xf32>
    %cst_208 = arith.constant dense<0xFF800000> : vector<8xf32>
    %269 = vector.multi_reduction <maximumf>, %268, %cst_208 [1] : vector<8x128xf32> to vector<8xf32>
    %270 = vector.shape_cast %269 : vector<8xf32> to vector<8x1xf32>
    %271 = vector.broadcast %270 : vector<8x1xf32> to vector<8x128xf32>
    %272 = arith.subf %268, %271 : vector<8x128xf32>
    %273 = math.exp %272 : vector<8x128xf32>
    %c0_209 = arith.constant 0 : index
    %c0_210 = arith.constant 0 : index
    %274 = vector.load %arg5[%c0_209, %c0_210] : memref<128x128xf32, #tpu.memory_space<vmem>>, vector<128x128xf32>
    %cst_211 = arith.constant dense<0.000000e+00> : vector<8x128xf32>
    %275 = tpu.matmul %273, %274, %cst_211 {dimension_numbers = #tpu.dot_dimension_numbers<[1], [0], [0], [1], [0, 0, 1, 1], [], []>} : vector<8x128xf32>, vector<128x128xf32>, vector<8x128xf32> -> vector<8x128xf32>
    %cst_212 = arith.constant 1.000000e-30 : f32
    %276 = vector.broadcast %cst_212 : f32 to vector<8x128xf32>
    %277 = arith.addf %275, %276 : vector<8x128xf32>
    %278 = math.log %277 : vector<8x128xf32>
    %279 = vector.broadcast %270 : vector<8x1xf32> to vector<8x128xf32>
    %280 = arith.addf %278, %279 : vector<8x128xf32>
    %c7_213 = arith.constant 7 : index
    %c0_214 = arith.constant 0 : index
    %c0_215 = arith.constant 0 : index
    %281 = vector.load %arg0[%c7_213, %c0_214, %c0_215] : memref<8x8x128xf32, #tpu.memory_space<vmem>>, vector<1x8x128xf32>
    %282 = vector.shape_cast %281 : vector<1x8x128xf32> to vector<8x128xf32>
    %283 = arith.addf %280, %282 : vector<8x128xf32>
    %c7_216 = arith.constant 7 : index
    %c0_217 = arith.constant 0 : index
    %c0_218 = arith.constant 0 : index
    %284 = vector.load %arg2[%c7_216, %c0_217, %c0_218] : memref<8x8x128xf32, #tpu.memory_space<vmem>>, vector<1x8x128xf32>
    %285 = vector.shape_cast %284 : vector<1x8x128xf32> to vector<8x128xf32>
    %cst_219 = arith.constant 5.000000e-01 : f32
    %286 = vector.broadcast %cst_219 : f32 to vector<8x128xf32>
    %287 = arith.cmpf ogt, %285, %286 : vector<8x128xf32>
    %288 = arith.select %287, %283, %268 : vector<8x128xi1>, vector<8x128xf32>
    %289 = vector.broadcast %1 : vector<1x128xf32> to vector<8x128xf32>
    %290 = arith.addf %288, %289 : vector<8x128xf32>
    %cst_220 = arith.constant dense<0xFF800000> : vector<8xf32>
    %291 = vector.multi_reduction <maximumf>, %290, %cst_220 [1] : vector<8x128xf32> to vector<8xf32>
    %292 = vector.shape_cast %291 : vector<8xf32> to vector<8x1xf32>
    %293 = vector.broadcast %292 : vector<8x1xf32> to vector<8x128xf32>
    %294 = arith.subf %290, %293 : vector<8x128xf32>
    %295 = math.exp %294 : vector<8x128xf32>
    %cst_221 = arith.constant dense<0.000000e+00> : vector<8xf32>
    %296 = vector.multi_reduction <add>, %295, %cst_221 [1] : vector<8x128xf32> to vector<8xf32>
    %297 = vector.shape_cast %296 : vector<8xf32> to vector<8x1xf32>
    %298 = math.log %297 : vector<8x1xf32>
    %299 = arith.addf %298, %292 : vector<8x1xf32>
    %300 = arith.subf %144, %299 : vector<8x1xf32>
    %301 = vector.shape_cast %300 : vector<8x1xf32> to vector<8x1xf32>
    %302 = vector.broadcast %301 : vector<8x1xf32> to vector<8x128xf32>
    %c0_222 = arith.constant 0 : index
    %c0_223 = arith.constant 0 : index
    %303 = vector.load %arg8[%c0_222, %c0_223] : memref<8x128xf32, #tpu.memory_space<vmem>>, vector<8x128xf32>
    tpu.vector_store %arg8[%c0_222, %c0_223], %302 {strides = array<i32>} : memref<8x128xf32, #tpu.memory_space<vmem>>, vector<8x128xf32>,
    return
  }
}

</mosaic_0001>

<llo_original>
// kernel: custom-call.14
$region0: #{custom-call.14}
  %s0 = inlined_call_operand.vmem [shape: s32[7,2,3], index: 0, kind: output, shape index: {}]

// kernel: bert_lstm_crf_forward.3
$region0: #{bert_lstm_crf_forward.3}
  #allocation0 [shape = 'u32[]', space=smem, size = 0x4, offset = 0x4, fixed_abs, tag = 'smem constant byte address 0x4 - core index']
  #allocation1 [shape = 'u32[144,128]{1,0:T(1,128)}', space=vmem, size = 0x12000, scoped, tag = 'internal scratch']
  %s0 = inlined_call_operand.vmem [shape: f32[8,8,128], index: 0, kind: input, shape index: {}]
  %s1 = inlined_call_operand.vmem [shape: f32[8,8,128], index: 1, kind: input, shape index: {}]
  %s2 = inlined_call_operand.vmem [shape: f32[8,8,128], index: 2, kind: input, shape index: {}]
  %s3 = inlined_call_operand.vmem [shape: f32[8,128], index: 3, kind: input, shape index: {}]
  %s4 = inlined_call_operand.vmem [shape: f32[128,128], index: 4, kind: input, shape index: {}]
  %s5 = inlined_call_operand.vmem [shape: f32[128,128], index: 5, kind: input, shape index: {}]
  %s6 = inlined_call_operand.vmem [shape: f32[1,128], index: 6, kind: input, shape index: {}]
  %s7 = inlined_call_operand.vmem [shape: f32[1,128], index: 7, kind: input, shape index: {}]
  %s8 = inlined_call_operand.vmem [shape: f32[8,128], index: 8, kind: output, shape index: {}]
  %s9 = sld [smem:[#allocation0]]
  $region42: #{bert_lstm_crf_forward.3} parent=0
    _
  %s11 = ssub.s32 1, %s9
  %s12 = scalar_select 0, %s11, %s9
  // Predicated region
  $region2: #{bert_lstm_crf_forward.3} parent=0 // pred_check
    _
  $region3: #{bert_lstm_crf_forward.3} parent=0 // pred_check_branch
    %14 = sbr.rel (0) target = $region5
  $region4: #{bert_lstm_crf_forward.3} parent=0 // pred_region
    _
  $region5: #{bert_lstm_crf_forward.3} parent=0 // pred_fallthru
    _
  // Predicated region
  $region6: #{bert_lstm_crf_forward.3} parent=0 // pred_check
    _
  $region7: #{bert_lstm_crf_forward.3} parent=0 // pred_check_branch
    %16 = sbr.rel (0) target = $region9
  $region8: #{bert_lstm_crf_forward.3} parent=0 // pred_region
    _
  $region9: #{bert_lstm_crf_forward.3} parent=0 // pred_fallthru
    _
  // Predicated region
  $region10: #{bert_lstm_crf_forward.3} parent=0 // pred_check
    _
  $region11: #{bert_lstm_crf_forward.3} parent=0 // pred_check_branch
    %18 = sbr.rel (0) target = $region13
  $region12: #{bert_lstm_crf_forward.3} parent=0 // pred_region
    _
  $region13: #{bert_lstm_crf_forward.3} parent=0 // pred_fallthru
    _
  // Predicated region
  $region14: #{bert_lstm_crf_forward.3} parent=0 // pred_check
    _
  $region15: #{bert_lstm_crf_forward.3} parent=0 // pred_check_branch
    %20 = sbr.rel (0) target = $region17
  $region16: #{bert_lstm_crf_forward.3} parent=0 // pred_region
    _
  $region17: #{bert_lstm_crf_forward.3} parent=0 // pred_fallthru
    _
  // Predicated region
  $region18: #{bert_lstm_crf_forward.3} parent=0 // pred_check
    _
  $region19: #{bert_lstm_crf_forward.3} parent=0 // pred_check_branch
    %22 = sbr.rel (0) target = $region21
  $region20: #{bert_lstm_crf_forward.3} parent=0 // pred_region
    _
  $region21: #{bert_lstm_crf_forward.3} parent=0 // pred_fallthru
    _
  // Predicated region
  $region22: #{bert_lstm_crf_forward.3} parent=0 // pred_check
    _
  $region23: #{bert_lstm_crf_forward.3} parent=0 // pred_check_branch
    %24 = sbr.rel (0) target = $region25
  $region24: #{bert_lstm_crf_forward.3} parent=0 // pred_region
    _
  $region25: #{bert_lstm_crf_forward.3} parent=0 // pred_fallthru
    _
  // Predicated region
  $region26: #{bert_lstm_crf_forward.3} parent=0 // pred_check
    _
  $region27: #{bert_lstm_crf_forward.3} parent=0 // pred_check_branch
    %26 = sbr.rel (0) target = $region29
  $region28: #{bert_lstm_crf_forward.3} parent=0 // pred_region
    _
  $region29: #{bert_lstm_crf_forward.3} parent=0 // pred_fallthru
    _
  // Predicated region
  $region30: #{bert_lstm_crf_forward.3} parent=0 // pred_check
    _
  $region31: #{bert_lstm_crf_forward.3} parent=0 // pred_check_branch
    %28 = sbr.rel (0) target = $region33
  $region32: #{bert_lstm_crf_forward.3} parent=0 // pred_region
    _
  $region33: #{bert_lstm_crf_forward.3} parent=0 // pred_fallthru
    _
  %v29 = vld [vmem:[%s6] sm:$0x1]
  %v30 = vld [vmem:[%s7] sm:$0x1]
  %v31 = vld [vmem:[%s3] sm:$0xff]
  %v32 = vld [vmem:[%s1] sm:$0xff]
  %v34 = vlaneseq
  %v35 = vshrl.u32 %v34, 7
  %v36 = vsub.s32 0, %v35
  %v37 = vrot.slane %v29, %v36
  %v39 = vmul.f32 %v37, %v32
  %s40 = scalar_lea.vmem %s1, 8
  %v41 = vld [vmem:[%s40] sm:$0xff]
  %v42 = vld [vmem:[%s0] sm:$0xff]
  %v43 = vmul.f32 %v42, %v32
  %v44 = vld [vmem:[%s2] sm:$0xff]
  %v45 = vmul.f32 %v43, %v44
  %v46 = vld [vmem:[%s4] sm:$0xff]
  %v47 = vld [vmem:[%s4 + $0x8] sm:$0xff]
  %v48 = vld [vmem:[%s4 + $0x10] sm:$0xff]
  %v49 = vld [vmem:[%s4 + $0x18] sm:$0xff]
  %v50 = vld [vmem:[%s4 + $0x20] sm:$0xff]
  %v51 = vld [vmem:[%s4 + $0x28] sm:$0xff]
  %v52 = vld [vmem:[%s4 + $0x30] sm:$0xff]
  %v53 = vld [vmem:[%s4 + $0x38] sm:$0xff]
  %v54 = vld [vmem:[%s4 + $0x40] sm:$0xff]
  %v55 = vld [vmem:[%s4 + $0x48] sm:$0xff]
  %v56 = vld [vmem:[%s4 + $0x50] sm:$0xff]
  %v57 = vld [vmem:[%s4 + $0x58] sm:$0xff]
  %v58 = vld [vmem:[%s4 + $0x60] sm:$0xff]
  %v59 = vld [vmem:[%s4 + $0x68] sm:$0xff]
  %v60 = vld [vmem:[%s4 + $0x70] sm:$0xff]
  %v61 = vld [vmem:[%s4 + $0x78] sm:$0xff]
  %62 = vmatprep.subr.mxu0 0.0
  %63 = vmatpush1.msra.mxu0 %v46
  %64 = vmatprep.subr.mxu0 0.0
  %65 = vmatpush1.msra.mxu0 %v47
  %66 = vmatprep.subr.mxu0 0.0
  %67 = vmatpush1.msra.mxu0 %v48
  %68 = vmatprep.subr.mxu0 0.0
  %69 = vmatpush1.msra.mxu0 %v49
  %70 = vmatprep.subr.mxu0 0.0
  %71 = vmatpush1.msra.mxu0 %v50
  %72 = vmatprep.subr.mxu0 0.0
  %73 = vmatpush1.msra.mxu0 %v51
  %74 = vmatprep.subr.mxu0 0.0
  %75 = vmatpush1.msra.mxu0 %v52
  %76 = vmatprep.subr.mxu0 0.0
  %77 = vmatpush1.msra.mxu0 %v53
  %78 = vmatprep.subr.mxu0 0.0
  %79 = vmatpush1.msra.mxu0 %v54
  %80 = vmatprep.subr.mxu0 0.0
  %81 = vmatpush1.msra.mxu0 %v55
  %82 = vmatprep.subr.mxu0 0.0
  %83 = vmatpush1.msra.mxu0 %v56
  %84 = vmatprep.subr.mxu0 0.0
  %85 = vmatpush1.msra.mxu0 %v57
  %86 = vmatprep.subr.mxu0 0.0
  %87 = vmatpush1.msra.mxu0 %v58
  %88 = vmatprep.subr.mxu0 0.0
  %89 = vmatpush1.msra.mxu0 %v59
  %90 = vmatprep.subr.mxu0 0.0
  %91 = vmatpush1.msra.mxu0 %v60
  %92 = vmatprep.subr.mxu0 0.0
  %93 = vmatpush1.msra.mxu0 %v61
  %94 = vmatprep.subr.mxu0 0.0
  %95 = vmatpush1.msra.mxu0 0.0
  %96 = vmatprep.subr.mxu0 0.0
  %97 = vmatpush1.msra.mxu0 0.0
  %98 = vmatprep.subr.mxu0 0.0
  %99 = vmatpush1.msra.mxu0 0.0
  %100 = vmatprep.subr.mxu0 0.0
  %101 = vmatpush1.msra.mxu0 0.0
  %102 = vmatprep.subr.mxu0 0.0
  %103 = vmatpush1.msra.mxu0 0.0
  %104 = vmatprep.subr.mxu0 0.0
  %105 = vmatpush1.msra.mxu0 0.0
  %106 = vmatprep.subr.mxu0 0.0
  %107 = vmatpush1.msra.mxu0 0.0
  %108 = vmatprep.subr.mxu0 0.0
  %109 = vmatpush1.msra.mxu0 0.0
  %110 = vmatprep.subr.mxu0 0.0
  %111 = vmatpush1.msra.mxu0 0.0
  %112 = vmatprep.subr.mxu0 0.0
  %113 = vmatpush1.msra.mxu0 0.0
  %114 = vmatprep.subr.mxu0 0.0
  %115 = vmatpush1.msra.mxu0 0.0
  %116 = vmatprep.subr.mxu0 0.0
  %117 = vmatpush1.msra.mxu0 0.0
  %118 = vmatprep.subr.mxu0 0.0
  %119 = vmatpush1.msra.mxu0 0.0
  %120 = vmatprep.subr.mxu0 0.0
  %121 = vmatpush1.msra.mxu0 0.0
  %122 = vmatprep.subr.mxu0 0.0
  %123 = vmatpush1.msra.mxu0 0.0
  %124 = vmatprep.subr.mxu0 0.0
  %125 = vmatpush1.msra.mxu0 0.0
  %126 = vmatprep.mubr.f32.mxu0 0.0
  %127 = vmatmul.mubr.f32.gmra.mrb[0].mxu0 %v32
  %v128 = vpop.f32.mrb[0].mxu0
  %v129 = vadd.f32 0.0, %v128
  %v130 = vpop.f32.mrb[0].mxu0
  %131 = vdwg.mxu0
  %v132 = vadd.f32 %v39, %v45
  %v133 = vmul.f32 %v129, %v41
  %s134 = scalar_lea.vmem %s2, 8
  %v135 = vld [vmem:[%s134] sm:$0xff]
  %v136 = vmul.f32 %v133, %v135
  %v137 = vadd.f32 %v132, %v136
  %s138 = scalar_lea.vmem %s1, 16
  %v139 = vld [vmem:[%s138] sm:$0xff]
  %s140 = scalar_lea.vmem %s0, 8
  %v141 = vld [vmem:[%s140] sm:$0xff]
  %v142 = vmul.f32 %v141, %v41
  %v143 = vmul.f32 %v142, %v135
  %144 = vmatprep.subr.mxu0 0.0
  %145 = vmatpush1.msra.mxu0 %v46
  %146 = vmatprep.subr.mxu0 0.0
  %147 = vmatpush1.msra.mxu0 %v47
  %148 = vmatprep.subr.mxu0 0.0
  %149 = vmatpush1.msra.mxu0 %v48
  %150 = vmatprep.subr.mxu0 0.0
  %151 = vmatpush1.msra.mxu0 %v49
  %152 = vmatprep.subr.mxu0 0.0
  %153 = vmatpush1.msra.mxu0 %v50
  %154 = vmatprep.subr.mxu0 0.0
  %155 = vmatpush1.msra.mxu0 %v51
  %156 = vmatprep.subr.mxu0 0.0
  %157 = vmatpush1.msra.mxu0 %v52
  %158 = vmatprep.subr.mxu0 0.0
  %159 = vmatpush1.msra.mxu0 %v53
  %160 = vmatprep.subr.mxu0 0.0
  %161 = vmatpush1.msra.mxu0 %v54
  %162 = vmatprep.subr.mxu0 0.0
  %163 = vmatpush1.msra.mxu0 %v55
  %164 = vmatprep.subr.mxu0 0.0
  %165 = vmatpush1.msra.mxu0 %v56
  %166 = vmatprep.subr.mxu0 0.0
  %167 = vmatpush1.msra.mxu0 %v57
  %168 = vmatprep.subr.mxu0 0.0
  %169 = vmatpush1.msra.mxu0 %v58
  %170 = vmatprep.subr.mxu0 0.0
  %171 = vmatpush1.msra.mxu0 %v59
  %172 = vmatprep.subr.mxu0 0.0
  %173 = vmatpush1.msra.mxu0 %v60
  %174 = vmatprep.subr.mxu0 0.0
  %175 = vmatpush1.msra.mxu0 %v61
  %176 = vmatprep.subr.mxu0 0.0
  %177 = vmatpush1.msra.mxu0 0.0
  %178 = vmatprep.subr.mxu0 0.0
  %179 = vmatpush1.msra.mxu0 0.0
  %180 = vmatprep.subr.mxu0 0.0
  %181 = vmatpush1.msra.mxu0 0.0
  %182 = vmatprep.subr.mxu0 0.0
  %183 = vmatpush1.msra.mxu0 0.0
  %184 = vmatprep.subr.mxu0 0.0
  %185 = vmatpush1.msra.mxu0 0.0
  %186 = vmatprep.subr.mxu0 0.0
  %187 = vmatpush1.msra.mxu0 0.0
  %188 = vmatprep.subr.mxu0 0.0
  %189 = vmatpush1.msra.mxu0 0.0
  %190 = vmatprep.subr.mxu0 0.0
  %191 = vmatpush1.msra.mxu0 0.0
  %192 = vmatprep.subr.mxu0 0.0
  %193 = vmatpush1.msra.mxu0 0.0
  %194 = vmatprep.subr.mxu0 0.0
  %195 = vmatpush1.msra.mxu0 0.0
  %196 = vmatprep.subr.mxu0 0.0
  %197 = vmatpush1.msra.mxu0 0.0
  %198 = vmatprep.subr.mxu0 0.0
  %199 = vmatpush1.msra.mxu0 0.0
  %200 = vmatprep.subr.mxu0 0.0
  %201 = vmatpush1.msra.mxu0 0.0
  %202 = vmatprep.subr.mxu0 0.0
  %203 = vmatpush1.msra.mxu0 0.0
  %204 = vmatprep.subr.mxu0 0.0
  %205 = vmatpush1.msra.mxu0 0.0
  %206 = vmatprep.subr.mxu0 0.0
  %207 = vmatpush1.msra.mxu0 0.0
  %208 = vmatprep.mubr.f32.mxu0 0.0
  %209 = vmatmul.mubr.f32.gmra.mrb[0].mxu0 %v41
  %v210 = vpop.f32.mrb[0].mxu0
  %v211 = vadd.f32 0.0, %v210
  %v212 = vpop.f32.mrb[0].mxu0
  %213 = vdwg.mxu0
  %v214 = vadd.f32 %v137, %v143
  %v215 = vmul.f32 %v211, %v139
  %s216 = scalar_lea.vmem %s2, 16
  %v217 = vld [vmem:[%s216] sm:$0xff]
  %v218 = vmul.f32 %v215, %v217
  %v219 = vadd.f32 %v214, %v218
  %s220 = scalar_lea.vmem %s1, 24
  %v221 = vld [vmem:[%s220] sm:$0xff]
  %s222 = scalar_lea.vmem %s0, 16
  %v223 = vld [vmem:[%s222] sm:$0xff]
  %v224 = vmul.f32 %v223, %v139
  %v225 = vmul.f32 %v224, %v217
  %226 = vmatprep.subr.mxu0 0.0
  %227 = vmatpush1.msra.mxu0 %v46
  %228 = vmatprep.subr.mxu0 0.0
  %229 = vmatpush1.msra.mxu0 %v47
  %230 = vmatprep.subr.mxu0 0.0
  %231 = vmatpush1.msra.mxu0 %v48
  %232 = vmatprep.subr.mxu0 0.0
  %233 = vmatpush1.msra.mxu0 %v49
  %234 = vmatprep.subr.mxu0 0.0
  %235 = vmatpush1.msra.mxu0 %v50
  %236 = vmatprep.subr.mxu0 0.0
  %237 = vmatpush1.msra.mxu0 %v51
  %238 = vmatprep.subr.mxu0 0.0
  %239 = vmatpush1.msra.mxu0 %v52
  %240 = vmatprep.subr.mxu0 0.0
  %241 = vmatpush1.msra.mxu0 %v53
  %242 = vmatprep.subr.mxu0 0.0
  %243 = vmatpush1.msra.mxu0 %v54
  %244 = vmatprep.subr.mxu0 0.0
  %245 = vmatpush1.msra.mxu0 %v55
  %246 = vmatprep.subr.mxu0 0.0
  %247 = vmatpush1.msra.mxu0 %v56
  %248 = vmatprep.subr.mxu0 0.0
  %249 = vmatpush1.msra.mxu0 %v57
  %250 = vmatprep.subr.mxu0 0.0
  %251 = vmatpush1.msra.mxu0 %v58
  %252 = vmatprep.subr.mxu0 0.0
  %253 = vmatpush1.msra.mxu0 %v59
  %254 = vmatprep.subr.mxu0 0.0
  %255 = vmatpush1.msra.mxu0 %v60
  %256 = vmatprep.subr.mxu0 0.0
  %257 = vmatpush1.msra.mxu0 %v61
  %258 = vmatprep.subr.mxu0 0.0
  %259 = vmatpush1.msra.mxu0 0.0
  %260 = vmatprep.subr.mxu0 0.0
  %261 = vmatpush1.msra.mxu0 0.0
  %262 = vmatprep.subr.mxu0 0.0
  %263 = vmatpush1.msra.mxu0 0.0
  %264 = vmatprep.subr.mxu0 0.0
  %265 = vmatpush1.msra.mxu0 0.0
  %266 = vmatprep.subr.mxu0 0.0
  %267 = vmatpush1.msra.mxu0 0.0
  %268 = vmatprep.subr.mxu0 0.0
  %269 = vmatpush1.msra.mxu0 0.0
  %270 = vmatprep.subr.mxu0 0.0
  %271 = vmatpush1.msra.mxu0 0.0
  %272 = vmatprep.subr.mxu0 0.0
  %273 = vmatpush1.msra.mxu0 0.0
  %274 = vmatprep.subr.mxu0 0.0
  %275 = vmatpush1.msra.mxu0 0.0
  %276 = vmatprep.subr.mxu0 0.0
  %277 = vmatpush1.msra.mxu0 0.0
  %278 = vmatprep.subr.mxu0 0.0
  %279 = vmatpush1.msra.mxu0 0.0
  %280 = vmatprep.subr.mxu0 0.0
  %281 = vmatpush1.msra.mxu0 0.0
  %282 = vmatprep.subr.mxu0 0.0
  %283 = vmatpush1.msra.mxu0 0.0
  %284 = vmatprep.subr.mxu0 0.0
  %285 = vmatpush1.msra.mxu0 0.0
  %286 = vmatprep.subr.mxu0 0.0
  %287 = vmatpush1.msra.mxu0 0.0
  %288 = vmatprep.subr.mxu0 0.0
  %289 = vmatpush1.msra.mxu0 0.0
  %290 = vmatprep.mubr.f32.mxu0 0.0
  %291 = vmatmul.mubr.f32.gmra.mrb[0].mxu0 %v139
  %v292 = vpop.f32.mrb[0].mxu0
  %v293 = vadd.f32 0.0, %v292
  %v294 = vpop.f32.mrb[0].mxu0
  %295 = vdwg.mxu0
  %v296 = vadd.f32 %v219, %v225
  %v297 = vmul.f32 %v293, %v221
  %s298 = scalar_lea.vmem %s2, 24
  %v299 = vld [vmem:[%s298] sm:$0xff]
  %v300 = vmul.f32 %v297, %v299
  %v301 = vadd.f32 %v296, %v300
  %s302 = scalar_lea.vmem %s1, 32
  %v303 = vld [vmem:[%s302] sm:$0xff]
  %s304 = scalar_lea.vmem %s0, 24
  %v305 = vld [vmem:[%s304] sm:$0xff]
  %v306 = vmul.f32 %v305, %v221
  %v307 = vmul.f32 %v306, %v299
  %308 = vmatprep.subr.mxu0 0.0
  %309 = vmatpush1.msra.mxu0 %v46
  %310 = vmatprep.subr.mxu0 0.0
  %311 = vmatpush1.msra.mxu0 %v47
  %312 = vmatprep.subr.mxu0 0.0
  %313 = vmatpush1.msra.mxu0 %v48
  %314 = vmatprep.subr.mxu0 0.0
  %315 = vmatpush1.msra.mxu0 %v49
  %316 = vmatprep.subr.mxu0 0.0
  %317 = vmatpush1.msra.mxu0 %v50
  %318 = vmatprep.subr.mxu0 0.0
  %319 = vmatpush1.msra.mxu0 %v51
  %320 = vmatprep.subr.mxu0 0.0
  %321 = vmatpush1.msra.mxu0 %v52
  %322 = vmatprep.subr.mxu0 0.0
  %323 = vmatpush1.msra.mxu0 %v53
  %324 = vmatprep.subr.mxu0 0.0
  %325 = vmatpush1.msra.mxu0 %v54
  %326 = vmatprep.subr.mxu0 0.0
  %327 = vmatpush1.msra.mxu0 %v55
  %328 = vmatprep.subr.mxu0 0.0
  %329 = vmatpush1.msra.mxu0 %v56
  %330 = vmatprep.subr.mxu0 0.0
  %331 = vmatpush1.msra.mxu0 %v57
  %332 = vmatprep.subr.mxu0 0.0
  %333 = vmatpush1.msra.mxu0 %v58
  %334 = vmatprep.subr.mxu0 0.0
  %335 = vmatpush1.msra.mxu0 %v59
  %336 = vmatprep.subr.mxu0 0.0
  %337 = vmatpush1.msra.mxu0 %v60
  %338 = vmatprep.subr.mxu0 0.0
  %339 = vmatpush1.msra.mxu0 %v61
  %340 = vmatprep.subr.mxu0 0.0
  %341 = vmatpush1.msra.mxu0 0.0
  %342 = vmatprep.subr.mxu0 0.0
  %343 = vmatpush1.msra.mxu0 0.0
  %344 = vmatprep.subr.mxu0 0.0
  %345 = vmatpush1.msra.mxu0 0.0
  %346 = vmatprep.subr.mxu0 0.0
  %347 = vmatpush1.msra.mxu0 0.0
  %348 = vmatprep.subr.mxu0 0.0
  %349 = vmatpush1.msra.mxu0 0.0
  %350 = vmatprep.subr.mxu0 0.0
  %351 = vmatpush1.msra.mxu0 0.0
  %352 = vmatprep.subr.mxu0 0.0
  %353 = vmatpush1.msra.mxu0 0.0
  %354 = vmatprep.subr.mxu0 0.0
  %355 = vmatpush1.msra.mxu0 0.0
  %356 = vmatprep.subr.mxu0 0.0
  %357 = vmatpush1.msra.mxu0 0.0
  %358 = vmatprep.subr.mxu0 0.0
  %359 = vmatpush1.msra.mxu0 0.0
  %360 = vmatprep.subr.mxu0 0.0
  %361 = vmatpush1.msra.mxu0 0.0
  %362 = vmatprep.subr.mxu0 0.0
  %363 = vmatpush1.msra.mxu0 0.0
  %364 = vmatprep.subr.mxu0 0.0
  %365 = vmatpush1.msra.mxu0 0.0
  %366 = vmatprep.subr.mxu0 0.0
  %367 = vmatpush1.msra.mxu0 0.0
  %368 = vmatprep.subr.mxu0 0.0
  %369 = vmatpush1.msra.mxu0 0.0
  %370 = vmatprep.subr.mxu0 0.0
  %371 = vmatpush1.msra.mxu0 0.0
  %372 = vmatprep.mubr.f32.mxu0 0.0
  %373 = vmatmul.mubr.f32.gmra.mrb[0].mxu0 %v221
  %v374 = vpop.f32.mrb[0].mxu0
  %v375 = vadd.f32 0.0, %v374
  %v376 = vpop.f32.mrb[0].mxu0
  %377 = vdwg.mxu0
  %v378 = vadd.f32 %v301, %v307
  %v379 = vmul.f32 %v375, %v303
  %s380 = scalar_lea.vmem %s2, 32
  %v381 = vld [vmem:[%s380] sm:$0xff]
  %v382 = vmul.f32 %v379, %v381
  %v383 = vadd.f32 %v378, %v382
  %s384 = scalar_lea.vmem %s1, 40
  %v385 = vld [vmem:[%s384] sm:$0xff]
  %s386 = scalar_lea.vmem %s0, 32
  %v387 = vld [vmem:[%s386] sm:$0xff]
  %v388 = vmul.f32 %v387, %v303
  %v389 = vmul.f32 %v388, %v381
  %390 = vmatprep.subr.mxu0 0.0
  %391 = vmatpush1.msra.mxu0 %v46
  %392 = vmatprep.subr.mxu0 0.0
  %393 = vmatpush1.msra.mxu0 %v47
  %394 = vmatprep.subr.mxu0 0.0
  %395 = vmatpush1.msra.mxu0 %v48
  %396 = vmatprep.subr.mxu0 0.0
  %397 = vmatpush1.msra.mxu0 %v49
  %398 = vmatprep.subr.mxu0 0.0
  %399 = vmatpush1.msra.mxu0 %v50
  %400 = vmatprep.subr.mxu0 0.0
  %401 = vmatpush1.msra.mxu0 %v51
  %402 = vmatprep.subr.mxu0 0.0
  %403 = vmatpush1.msra.mxu0 %v52
  %404 = vmatprep.subr.mxu0 0.0
  %405 = vmatpush1.msra.mxu0 %v53
  %406 = vmatprep.subr.mxu0 0.0
  %407 = vmatpush1.msra.mxu0 %v54
  %408 = vmatprep.subr.mxu0 0.0
  %409 = vmatpush1.msra.mxu0 %v55
  %410 = vmatprep.subr.mxu0 0.0
  %411 = vmatpush1.msra.mxu0 %v56
  %412 = vmatprep.subr.mxu0 0.0
  %413 = vmatpush1.msra.mxu0 %v57
  %414 = vmatprep.subr.mxu0 0.0
  %415 = vmatpush1.msra.mxu0 %v58
  %416 = vmatprep.subr.mxu0 0.0
  %417 = vmatpush1.msra.mxu0 %v59
  %418 = vmatprep.subr.mxu0 0.0
  %419 = vmatpush1.msra.mxu0 %v60
  %420 = vmatprep.subr.mxu0 0.0
  %421 = vmatpush1.msra.mxu0 %v61
  %422 = vmatprep.subr.mxu0 0.0
  %423 = vmatpush1.msra.mxu0 0.0
  %424 = vmatprep.subr.mxu0 0.0
  %425 = vmatpush1.msra.mxu0 0.0
  %426 = vmatprep.subr.mxu0 0.0
  %427 = vmatpush1.msra.mxu0 0.0
  %428 = vmatprep.subr.mxu0 0.0
  %429 = vmatpush1.msra.mxu0 0.0
  %430 = vmatprep.subr.mxu0 0.0
  %431 = vmatpush1.msra.mxu0 0.0
  %432 = vmatprep.subr.mxu0 0.0
  %433 = vmatpush1.msra.mxu0 0.0
  %434 = vmatprep.subr.mxu0 0.0
  %435 = vmatpush1.msra.mxu0 0.0
  %436 = vmatprep.subr.mxu0 0.0
  %437 = vmatpush1.msra.mxu0 0.0
  %438 = vmatprep.subr.mxu0 0.0
  %439 = vmatpush1.msra.mxu0 0.0
  %440 = vmatprep.subr.mxu0 0.0
  %441 = vmatpush1.msra.mxu0 0.0
  %442 = vmatprep.subr.mxu0 0.0
  %443 = vmatpush1.msra.mxu0 0.0
  %444 = vmatprep.subr.mxu0 0.0
  %445 = vmatpush1.msra.mxu0 0.0
  %446 = vmatprep.subr.mxu0 0.0
  %447 = vmatpush1.msra.mxu0 0.0
  %448 = vmatprep.subr.mxu0 0.0
  %449 = vmatpush1.msra.mxu0 0.0
  %450 = vmatprep.subr.mxu0 0.0
  %451 = vmatpush1.msra.mxu0 0.0
  %452 = vmatprep.subr.mxu0 0.0
  %453 = vmatpush1.msra.mxu0 0.0
  %454 = vmatprep.mubr.f32.mxu0 0.0
  %455 = vmatmul.mubr.f32.gmra.mrb[0].mxu0 %v303
  %v456 = vpop.f32.mrb[0].mxu0
  %v457 = vadd.f32 0.0, %v456
  %v458 = vpop.f32.mrb[0].mxu0
  %459 = vdwg.mxu0
  %v460 = vadd.f32 %v383, %v389
  %v461 = vmul.f32 %v457, %v385
  %s462 = scalar_lea.vmem %s2, 40
  %v463 = vld [vmem:[%s462] sm:$0xff]
  %v464 = vmul.f32 %v461, %v463
  %v465 = vadd.f32 %v460, %v464
  %s466 = scalar_lea.vmem %s1, 48
  %v467 = vld [vmem:[%s466] sm:$0xff]
  %s468 = scalar_lea.vmem %s0, 40
  %v469 = vld [vmem:[%s468] sm:$0xff]
  %v470 = vmul.f32 %v469, %v385
  %v471 = vmul.f32 %v470, %v463
  %472 = vmatprep.subr.mxu0 0.0
  %473 = vmatpush1.msra.mxu0 %v46
  %474 = vmatprep.subr.mxu0 0.0
  %475 = vmatpush1.msra.mxu0 %v47
  %476 = vmatprep.subr.mxu0 0.0
  %477 = vmatpush1.msra.mxu0 %v48
  %478 = vmatprep.subr.mxu0 0.0
  %479 = vmatpush1.msra.mxu0 %v49
  %480 = vmatprep.subr.mxu0 0.0
  %481 = vmatpush1.msra.mxu0 %v50
  %482 = vmatprep.subr.mxu0 0.0
  %483 = vmatpush1.msra.mxu0 %v51
  %484 = vmatprep.subr.mxu0 0.0
  %485 = vmatpush1.msra.mxu0 %v52
  %486 = vmatprep.subr.mxu0 0.0
  %487 = vmatpush1.msra.mxu0 %v53
  %488 = vmatprep.subr.mxu0 0.0
  %489 = vmatpush1.msra.mxu0 %v54
  %490 = vmatprep.subr.mxu0 0.0
  %491 = vmatpush1.msra.mxu0 %v55
  %492 = vmatprep.subr.mxu0 0.0
  %493 = vmatpush1.msra.mxu0 %v56
  %494 = vmatprep.subr.mxu0 0.0
  %495 = vmatpush1.msra.mxu0 %v57
  %496 = vmatprep.subr.mxu0 0.0
  %497 = vmatpush1.msra.mxu0 %v58
  %498 = vmatprep.subr.mxu0 0.0
  %499 = vmatpush1.msra.mxu0 %v59
  %500 = vmatprep.subr.mxu0 0.0
  %501 = vmatpush1.msra.mxu0 %v60
  %502 = vmatprep.subr.mxu0 0.0
  %503 = vmatpush1.msra.mxu0 %v61
  %504 = vmatprep.subr.mxu0 0.0
  %505 = vmatpush1.msra.mxu0 0.0
  %506 = vmatprep.subr.mxu0 0.0
  %507 = vmatpush1.msra.mxu0 0.0
  %508 = vmatprep.subr.mxu0 0.0
  %509 = vmatpush1.msra.mxu0 0.0
  %510 = vmatprep.subr.mxu0 0.0
  %511 = vmatpush1.msra.mxu0 0.0
  %512 = vmatprep.subr.mxu0 0.0
  %513 = vmatpush1.msra.mxu0 0.0
  %514 = vmatprep.subr.mxu0 0.0
  %515 = vmatpush1.msra.mxu0 0.0
  %516 = vmatprep.subr.mxu0 0.0
  %517 = vmatpush1.msra.mxu0 0.0
  %518 = vmatprep.subr.mxu0 0.0
  %519 = vmatpush1.msra.mxu0 0.0
  %520 = vmatprep.subr.mxu0 0.0
  %521 = vmatpush1.msra.mxu0 0.0
  %522 = vmatprep.subr.mxu0 0.0
  %523 = vmatpush1.msra.mxu0 0.0
  %524 = vmatprep.subr.mxu0 0.0
  %525 = vmatpush1.msra.mxu0 0.0
  %526 = vmatprep.subr.mxu0 0.0
  %527 = vmatpush1.msra.mxu0 0.0
  %528 = vmatprep.subr.mxu0 0.0
  %529 = vmatpush1.msra.mxu0 0.0
  %530 = vmatprep.subr.mxu0 0.0
  %531 = vmatpush1.msra.mxu0 0.0
  %532 = vmatprep.subr.mxu0 0.0
  %533 = vmatpush1.msra.mxu0 0.0
  %534 = vmatprep.subr.mxu0 0.0
  %535 = vmatpush1.msra.mxu0 0.0
  %536 = vmatprep.mubr.f32.mxu0 0.0
  %537 = vmatmul.mubr.f32.gmra.mrb[0].mxu0 %v385
  %v538 = vpop.f32.mrb[0].mxu0
  %v539 = vadd.f32 0.0, %v538
  %v540 = vpop.f32.mrb[0].mxu0
  %541 = vdwg.mxu0
  %v542 = vadd.f32 %v465, %v471
  %v543 = vmul.f32 %v539, %v467
  %s544 = scalar_lea.vmem %s2, 48
  %v545 = vld [vmem:[%s544] sm:$0xff]
  %v546 = vmul.f32 %v543, %v545
  %v547 = vadd.f32 %v542, %v546
  %s548 = scalar_lea.vmem %s1, 56
  %v549 = vld [vmem:[%s548] sm:$0xff]
  %s550 = scalar_lea.vmem %s0, 48
  %v551 = vld [vmem:[%s550] sm:$0xff]
  %v552 = vmul.f32 %v551, %v467
  %v553 = vmul.f32 %v552, %v545
  %554 = vmatprep.subr.mxu0 0.0
  %555 = vmatpush1.msra.mxu0 %v46
  %556 = vmatprep.subr.mxu0 0.0
  %557 = vmatpush1.msra.mxu0 %v47
  %558 = vmatprep.subr.mxu0 0.0
  %559 = vmatpush1.msra.mxu0 %v48
  %560 = vmatprep.subr.mxu0 0.0
  %561 = vmatpush1.msra.mxu0 %v49
  %562 = vmatprep.subr.mxu0 0.0
  %563 = vmatpush1.msra.mxu0 %v50
  %564 = vmatprep.subr.mxu0 0.0
  %565 = vmatpush1.msra.mxu0 %v51
  %566 = vmatprep.subr.mxu0 0.0
  %567 = vmatpush1.msra.mxu0 %v52
  %568 = vmatprep.subr.mxu0 0.0
  %569 = vmatpush1.msra.mxu0 %v53
  %570 = vmatprep.subr.mxu0 0.0
  %571 = vmatpush1.msra.mxu0 %v54
  %572 = vmatprep.subr.mxu0 0.0
  %573 = vmatpush1.msra.mxu0 %v55
  %574 = vmatprep.subr.mxu0 0.0
  %575 = vmatpush1.msra.mxu0 %v56
  %576 = vmatprep.subr.mxu0 0.0
  %577 = vmatpush1.msra.mxu0 %v57
  %578 = vmatprep.subr.mxu0 0.0
  %579 = vmatpush1.msra.mxu0 %v58
  %580 = vmatprep.subr.mxu0 0.0
  %581 = vmatpush1.msra.mxu0 %v59
  %582 = vmatprep.subr.mxu0 0.0
  %583 = vmatpush1.msra.mxu0 %v60
  %584 = vmatprep.subr.mxu0 0.0
  %585 = vmatpush1.msra.mxu0 %v61
  %586 = vmatprep.subr.mxu0 0.0
  %587 = vmatpush1.msra.mxu0 0.0
  %588 = vmatprep.subr.mxu0 0.0
  %589 = vmatpush1.msra.mxu0 0.0
  %590 = vmatprep.subr.mxu0 0.0
  %591 = vmatpush1.msra.mxu0 0.0
  %592 = vmatprep.subr.mxu0 0.0
  %593 = vmatpush1.msra.mxu0 0.0
  %594 = vmatprep.subr.mxu0 0.0
  %595 = vmatpush1.msra.mxu0 0.0
  %596 = vmatprep.subr.mxu0 0.0
  %597 = vmatpush1.msra.mxu0 0.0
  %598 = vmatprep.subr.mxu0 0.0
  %599 = vmatpush1.msra.mxu0 0.0
  %600 = vmatprep.subr.mxu0 0.0
  %601 = vmatpush1.msra.mxu0 0.0
  %602 = vmatprep.subr.mxu0 0.0
  %603 = vmatpush1.msra.mxu0 0.0
  %604 = vmatprep.subr.mxu0 0.0
  %605 = vmatpush1.msra.mxu0 0.0
  %606 = vmatprep.subr.mxu0 0.0
  %607 = vmatpush1.msra.mxu0 0.0
  %608 = vmatprep.subr.mxu0 0.0
  %609 = vmatpush1.msra.mxu0 0.0
  %610 = vmatprep.subr.mxu0 0.0
  %611 = vmatpush1.msra.mxu0 0.0
  %612 = vmatprep.subr.mxu0 0.0
  %613 = vmatpush1.msra.mxu0 0.0
  %614 = vmatprep.subr.mxu0 0.0
  %615 = vmatpush1.msra.mxu0 0.0
  %616 = vmatprep.subr.mxu0 0.0
  %617 = vmatpush1.msra.mxu0 0.0
  %618 = vmatprep.mubr.f32.mxu0 0.0
  %619 = vmatmul.mubr.f32.gmra.mrb[0].mxu0 %v467
  %v620 = vpop.f32.mrb[0].mxu0
  %v621 = vadd.f32 0.0, %v620
  %v622 = vpop.f32.mrb[0].mxu0
  %623 = vdwg.mxu0
  %v624 = vadd.f32 %v547, %v553
  %v625 = vmul.f32 %v621, %v549
  %s626 = scalar_lea.vmem %s2, 56
  %v627 = vld [vmem:[%s626] sm:$0xff]
  %v628 = vmul.f32 %v625, %v627
  %v629 = vadd.f32 %v624, %v628
  %v631 = vlaneseq
  %v632 = vshrl.u32 %v631, 7
  %v633 = vsub.s32 0, %v632
  %v634 = vrot.slane %v30, %v633
  %v636 = vmul.f32 %v634, %v31
  %v637 = vadd.f32 %v629, %v636
  %s638 = scalar_lea.vmem %s0, 56
  %v639 = vld [vmem:[%s638] sm:$0xff]
  %v640 = vmul.f32 %v639, %v31
  %v641 = vmul.f32 %v640, %v627
  %v642 = vadd.f32 %v637, %v641
  %643 = vadd.xlane.f32.xlu0 %v642
  %v644 = vpop.xlane.xlu0 %643
  %v645 = vadd.f32 %v37, %v42
  %646 = vmax.xlane.f32.xlu0 %v645
  %v647 = vpop.xlane.xlu0 %646
  %v648 = vsub.f32 %v645, %v647
  %v649 = vmul.f32 %v648, 1.442695
  %v650 = vpow.pop %v649
  %v651 = vld [vmem:[%s5] sm:$0xff]
  %v652 = vld [vmem:[%s5 + $0x8] sm:$0xff]
  %v653 = vld [vmem:[%s5 + $0x10] sm:$0xff]
  %v654 = vld [vmem:[%s5 + $0x18] sm:$0xff]
  %v655 = vld [vmem:[%s5 + $0x20] sm:$0xff]
  %v656 = vld [vmem:[%s5 + $0x28] sm:$0xff]
  %v657 = vld [vmem:[%s5 + $0x30] sm:$0xff]
  %v658 = vld [vmem:[%s5 + $0x38] sm:$0xff]
  %v659 = vld [vmem:[%s5 + $0x40] sm:$0xff]
  %v660 = vld [vmem:[%s5 + $0x48] sm:$0xff]
  %v661 = vld [vmem:[%s5 + $0x50] sm:$0xff]
  %v662 = vld [vmem:[%s5 + $0x58] sm:$0xff]
  %v663 = vld [vmem:[%s5 + $0x60] sm:$0xff]
  %v664 = vld [vmem:[%s5 + $0x68] sm:$0xff]
  %v665 = vld [vmem:[%s5 + $0x70] sm:$0xff]
  %v666 = vld [vmem:[%s5 + $0x78] sm:$0xff]
  %667 = vmatprep.subr.mxu0 0.0
  %668 = vmatpush1.msra.mxu0 %v651
  %669 = vmatprep.subr.mxu0 0.0
  %670 = vmatpush1.msra.mxu0 %v652
  %671 = vmatprep.subr.mxu0 0.0
  %672 = vmatpush1.msra.mxu0 %v653
  %673 = vmatprep.subr.mxu0 0.0
  %674 = vmatpush1.msra.mxu0 %v654
  %675 = vmatprep.subr.mxu0 0.0
  %676 = vmatpush1.msra.mxu0 %v655
  %677 = vmatprep.subr.mxu0 0.0
  %678 = vmatpush1.msra.mxu0 %v656
  %679 = vmatprep.subr.mxu0 0.0
  %680 = vmatpush1.msra.mxu0 %v657
  %681 = vmatprep.subr.mxu0 0.0
  %682 = vmatpush1.msra.mxu0 %v658
  %683 = vmatprep.subr.mxu0 0.0
  %684 = vmatpush1.msra.mxu0 %v659
  %685 = vmatprep.subr.mxu0 0.0
  %686 = vmatpush1.msra.mxu0 %v660
  %687 = vmatprep.subr.mxu0 0.0
  %688 = vmatpush1.msra.mxu0 %v661
  %689 = vmatprep.subr.mxu0 0.0
  %690 = vmatpush1.msra.mxu0 %v662
  %691 = vmatprep.subr.mxu0 0.0
  %692 = vmatpush1.msra.mxu0 %v663
  %693 = vmatprep.subr.mxu0 0.0
  %694 = vmatpush1.msra.mxu0 %v664
  %695 = vmatprep.subr.mxu0 0.0
  %696 = vmatpush1.msra.mxu0 %v665
  %697 = vmatprep.subr.mxu0 0.0
  %698 = vmatpush1.msra.mxu0 %v666
  %699 = vmatprep.subr.mxu0 0.0
  %700 = vmatpush1.msra.mxu0 0.0
  %701 = vmatprep.subr.mxu0 0.0
  %702 = vmatpush1.msra.mxu0 0.0
  %703 = vmatprep.subr.mxu0 0.0
  %704 = vmatpush1.msra.mxu0 0.0
  %705 = vmatprep.subr.mxu0 0.0
  %706 = vmatpush1.msra.mxu0 0.0
  %707 = vmatprep.subr.mxu0 0.0
  %708 = vmatpush1.msra.mxu0 0.0
  %709 = vmatprep.subr.mxu0 0.0
  %710 = vmatpush1.msra.mxu0 0.0
  %711 = vmatprep.subr.mxu0 0.0
  %712 = vmatpush1.msra.mxu0 0.0
  %713 = vmatprep.subr.mxu0 0.0
  %714 = vmatpush1.msra.mxu0 0.0
  %715 = vmatprep.subr.mxu0 0.0
  %716 = vmatpush1.msra.mxu0 0.0
  %717 = vmatprep.subr.mxu0 0.0
  %718 = vmatpush1.msra.mxu0 0.0
  %719 = vmatprep.subr.mxu0 0.0
  %720 = vmatpush1.msra.mxu0 0.0
  %721 = vmatprep.subr.mxu0 0.0
  %722 = vmatpush1.msra.mxu0 0.0
  %723 = vmatprep.subr.mxu0 0.0
  %724 = vmatpush1.msra.mxu0 0.0
  %725 = vmatprep.subr.mxu0 0.0
  %726 = vmatpush1.msra.mxu0 0.0
  %727 = vmatprep.subr.mxu0 0.0
  %728 = vmatpush1.msra.mxu0 0.0
  %729 = vmatprep.subr.mxu0 0.0
  %730 = vmatpush1.msra.mxu0 0.0
  %731 = vmatprep.mubr.f32.mxu0 0.0
  %732 = vmatmul.mubr.f32.gmra.mrb[0].mxu0 %v650
  %v733 = vpop.f32.mrb[0].mxu0
  %v734 = vadd.f32 1e-30, %v733
  %v735 = vpop.f32.mrb[0].mxu0
  %736 = vdwg.mxu0
  %v737 = vlog2.pop %v734
  %v738 = vmul.f32 %v737, 0.6931472
  %v739 = vadd.f32 %v738, %v647
  %v740 = vadd.f32 %v739, %v141
  %vm741 = vcmp.gt.f32.partialorder %v135, 0.5
  %v742 = vsel %vm741, %v740, %v645
  %743 = vmax.xlane.f32.xlu0 %v742
  %v744 = vpop.xlane.xlu0 %743
  %v745 = vsub.f32 %v742, %v744
  %v746 = vmul.f32 %v745, 1.442695
  %v747 = vpow.pop %v746
  %748 = vmatprep.subr.mxu0 0.0
  %749 = vmatpush1.msra.mxu0 %v651
  %750 = vmatprep.subr.mxu0 0.0
  %751 = vmatpush1.msra.mxu0 %v652
  %752 = vmatprep.subr.mxu0 0.0
  %753 = vmatpush1.msra.mxu0 %v653
  %754 = vmatprep.subr.mxu0 0.0
  %755 = vmatpush1.msra.mxu0 %v654
  %756 = vmatprep.subr.mxu0 0.0
  %757 = vmatpush1.msra.mxu0 %v655
  %758 = vmatprep.subr.mxu0 0.0
  %759 = vmatpush1.msra.mxu0 %v656
  %760 = vmatprep.subr.mxu0 0.0
  %761 = vmatpush1.msra.mxu0 %v657
  %762 = vmatprep.subr.mxu0 0.0
  %763 = vmatpush1.msra.mxu0 %v658
  %764 = vmatprep.subr.mxu0 0.0
  %765 = vmatpush1.msra.mxu0 %v659
  %766 = vmatprep.subr.mxu0 0.0
  %767 = vmatpush1.msra.mxu0 %v660
  %768 = vmatprep.subr.mxu0 0.0
  %769 = vmatpush1.msra.mxu0 %v661
  %770 = vmatprep.subr.mxu0 0.0
  %771 = vmatpush1.msra.mxu0 %v662
  %772 = vmatprep.subr.mxu0 0.0
  %773 = vmatpush1.msra.mxu0 %v663
  %774 = vmatprep.subr.mxu0 0.0
  %775 = vmatpush1.msra.mxu0 %v664
  %776 = vmatprep.subr.mxu0 0.0
  %777 = vmatpush1.msra.mxu0 %v665
  %778 = vmatprep.subr.mxu0 0.0
  %779 = vmatpush1.msra.mxu0 %v666
  %780 = vmatprep.subr.mxu0 0.0
  %781 = vmatpush1.msra.mxu0 0.0
  %782 = vmatprep.subr.mxu0 0.0
  %783 = vmatpush1.msra.mxu0 0.0
  %784 = vmatprep.subr.mxu0 0.0
  %785 = vmatpush1.msra.mxu0 0.0
  %786 = vmatprep.subr.mxu0 0.0
  %787 = vmatpush1.msra.mxu0 0.0
  %788 = vmatprep.subr.mxu0 0.0
  %789 = vmatpush1.msra.mxu0 0.0
  %790 = vmatprep.subr.mxu0 0.0
  %791 = vmatpush1.msra.mxu0 0.0
  %792 = vmatprep.subr.mxu0 0.0
  %793 = vmatpush1.msra.mxu0 0.0
  %794 = vmatprep.subr.mxu0 0.0
  %795 = vmatpush1.msra.mxu0 0.0
  %796 = vmatprep.subr.mxu0 0.0
  %797 = vmatpush1.msra.mxu0 0.0
  %798 = vmatprep.subr.mxu0 0.0
  %799 = vmatpush1.msra.mxu0 0.0
  %800 = vmatprep.subr.mxu0 0.0
  %801 = vmatpush1.msra.mxu0 0.0
  %802 = vmatprep.subr.mxu0 0.0
  %803 = vmatpush1.msra.mxu0 0.0
  %804 = vmatprep.subr.mxu0 0.0
  %805 = vmatpush1.msra.mxu0 0.0
  %806 = vmatprep.subr.mxu0 0.0
  %807 = vmatpush1.msra.mxu0 0.0
  %808 = vmatprep.subr.mxu0 0.0
  %809 = vmatpush1.msra.mxu0 0.0
  %810 = vmatprep.subr.mxu0 0.0
  %811 = vmatpush1.msra.mxu0 0.0
  %812 = vmatprep.mubr.f32.mxu0 0.0
  %813 = vmatmul.mubr.f32.gmra.mrb[0].mxu0 %v747
  %v814 = vpop.f32.mrb[0].mxu0
  %v815 = vadd.f32 1e-30, %v814
  %v816 = vpop.f32.mrb[0].mxu0
  %817 = vdwg.mxu0
  %v818 = vlog2.pop %v815
  %v819 = vmul.f32 %v818, 0.6931472
  %v820 = vadd.f32 %v819, %v744
  %v821 = vadd.f32 %v820, %v223
  %vm822 = vcmp.gt.f32.partialorder %v217, 0.5
  %v823 = vsel %vm822, %v821, %v742
  %824 = vmax.xlane.f32.xlu0 %v823
  %v825 = vpop.xlane.xlu0 %824
  %v826 = vsub.f32 %v823, %v825
  %v827 = vmul.f32 %v826, 1.442695
  %v828 = vpow.pop %v827
  %829 = vmatprep.subr.mxu0 0.0
  %830 = vmatpush1.msra.mxu0 %v651
  %831 = vmatprep.subr.mxu0 0.0
  %832 = vmatpush1.msra.mxu0 %v652
  %833 = vmatprep.subr.mxu0 0.0
  %834 = vmatpush1.msra.mxu0 %v653
  %835 = vmatprep.subr.mxu0 0.0
  %836 = vmatpush1.msra.mxu0 %v654
  %837 = vmatprep.subr.mxu0 0.0
  %838 = vmatpush1.msra.mxu0 %v655
  %839 = vmatprep.subr.mxu0 0.0
  %840 = vmatpush1.msra.mxu0 %v656
  %841 = vmatprep.subr.mxu0 0.0
  %842 = vmatpush1.msra.mxu0 %v657
  %843 = vmatprep.subr.mxu0 0.0
  %844 = vmatpush1.msra.mxu0 %v658
  %845 = vmatprep.subr.mxu0 0.0
  %846 = vmatpush1.msra.mxu0 %v659
  %847 = vmatprep.subr.mxu0 0.0
  %848 = vmatpush1.msra.mxu0 %v660
  %849 = vmatprep.subr.mxu0 0.0
  %850 = vmatpush1.msra.mxu0 %v661
  %851 = vmatprep.subr.mxu0 0.0
  %852 = vmatpush1.msra.mxu0 %v662
  %853 = vmatprep.subr.mxu0 0.0
  %854 = vmatpush1.msra.mxu0 %v663
  %855 = vmatprep.subr.mxu0 0.0
  %856 = vmatpush1.msra.mxu0 %v664
  %857 = vmatprep.subr.mxu0 0.0
  %858 = vmatpush1.msra.mxu0 %v665
  %859 = vmatprep.subr.mxu0 0.0
  %860 = vmatpush1.msra.mxu0 %v666
  %861 = vmatprep.subr.mxu0 0.0
  %862 = vmatpush1.msra.mxu0 0.0
  %863 = vmatprep.subr.mxu0 0.0
  %864 = vmatpush1.msra.mxu0 0.0
  %865 = vmatprep.subr.mxu0 0.0
  %866 = vmatpush1.msra.mxu0 0.0
  %867 = vmatprep.subr.mxu0 0.0
  %868 = vmatpush1.msra.mxu0 0.0
  %869 = vmatprep.subr.mxu0 0.0
  %870 = vmatpush1.msra.mxu0 0.0
  %871 = vmatprep.subr.mxu0 0.0
  %872 = vmatpush1.msra.mxu0 0.0
  %873 = vmatprep.subr.mxu0 0.0
  %874 = vmatpush1.msra.mxu0 0.0
  %875 = vmatprep.subr.mxu0 0.0
  %876 = vmatpush1.msra.mxu0 0.0
  %877 = vmatprep.subr.mxu0 0.0
  %878 = vmatpush1.msra.mxu0 0.0
  %879 = vmatprep.subr.mxu0 0.0
  %880 = vmatpush1.msra.mxu0 0.0
  %881 = vmatprep.subr.mxu0 0.0
  %882 = vmatpush1.msra.mxu0 0.0
  %883 = vmatprep.subr.mxu0 0.0
  %884 = vmatpush1.msra.mxu0 0.0
  %885 = vmatprep.subr.mxu0 0.0
  %886 = vmatpush1.msra.mxu0 0.0
  %887 = vmatprep.subr.mxu0 0.0
  %888 = vmatpush1.msra.mxu0 0.0
  %889 = vmatprep.subr.mxu0 0.0
  %890 = vmatpush1.msra.mxu0 0.0
  %891 = vmatprep.subr.mxu0 0.0
  %892 = vmatpush1.msra.mxu0 0.0
  %893 = vmatprep.mubr.f32.mxu0 0.0
  %894 = vmatmul.mubr.f32.gmra.mrb[0].mxu0 %v828
  %v895 = vpop.f32.mrb[0].mxu0
  %v896 = vadd.f32 1e-30, %v895
  %v897 = vpop.f32.mrb[0].mxu0
  %898 = vdwg.mxu0
  %v899 = vlog2.pop %v896
  %v900 = vmul.f32 %v899, 0.6931472
  %v901 = vadd.f32 %v900, %v825
  %v902 = vadd.f32 %v901, %v305
  %vm903 = vcmp.gt.f32.partialorder %v299, 0.5
  %v904 = vsel %vm903, %v902, %v823
  %905 = vmax.xlane.f32.xlu0 %v904
  %v906 = vpop.xlane.xlu0 %905
  %v907 = vsub.f32 %v904, %v906
  %v908 = vmul.f32 %v907, 1.442695
  %v909 = vpow.pop %v908
  %910 = vmatprep.subr.mxu0 0.0
  %911 = vmatpush1.msra.mxu0 %v651
  %912 = vmatprep.subr.mxu0 0.0
  %913 = vmatpush1.msra.mxu0 %v652
  %914 = vmatprep.subr.mxu0 0.0
  %915 = vmatpush1.msra.mxu0 %v653
  %916 = vmatprep.subr.mxu0 0.0
  %917 = vmatpush1.msra.mxu0 %v654
  %918 = vmatprep.subr.mxu0 0.0
  %919 = vmatpush1.msra.mxu0 %v655
  %920 = vmatprep.subr.mxu0 0.0
  %921 = vmatpush1.msra.mxu0 %v656
  %922 = vmatprep.subr.mxu0 0.0
  %923 = vmatpush1.msra.mxu0 %v657
  %924 = vmatprep.subr.mxu0 0.0
  %925 = vmatpush1.msra.mxu0 %v658
  %926 = vmatprep.subr.mxu0 0.0
  %927 = vmatpush1.msra.mxu0 %v659
  %928 = vmatprep.subr.mxu0 0.0
  %929 = vmatpush1.msra.mxu0 %v660
  %930 = vmatprep.subr.mxu0 0.0
  %931 = vmatpush1.msra.mxu0 %v661
  %932 = vmatprep.subr.mxu0 0.0
  %933 = vmatpush1.msra.mxu0 %v662
  %934 = vmatprep.subr.mxu0 0.0
  %935 = vmatpush1.msra.mxu0 %v663
  %936 = vmatprep.subr.mxu0 0.0
  %937 = vmatpush1.msra.mxu0 %v664
  %938 = vmatprep.subr.mxu0 0.0
  %939 = vmatpush1.msra.mxu0 %v665
  %940 = vmatprep.subr.mxu0 0.0
  %941 = vmatpush1.msra.mxu0 %v666
  %942 = vmatprep.subr.mxu0 0.0
  %943 = vmatpush1.msra.mxu0 0.0
  %944 = vmatprep.subr.mxu0 0.0
  %945 = vmatpush1.msra.mxu0 0.0
  %946 = vmatprep.subr.mxu0 0.0
  %947 = vmatpush1.msra.mxu0 0.0
  %948 = vmatprep.subr.mxu0 0.0
  %949 = vmatpush1.msra.mxu0 0.0
  %950 = vmatprep.subr.mxu0 0.0
  %951 = vmatpush1.msra.mxu0 0.0
  %952 = vmatprep.subr.mxu0 0.0
  %953 = vmatpush1.msra.mxu0 0.0
  %954 = vmatprep.subr.mxu0 0.0
  %955 = vmatpush1.msra.mxu0 0.0
  %956 = vmatprep.subr.mxu0 0.0
  %957 = vmatpush1.msra.mxu0 0.0
  %958 = vmatprep.subr.mxu0 0.0
  %959 = vmatpush1.msra.mxu0 0.0
  %960 = vmatprep.subr.mxu0 0.0
  %961 = vmatpush1.msra.mxu0 0.0
  %962 = vmatprep.subr.mxu0 0.0
  %963 = vmatpush1.msra.mxu0 0.0
  %964 = vmatprep.subr.mxu0 0.0
  %965 = vmatpush1.msra.mxu0 0.0
  %966 = vmatprep.subr.mxu0 0.0
  %967 = vmatpush1.msra.mxu0 0.0
  %968 = vmatprep.subr.mxu0 0.0
  %969 = vmatpush1.msra.mxu0 0.0
  %970 = vmatprep.subr.mxu0 0.0
  %971 = vmatpush1.msra.mxu0 0.0
  %972 = vmatprep.subr.mxu0 0.0
  %973 = vmatpush1.msra.mxu0 0.0
  %974 = vmatprep.mubr.f32.mxu0 0.0
  %975 = vmatmul.mubr.f32.gmra.mrb[0].mxu0 %v909
  %v976 = vpop.f32.mrb[0].mxu0
  %v977 = vadd.f32 1e-30, %v976
  %v978 = vpop.f32.mrb[0].mxu0
  %979 = vdwg.mxu0
  %v980 = vlog2.pop %v977
  %v981 = vmul.f32 %v980, 0.6931472
  %v982 = vadd.f32 %v981, %v906
  %v983 = vadd.f32 %v982, %v387
  %vm984 = vcmp.gt.f32.partialorder %v381, 0.5
  %v985 = vsel %vm984, %v983, %v904
  %986 = vmax.xlane.f32.xlu0 %v985
  %v987 = vpop.xlane.xlu0 %986
  %v988 = vsub.f32 %v985, %v987
  %v989 = vmul.f32 %v988, 1.442695
  %v990 = vpow.pop %v989
  %991 = vmatprep.subr.mxu0 0.0
  %992 = vmatpush1.msra.mxu0 %v651
  %993 = vmatprep.subr.mxu0 0.0
  %994 = vmatpush1.msra.mxu0 %v652
  %995 = vmatprep.subr.mxu0 0.0
  %996 = vmatpush1.msra.mxu0 %v653
  %997 = vmatprep.subr.mxu0 0.0
  %998 = vmatpush1.msra.mxu0 %v654
  %999 = vmatprep.subr.mxu0 0.0
  %1000 = vmatpush1.msra.mxu0 %v655
  %1001 = vmatprep.subr.mxu0 0.0
  %1002 = vmatpush1.msra.mxu0 %v656
  %1003 = vmatprep.subr.mxu0 0.0
  %1004 = vmatpush1.msra.mxu0 %v657
  %1005 = vmatprep.subr.mxu0 0.0
  %1006 = vmatpush1.msra.mxu0 %v658
  %1007 = vmatprep.subr.mxu0 0.0
  %1008 = vmatpush1.msra.mxu0 %v659
  %1009 = vmatprep.subr.mxu0 0.0
  %1010 = vmatpush1.msra.mxu0 %v660
  %1011 = vmatprep.subr.mxu0 0.0
  %1012 = vmatpush1.msra.mxu0 %v661
  %1013 = vmatprep.subr.mxu0 0.0
  %1014 = vmatpush1.msra.mxu0 %v662
  %1015 = vmatprep.subr.mxu0 0.0
  %1016 = vmatpush1.msra.mxu0 %v663
  %1017 = vmatprep.subr.mxu0 0.0
  %1018 = vmatpush1.msra.mxu0 %v664
  %1019 = vmatprep.subr.mxu0 0.0
  %1020 = vmatpush1.msra.mxu0 %v665
  %1021 = vmatprep.subr.mxu0 0.0
  %1022 = vmatpush1.msra.mxu0 %v666
  %1023 = vmatprep.subr.mxu0 0.0
  %1024 = vmatpush1.msra.mxu0 0.0
  %1025 = vmatprep.subr.mxu0 0.0
  %1026 = vmatpush1.msra.mxu0 0.0
  %1027 = vmatprep.subr.mxu0 0.0
  %1028 = vmatpush1.msra.mxu0 0.0
  %1029 = vmatprep.subr.mxu0 0.0
  %1030 = vmatpush1.msra.mxu0 0.0
  %1031 = vmatprep.subr.mxu0 0.0
  %1032 = vmatpush1.msra.mxu0 0.0
  %1033 = vmatprep.subr.mxu0 0.0
  %1034 = vmatpush1.msra.mxu0 0.0
  %1035 = vmatprep.subr.mxu0 0.0
  %1036 = vmatpush1.msra.mxu0 0.0
  %1037 = vmatprep.subr.mxu0 0.0
  %1038 = vmatpush1.msra.mxu0 0.0
  %1039 = vmatprep.subr.mxu0 0.0
  %1040 = vmatpush1.msra.mxu0 0.0
  %1041 = vmatprep.subr.mxu0 0.0
  %1042 = vmatpush1.msra.mxu0 0.0
  %1043 = vmatprep.subr.mxu0 0.0
  %1044 = vmatpush1.msra.mxu0 0.0
  %1045 = vmatprep.subr.mxu0 0.0
  %1046 = vmatpush1.msra.mxu0 0.0
  %1047 = vmatprep.subr.mxu0 0.0
  %1048 = vmatpush1.msra.mxu0 0.0
  %1049 = vmatprep.subr.mxu0 0.0
  %1050 = vmatpush1.msra.mxu0 0.0
  %1051 = vmatprep.subr.mxu0 0.0
  %1052 = vmatpush1.msra.mxu0 0.0
  %1053 = vmatprep.subr.mxu0 0.0
  %1054 = vmatpush1.msra.mxu0 0.0
  %1055 = vmatprep.mubr.f32.mxu0 0.0
  %1056 = vmatmul.mubr.f32.gmra.mrb[0].mxu0 %v990
  %v1057 = vpop.f32.mrb[0].mxu0
  %v1058 = vadd.f32 1e-30, %v1057
  %v1059 = vpop.f32.mrb[0].mxu0
  %1060 = vdwg.mxu0
  %v1061 = vlog2.pop %v1058
  %v1062 = vmul.f32 %v1061, 0.6931472
  %v1063 = vadd.f32 %v1062, %v987
  %v1064 = vadd.f32 %v1063, %v469
  %vm1065 = vcmp.gt.f32.partialorder %v463, 0.5
  %v1066 = vsel %vm1065, %v1064, %v985
  %1067 = vmax.xlane.f32.xlu0 %v1066
  %v1068 = vpop.xlane.xlu0 %1067
  %v1069 = vsub.f32 %v1066, %v1068
  %v1070 = vmul.f32 %v1069, 1.442695
  %v1071 = vpow.pop %v1070
  %1072 = vmatprep.subr.mxu0 0.0
  %1073 = vmatpush1.msra.mxu0 %v651
  %1074 = vmatprep.subr.mxu0 0.0
  %1075 = vmatpush1.msra.mxu0 %v652
  %1076 = vmatprep.subr.mxu0 0.0
  %1077 = vmatpush1.msra.mxu0 %v653
  %1078 = vmatprep.subr.mxu0 0.0
  %1079 = vmatpush1.msra.mxu0 %v654
  %1080 = vmatprep.subr.mxu0 0.0
  %1081 = vmatpush1.msra.mxu0 %v655
  %1082 = vmatprep.subr.mxu0 0.0
  %1083 = vmatpush1.msra.mxu0 %v656
  %1084 = vmatprep.subr.mxu0 0.0
  %1085 = vmatpush1.msra.mxu0 %v657
  %1086 = vmatprep.subr.mxu0 0.0
  %1087 = vmatpush1.msra.mxu0 %v658
  %1088 = vmatprep.subr.mxu0 0.0
  %1089 = vmatpush1.msra.mxu0 %v659
  %1090 = vmatprep.subr.mxu0 0.0
  %1091 = vmatpush1.msra.mxu0 %v660
  %1092 = vmatprep.subr.mxu0 0.0
  %1093 = vmatpush1.msra.mxu0 %v661
  %1094 = vmatprep.subr.mxu0 0.0
  %1095 = vmatpush1.msra.mxu0 %v662
  %1096 = vmatprep.subr.mxu0 0.0
  %1097 = vmatpush1.msra.mxu0 %v663
  %1098 = vmatprep.subr.mxu0 0.0
  %1099 = vmatpush1.msra.mxu0 %v664
  %1100 = vmatprep.subr.mxu0 0.0
  %1101 = vmatpush1.msra.mxu0 %v665
  %1102 = vmatprep.subr.mxu0 0.0
  %1103 = vmatpush1.msra.mxu0 %v666
  %1104 = vmatprep.subr.mxu0 0.0
  %1105 = vmatpush1.msra.mxu0 0.0
  %1106 = vmatprep.subr.mxu0 0.0
  %1107 = vmatpush1.msra.mxu0 0.0
  %1108 = vmatprep.subr.mxu0 0.0
  %1109 = vmatpush1.msra.mxu0 0.0
  %1110 = vmatprep.subr.mxu0 0.0
  %1111 = vmatpush1.msra.mxu0 0.0
  %1112 = vmatprep.subr.mxu0 0.0
  %1113 = vmatpush1.msra.mxu0 0.0
  %1114 = vmatprep.subr.mxu0 0.0
  %1115 = vmatpush1.msra.mxu0 0.0
  %1116 = vmatprep.subr.mxu0 0.0
  %1117 = vmatpush1.msra.mxu0 0.0
  %1118 = vmatprep.subr.mxu0 0.0
  %1119 = vmatpush1.msra.mxu0 0.0
  %1120 = vmatprep.subr.mxu0 0.0
  %1121 = vmatpush1.msra.mxu0 0.0
  %1122 = vmatprep.subr.mxu0 0.0
  %1123 = vmatpush1.msra.mxu0 0.0
  %1124 = vmatprep.subr.mxu0 0.0
  %1125 = vmatpush1.msra.mxu0 0.0
  %1126 = vmatprep.subr.mxu0 0.0
  %1127 = vmatpush1.msra.mxu0 0.0
  %1128 = vmatprep.subr.mxu0 0.0
  %1129 = vmatpush1.msra.mxu0 0.0
  %1130 = vmatprep.subr.mxu0 0.0
  %1131 = vmatpush1.msra.mxu0 0.0
  %1132 = vmatprep.subr.mxu0 0.0
  %1133 = vmatpush1.msra.mxu0 0.0
  %1134 = vmatprep.subr.mxu0 0.0
  %1135 = vmatpush1.msra.mxu0 0.0
  %1136 = vmatprep.mubr.f32.mxu0 0.0
  %1137 = vmatmul.mubr.f32.gmra.mrb[0].mxu0 %v1071
  %v1138 = vpop.f32.mrb[0].mxu0
  %v1139 = vadd.f32 1e-30, %v1138
  %v1140 = vpop.f32.mrb[0].mxu0
  %1141 = vdwg.mxu0
  %v1142 = vlog2.pop %v1139
  %v1143 = vmul.f32 %v1142, 0.6931472
  %v1144 = vadd.f32 %v1143, %v1068
  %v1145 = vadd.f32 %v1144, %v551
  %vm1146 = vcmp.gt.f32.partialorder %v545, 0.5
  %v1147 = vsel %vm1146, %v1145, %v1066
  %1148 = vmax.xlane.f32.xlu0 %v1147
  %v1149 = vpop.xlane.xlu0 %1148
  %v1150 = vsub.f32 %v1147, %v1149
  %v1151 = vmul.f32 %v1150, 1.442695
  %v1152 = vpow.pop %v1151
  %1153 = vmatprep.subr.mxu0 0.0
  %1154 = vmatpush1.msra.mxu0 %v651
  %1155 = vmatprep.subr.mxu0 0.0
  %1156 = vmatpush1.msra.mxu0 %v652
  %1157 = vmatprep.subr.mxu0 0.0
  %1158 = vmatpush1.msra.mxu0 %v653
  %1159 = vmatprep.subr.mxu0 0.0
  %1160 = vmatpush1.msra.mxu0 %v654
  %1161 = vmatprep.subr.mxu0 0.0
  %1162 = vmatpush1.msra.mxu0 %v655
  %1163 = vmatprep.subr.mxu0 0.0
  %1164 = vmatpush1.msra.mxu0 %v656
  %1165 = vmatprep.subr.mxu0 0.0
  %1166 = vmatpush1.msra.mxu0 %v657
  %1167 = vmatprep.subr.mxu0 0.0
  %1168 = vmatpush1.msra.mxu0 %v658
  %1169 = vmatprep.subr.mxu0 0.0
  %1170 = vmatpush1.msra.mxu0 %v659
  %1171 = vmatprep.subr.mxu0 0.0
  %1172 = vmatpush1.msra.mxu0 %v660
  %1173 = vmatprep.subr.mxu0 0.0
  %1174 = vmatpush1.msra.mxu0 %v661
  %1175 = vmatprep.subr.mxu0 0.0
  %1176 = vmatpush1.msra.mxu0 %v662
  %1177 = vmatprep.subr.mxu0 0.0
  %1178 = vmatpush1.msra.mxu0 %v663
  %1179 = vmatprep.subr.mxu0 0.0
  %1180 = vmatpush1.msra.mxu0 %v664
  %1181 = vmatprep.subr.mxu0 0.0
  %1182 = vmatpush1.msra.mxu0 %v665
  %1183 = vmatprep.subr.mxu0 0.0
  %1184 = vmatpush1.msra.mxu0 %v666
  %1185 = vmatprep.subr.mxu0 0.0
  %1186 = vmatpush1.msra.mxu0 0.0
  %1187 = vmatprep.subr.mxu0 0.0
  %1188 = vmatpush1.msra.mxu0 0.0
  %1189 = vmatprep.subr.mxu0 0.0
  %1190 = vmatpush1.msra.mxu0 0.0
  %1191 = vmatprep.subr.mxu0 0.0
  %1192 = vmatpush1.msra.mxu0 0.0
  %1193 = vmatprep.subr.mxu0 0.0
  %1194 = vmatpush1.msra.mxu0 0.0
  %1195 = vmatprep.subr.mxu0 0.0
  %1196 = vmatpush1.msra.mxu0 0.0
  %1197 = vmatprep.subr.mxu0 0.0
  %1198 = vmatpush1.msra.mxu0 0.0
  %1199 = vmatprep.subr.mxu0 0.0
  %1200 = vmatpush1.msra.mxu0 0.0
  %1201 = vmatprep.subr.mxu0 0.0
  %1202 = vmatpush1.msra.mxu0 0.0
  %1203 = vmatprep.subr.mxu0 0.0
  %1204 = vmatpush1.msra.mxu0 0.0
  %1205 = vmatprep.subr.mxu0 0.0
  %1206 = vmatpush1.msra.mxu0 0.0
  %1207 = vmatprep.subr.mxu0 0.0
  %1208 = vmatpush1.msra.mxu0 0.0
  %1209 = vmatprep.subr.mxu0 0.0
  %1210 = vmatpush1.msra.mxu0 0.0
  %1211 = vmatprep.subr.mxu0 0.0
  %1212 = vmatpush1.msra.mxu0 0.0
  %1213 = vmatprep.subr.mxu0 0.0
  %1214 = vmatpush1.msra.mxu0 0.0
  %1215 = vmatprep.subr.mxu0 0.0
  %1216 = vmatpush1.msra.mxu0 0.0
  %1217 = vmatprep.mubr.f32.mxu0 0.0
  %1218 = vmatmul.mubr.f32.gmra.mrb[0].mxu0 %v1152
  %v1219 = vpop.f32.mrb[0].mxu0
  %v1220 = vadd.f32 1e-30, %v1219
  %v1221 = vpop.f32.mrb[0].mxu0
  %1222 = vdwg.mxu0
  %v1223 = vlog2.pop %v1220
  %v1224 = vmul.f32 %v1223, 0.6931472
  %v1225 = vadd.f32 %v1224, %v1149
  %v1226 = vadd.f32 %v1225, %v639
  %vm1227 = vcmp.gt.f32.partialorder %v627, 0.5
  %v1228 = vsel %vm1227, %v1226, %v1147
  %v1229 = vadd.f32 %v1228, %v634
  %1230 = vmax.xlane.f32.xlu0 %v1229
  %v1231 = vpop.xlane.xlu0 %1230
  %v1232 = vsub.f32 %v1229, %v1231
  %v1233 = vmul.f32 %v1232, 1.442695
  %v1234 = vpow.pop %v1233
  %1235 = vadd.xlane.f32.xlu0 %v1234
  %v1236 = vpop.xlane.xlu0 %1235
  %v1237 = vlog2.pop %v1236
  %v1238 = vmul.f32 %v1237, 0.6931472
  %v1239 = vadd.f32 %v1238, %v1231
  %v1240 = vsub.f32 %v644, %v1239
  %1241 = vst [vmem:[%s8] sm:$0xff] %v1240
  // Predicated region
  $region34: #{bert_lstm_crf_forward.3} parent=0 // pred_check
    _
  $region35: #{bert_lstm_crf_forward.3} parent=0 // pred_check_branch
    %1243 = sbr.rel (0) target = $region37
  $region36: #{bert_lstm_crf_forward.3} parent=0 // pred_region
    _
  $region37: #{bert_lstm_crf_forward.3} parent=0 // pred_fallthru
    _
  // Predicated region
  $region38: #{bert_lstm_crf_forward.3} parent=0 // pred_check
    _
  $region39: #{bert_lstm_crf_forward.3} parent=0 // pred_check_branch
    %1245 = sbr.rel (0) target = $region41
  $region40: #{bert_lstm_crf_forward.3} parent=0 // pred_region
    _
  $region41: #{bert_lstm_crf_forward.3} parent=0 // pred_fallthru
    _

// kernel: bert_lstm_crf_forward.2
$region0: #{bert_lstm_crf_forward.2}
  #allocation0 [shape = 'u32[]', space=smem, size = 0x4, offset = 0x4, fixed_abs, tag = 'smem constant byte address 0x4 - core index']
  #allocation1 [shape = 'u32[144,128]{1,0:T(1,128)}', space=vmem, size = 0x12000, scoped, tag = 'internal scratch']
  #allocation2 [shape = 'f32[64,256]{1,0:T(8,128)}', space=vmem, size = 0x10000, scoped, tag = 'scratch operand']
  #allocation3 [shape = 'f32[64,64]{1,0:T(8,128)}', space=vmem, size = 0x8000, scoped, tag = 'scratch operand']
  %s0 = inlined_call_operand.vmem [shape: f32[64,32], index: 0, kind: input, shape index: {}]
  %s1 = inlined_call_operand.vmem [shape: f32[32,256], index: 1, kind: input, shape index: {}]
  %s2 = inlined_call_operand.vmem [shape: f32[64,256], index: 2, kind: input, shape index: {}]
  %s3 = inlined_call_operand.vmem [shape: f32[1,256], index: 3, kind: input, shape index: {}]
  %s4 = inlined_call_operand.vmem [shape: f32[8,64], index: 4, kind: input, shape index: {}]
  %s5 = inlined_call_operand.vmem [shape: f32[8,64], index: 5, kind: input, shape index: {}]
  %s6 = inlined_call_operand.vmem [shape: f32[64,128], index: 6, kind: input, shape index: {}]
  %s7 = inlined_call_operand.vmem [shape: f32[1,128], index: 7, kind: input, shape index: {}]
  %s8 = inlined_call_operand.vmem [shape: f32[64,128], index: 8, kind: output, shape index: {}]
  %s9 = sld [smem:[#allocation0]]
  $region42: #{bert_lstm_crf_forward.2} parent=0
    _
  %s11 = ssub.s32 1, %s9
  %s12 = scalar_select 0, %s11, %s9
  // Predicated region
  $region2: #{bert_lstm_crf_forward.2} parent=0 // pred_check
    _
  $region3: #{bert_lstm_crf_forward.2} parent=0 // pred_check_branch
    %14 = sbr.rel (0) target = $region5
  $region4: #{bert_lstm_crf_forward.2} parent=0 // pred_region
    _
  $region5: #{bert_lstm_crf_forward.2} parent=0 // pred_fallthru
    _
  // Predicated region
  $region6: #{bert_lstm_crf_forward.2} parent=0 // pred_check
    _
  $region7: #{bert_lstm_crf_forward.2} parent=0 // pred_check_branch
    %16 = sbr.rel (0) target = $region9
  $region8: #{bert_lstm_crf_forward.2} parent=0 // pred_region
    _
  $region9: #{bert_lstm_crf_forward.2} parent=0 // pred_fallthru
    _
  // Predicated region
  $region10: #{bert_lstm_crf_forward.2} parent=0 // pred_check
    _
  $region11: #{bert_lstm_crf_forward.2} parent=0 // pred_check_branch
    %18 = sbr.rel (0) target = $region13
  $region12: #{bert_lstm_crf_forward.2} parent=0 // pred_region
    _
  $region13: #{bert_lstm_crf_forward.2} parent=0 // pred_fallthru
    _
  // Predicated region
  $region14: #{bert_lstm_crf_forward.2} parent=0 // pred_check
    _
  $region15: #{bert_lstm_crf_forward.2} parent=0 // pred_check_branch
    %20 = sbr.rel (0) target = $region17
  $region16: #{bert_lstm_crf_forward.2} parent=0 // pred_region
    _
  $region17: #{bert_lstm_crf_forward.2} parent=0 // pred_fallthru
    _
  // Predicated region
  $region18: #{bert_lstm_crf_forward.2} parent=0 // pred_check
    _
  $region19: #{bert_lstm_crf_forward.2} parent=0 // pred_check_branch
    %22 = sbr.rel (0) target = $region21
  $region20: #{bert_lstm_crf_forward.2} parent=0 // pred_region
    _
  $region21: #{bert_lstm_crf_forward.2} parent=0 // pred_fallthru
    _
  // Predicated region
  $region22: #{bert_lstm_crf_forward.2} parent=0 // pred_check
    _
  $region23: #{bert_lstm_crf_forward.2} parent=0 // pred_check_branch
    %24 = sbr.rel (0) target = $region25
  $region24: #{bert_lstm_crf_forward.2} parent=0 // pred_region
    _
  $region25: #{bert_lstm_crf_forward.2} parent=0 // pred_fallthru
    _
  // Predicated region
  $region26: #{bert_lstm_crf_forward.2} parent=0 // pred_check
    _
  $region27: #{bert_lstm_crf_forward.2} parent=0 // pred_check_branch
    %26 = sbr.rel (0) target = $region29
  $region28: #{bert_lstm_crf_forward.2} parent=0 // pred_region
    _
  $region29: #{bert_lstm_crf_forward.2} parent=0 // pred_fallthru
    _
  // Predicated region
  $region30: #{bert_lstm_crf_forward.2} parent=0 // pred_check
    _
  $region31: #{bert_lstm_crf_forward.2} parent=0 // pred_check_branch
    %28 = sbr.rel (0) target = $region33
  $region32: #{bert_lstm_crf_forward.2} parent=0 // pred_region
    _
  $region33: #{bert_lstm_crf_forward.2} parent=0 // pred_fallthru
    _
  %v29 = vld [vmem:[%s0] sm:$0xff]
  %v30 = vld [vmem:[%s0 + $0x8] sm:$0xff]
  %v31 = vld [vmem:[%s0 + $0x10] sm:$0xff]
  %v32 = vld [vmem:[%s0 + $0x18] sm:$0xff]
  %v33 = vld [vmem:[%s0 + $0x20] sm:$0xff]
  %v34 = vld [vmem:[%s0 + $0x28] sm:$0xff]
  %v35 = vld [vmem:[%s0 + $0x30] sm:$0xff]
  %v36 = vld [vmem:[%s0 + $0x38] sm:$0xff]
  %v37 = vld [vmem:[%s1] sm:$0xff]
  %v38 = vld [vmem:[%s1 + $0x8] sm:$0xff]
  %v39 = vld [vmem:[%s1 + $0x10] sm:$0xff]
  %v40 = vld [vmem:[%s1 + $0x18] sm:$0xff]
  %v41 = vld [vmem:[%s1 + $0x20] sm:$0xff]
  %v42 = vld [vmem:[%s1 + $0x28] sm:$0xff]
  %v43 = vld [vmem:[%s1 + $0x30] sm:$0xff]
  %v44 = vld [vmem:[%s1 + $0x38] sm:$0xff]
  %vm45 = vcmask 261120
  %v47 = vsel %vm45, %v29, 0
  %v50 = vsel %vm45, %v30, 0
  %v53 = vsel %vm45, %v31, 0
  %v56 = vsel %vm45, %v32, 0
  %v59 = vsel %vm45, %v33, 0
  %v62 = vsel %vm45, %v34, 0
  %v65 = vsel %vm45, %v35, 0
  %v68 = vsel %vm45, %v36, 0
  %70 = vmatprep.subr.mxu0 %v38
  %71 = vmatpush1.msra.mxu0 %v37
  %72 = vmatprep.subr.mxu0 %v40
  %73 = vmatpush1.msra.mxu0 %v39
  %74 = vmatprep.subr.mxu0 %v42
  %75 = vmatpush1.msra.mxu0 %v41
  %76 = vmatprep.subr.mxu0 %v44
  %77 = vmatpush1.msra.mxu0 %v43
  %78 = vmatprep.subr.mxu0 0.0
  %79 = vmatpush1.msra.mxu0 0.0
  %80 = vmatprep.subr.mxu0 0.0
  %81 = vmatpush1.msra.mxu0 0.0
  %82 = vmatprep.subr.mxu0 0.0
  %83 = vmatpush1.msra.mxu0 0.0
  %84 = vmatprep.subr.mxu0 0.0
  %85 = vmatpush1.msra.mxu0 0.0
  %86 = vmatprep.subr.mxu0 0.0
  %87 = vmatpush1.msra.mxu0 0.0
  %88 = vmatprep.subr.mxu0 0.0
  %89 = vmatpush1.msra.mxu0 0.0
  %90 = vmatprep.subr.mxu0 0.0
  %91 = vmatpush1.msra.mxu0 0.0
  %92 = vmatprep.subr.mxu0 0.0
  %93 = vmatpush1.msra.mxu0 0.0
  %94 = vmatprep.subr.mxu0 0.0
  %95 = vmatpush1.msra.mxu0 0.0
  %96 = vmatprep.subr.mxu0 0.0
  %97 = vmatpush1.msra.mxu0 0.0
  %98 = vmatprep.subr.mxu0 0.0
  %99 = vmatpush1.msra.mxu0 0.0
  %100 = vmatprep.subr.mxu0 0.0
  %101 = vmatpush1.msra.mxu0 0.0
  %102 = vmatprep.subr.mxu0 0.0
  %103 = vmatpush1.msra.mxu0 0.0
  %104 = vmatprep.subr.mxu0 0.0
  %105 = vmatpush1.msra.mxu0 0.0
  %106 = vmatprep.subr.mxu0 0.0
  %107 = vmatpush1.msra.mxu0 0.0
  %108 = vmatprep.subr.mxu0 0.0
  %109 = vmatpush1.msra.mxu0 0.0
  %110 = vmatprep.subr.mxu0 0.0
  %111 = vmatpush1.msra.mxu0 0.0
  %112 = vmatprep.subr.mxu0 0.0
  %113 = vmatpush1.msra.mxu0 0.0
  %114 = vmatprep.subr.mxu0 0.0
  %115 = vmatpush1.msra.mxu0 0.0
  %116 = vmatprep.subr.mxu0 0.0
  %117 = vmatpush1.msra.mxu0 0.0
  %118 = vmatprep.subr.mxu0 0.0
  %119 = vmatpush1.msra.mxu0 0.0
  %120 = vmatprep.subr.mxu0 0.0
  %121 = vmatpush1.msra.mxu0 0.0
  %122 = vmatprep.subr.mxu0 0.0
  %123 = vmatpush1.msra.mxu0 0.0
  %124 = vmatprep.subr.mxu0 0.0
  %125 = vmatpush1.msra.mxu0 0.0
  %126 = vmatprep.subr.mxu0 0.0
  %127 = vmatpush1.msra.mxu0 0.0
  %128 = vmatprep.subr.mxu0 0.0
  %129 = vmatpush1.msra.mxu0 0.0
  %130 = vmatprep.subr.mxu0 0.0
  %131 = vmatpush1.msra.mxu0 0.0
  %132 = vmatprep.subr.mxu0 0.0
  %133 = vmatpush1.msra.mxu0 0.0
  %134 = vmatprep.mubr.f32.mxu0 0.0
  %135 = vmatmul.mubr.f32.gmra.mrb[0].mxu0 %v47
  %v136 = vpop.f32.mrb[0].mxu0
  %v137 = vadd.f32 0.0, %v136
  %v138 = vpop.f32.mrb[0].mxu0
  %v139 = vadd.f32 0.0, %v138
  %140 = vmatprep.mubr.f32.mxu0 0.0
  %141 = vmatmul.mubr.f32.gmra.mrb[0].mxu0 %v50
  %v142 = vpop.f32.mrb[0].mxu0
  %v143 = vadd.f32 0.0, %v142
  %v144 = vpop.f32.mrb[0].mxu0
  %v145 = vadd.f32 0.0, %v144
  %146 = vmatprep.mubr.f32.mxu0 0.0
  %147 = vmatmul.mubr.f32.gmra.mrb[0].mxu0 %v53
  %v148 = vpop.f32.mrb[0].mxu0
  %v149 = vadd.f32 0.0, %v148
  %v150 = vpop.f32.mrb[0].mxu0
  %v151 = vadd.f32 0.0, %v150
  %152 = vmatprep.mubr.f32.mxu0 0.0
  %153 = vmatmul.mubr.f32.gmra.mrb[0].mxu0 %v56
  %v154 = vpop.f32.mrb[0].mxu0
  %v155 = vadd.f32 0.0, %v154
  %v156 = vpop.f32.mrb[0].mxu0
  %v157 = vadd.f32 0.0, %v156
  %158 = vmatprep.mubr.f32.mxu0 0.0
  %159 = vmatmul.mubr.f32.gmra.mrb[0].mxu0 %v59
  %v160 = vpop.f32.mrb[0].mxu0
  %v161 = vadd.f32 0.0, %v160
  %v162 = vpop.f32.mrb[0].mxu0
  %v163 = vadd.f32 0.0, %v162
  %164 = vmatprep.mubr.f32.mxu0 0.0
  %165 = vmatmul.mubr.f32.gmra.mrb[0].mxu0 %v62
  %v166 = vpop.f32.mrb[0].mxu0
  %v167 = vadd.f32 0.0, %v166
  %v168 = vpop.f32.mrb[0].mxu0
  %v169 = vadd.f32 0.0, %v168
  %170 = vmatprep.mubr.f32.mxu0 0.0
  %171 = vmatmul.mubr.f32.gmra.mrb[0].mxu0 %v65
  %v172 = vpop.f32.mrb[0].mxu0
  %v173 = vadd.f32 0.0, %v172
  %v174 = vpop.f32.mrb[0].mxu0
  %v175 = vadd.f32 0.0, %v174
  %176 = vmatprep.mubr.f32.mxu0 0.0
  %177 = vmatmul.mubr.f32.gmra.mrb[0].mxu0 %v68
  %v178 = vpop.f32.mrb[0].mxu0
  %v179 = vadd.f32 0.0, %v178
  %v180 = vpop.f32.mrb[0].mxu0
  %v181 = vadd.f32 0.0, %v180
  %182 = vdwg.mxu0
  %183 = vst [vmem:[#allocation2] sm:$0xff] %v137
  %184 = vst [vmem:[#allocation2 + $0x8] sm:$0xff] %v139
  %185 = vst [vmem:[#allocation2 + $0x10] sm:$0xff] %v143
  %186 = vst [vmem:[#allocation2 + $0x18] sm:$0xff] %v145
  %187 = vst [vmem:[#allocation2 + $0x20] sm:$0xff] %v149
  %188 = vst [vmem:[#allocation2 + $0x28] sm:$0xff] %v151
  %189 = vst [vmem:[#allocation2 + $0x30] sm:$0xff] %v155
  %190 = vst [vmem:[#allocation2 + $0x38] sm:$0xff] %v157
  %191 = vst [vmem:[#allocation2 + $0x40] sm:$0xff] %v161
  %192 = vst [vmem:[#allocation2 + $0x48] sm:$0xff] %v163
  %193 = vst [vmem:[#allocation2 + $0x50] sm:$0xff] %v167
  %194 = vst [vmem:[#allocation2 + $0x58] sm:$0xff] %v169
  %195 = vst [vmem:[#allocation2 + $0x60] sm:$0xff] %v173
  %196 = vst [vmem:[#allocation2 + $0x68] sm:$0xff] %v175
  %197 = vst [vmem:[#allocation2 + $0x70] sm:$0xff] %v179
  %198 = vst [vmem:[#allocation2 + $0x78] sm:$0xff] %v181
  %v199 = vld [vmem:[%s3] sm:$0x3]
  %v200 = vlaneseq
  %v201 = vand.u32 %v200, 127
  %v202 = vadd.s32 %v201, 128
  %vm203 = vcmp.lt.s32.totalorder %v201, 0
  %v204 = vsub.s32 0, %v201
  %v205 = vsel %vm203, %v204, %v201
  %v206 = vshrl.u32 %v205, 6
  %v207 = vand.u32 %v205, 63
  %v208 = vsub.s32 0, %v207
  %v209 = vsel %vm203, %v208, %v207
  %vm210 = vcmp.lt.s32.totalorder %v202, 0
  %v211 = vsub.s32 0, %v202
  %v212 = vsel %vm210, %v211, %v202
  %v213 = vshrl.u32 %v212, 6
  %v214 = vand.u32 %v212, 63
  %v215 = vsub.s32 0, %v214
  %v216 = vsel %vm210, %v215, %v214
  %vm217 = vcmp.ne.s32.totalorder %v209, 0
  %vm218 = vcmp.ne.s32.totalorder %v216, 0
  %vm219 = vcmp.lt.s32.totalorder %v209, 0
  %vm220 = vcmp.lt.s32.totalorder %v216, 0
  %vm221 = vmand %vm219, %vm217
  %vm222 = vmand %vm220, %vm218
  %v223 = vadd.s32 %v209, 64
  %v224 = vadd.s32 %v216, 64
  %v225 = vsel %vm221, %v223, %v209
  %v226 = vsel %vm222, %v224, %v216
  %vm227 = vcmp.lt.s32.totalorder %v225, 32
  %vm228 = vcmp.lt.s32.totalorder %v226, 32
  %v229 = vld [vmem:[%s4] sm:$0xff]
  %v230 = vld [vmem:[%s5] sm:$0xff]
  %v231 = vld [vmem:[%s2] sm:$0xff]
  %v232 = vld [vmem:[%s2 + $0x8] sm:$0xff]
  %v233 = vld [vmem:[%s2 + $0x10] sm:$0xff]
  %v234 = vld [vmem:[%s2 + $0x18] sm:$0xff]
  %v235 = vld [vmem:[%s2 + $0x20] sm:$0xff]
  %v236 = vld [vmem:[%s2 + $0x28] sm:$0xff]
  %v237 = vld [vmem:[%s2 + $0x30] sm:$0xff]
  %v238 = vld [vmem:[%s2 + $0x38] sm:$0xff]
  %v239 = vld [vmem:[%s2 + $0x40] sm:$0xff]
  %v240 = vld [vmem:[%s2 + $0x48] sm:$0xff]
  %v241 = vld [vmem:[%s2 + $0x50] sm:$0xff]
  %v242 = vld [vmem:[%s2 + $0x58] sm:$0xff]
  %v243 = vld [vmem:[%s2 + $0x60] sm:$0xff]
  %v244 = vld [vmem:[%s2 + $0x68] sm:$0xff]
  %v245 = vld [vmem:[%s2 + $0x70] sm:$0xff]
  %v246 = vld [vmem:[%s2 + $0x78] sm:$0xff]
  %v247 = vld [vmem:[#allocation2] sm:$0xff]
  %v248 = vld [vmem:[#allocation2 + $0x8] sm:$0xff]
  %v249 = vld [vmem:[#allocation2 + $0x70] sm:$0xff]
  %v250 = vld [vmem:[#allocation2 + $0x78] sm:$0xff]
  %v251 = vsel %vm227, 1, 0
  %v252 = vsel %vm228, 1, 0
  %vm253 = vcmp.eq.s32.totalorder %v251, 1
  %vm254 = vcmp.eq.s32.totalorder %v252, 1
  %v255 = vsel %vm253, %v247, %v249
  %v256 = vsel %vm254, %v248, %v250
  %vm257 = vcmask 523264
  %v259 = vsel %vm257, %v229, 0
  %261 = vmatprep.subr.mxu0 %v232
  %262 = vmatpush1.msra.mxu0 %v231
  %263 = vmatprep.subr.mxu0 %v234
  %264 = vmatpush1.msra.mxu0 %v233
  %265 = vmatprep.subr.mxu0 %v236
  %266 = vmatpush1.msra.mxu0 %v235
  %267 = vmatprep.subr.mxu0 %v238
  %268 = vmatpush1.msra.mxu0 %v237
  %269 = vmatprep.subr.mxu0 %v240
  %270 = vmatpush1.msra.mxu0 %v239
  %271 = vmatprep.subr.mxu0 %v242
  %272 = vmatpush1.msra.mxu0 %v241
  %273 = vmatprep.subr.mxu0 %v244
  %274 = vmatpush1.msra.mxu0 %v243
  %275 = vmatprep.subr.mxu0 %v246
  %276 = vmatpush1.msra.mxu0 %v245
  %277 = vmatprep.subr.mxu0 0.0
  %278 = vmatpush1.msra.mxu0 0.0
  %279 = vmatprep.subr.mxu0 0.0
  %280 = vmatpush1.msra.mxu0 0.0
  %281 = vmatprep.subr.mxu0 0.0
  %282 = vmatpush1.msra.mxu0 0.0
  %283 = vmatprep.subr.mxu0 0.0
  %284 = vmatpush1.msra.mxu0 0.0
  %285 = vmatprep.subr.mxu0 0.0
  %286 = vmatpush1.msra.mxu0 0.0
  %287 = vmatprep.subr.mxu0 0.0
  %288 = vmatpush1.msra.mxu0 0.0
  %289 = vmatprep.subr.mxu0 0.0
  %290 = vmatpush1.msra.mxu0 0.0
  %291 = vmatprep.subr.mxu0 0.0
  %292 = vmatpush1.msra.mxu0 0.0
  %293 = vmatprep.subr.mxu0 0.0
  %294 = vmatpush1.msra.mxu0 0.0
  %295 = vmatprep.subr.mxu0 0.0
  %296 = vmatpush1.msra.mxu0 0.0
  %297 = vmatprep.subr.mxu0 0.0
  %298 = vmatpush1.msra.mxu0 0.0
  %299 = vmatprep.subr.mxu0 0.0
  %300 = vmatpush1.msra.mxu0 0.0
  %301 = vmatprep.subr.mxu0 0.0
  %302 = vmatpush1.msra.mxu0 0.0
  %303 = vmatprep.subr.mxu0 0.0
  %304 = vmatpush1.msra.mxu0 0.0
  %305 = vmatprep.subr.mxu0 0.0
  %306 = vmatpush1.msra.mxu0 0.0
  %307 = vmatprep.subr.mxu0 0.0
  %308 = vmatpush1.msra.mxu0 0.0
  %309 = vmatprep.subr.mxu0 0.0
  %310 = vmatpush1.msra.mxu0 0.0
  %311 = vmatprep.subr.mxu0 0.0
  %312 = vmatpush1.msra.mxu0 0.0
  %313 = vmatprep.subr.mxu0 0.0
  %314 = vmatpush1.msra.mxu0 0.0
  %315 = vmatprep.subr.mxu0 0.0
  %316 = vmatpush1.msra.mxu0 0.0
  %317 = vmatprep.subr.mxu0 0.0
  %318 = vmatpush1.msra.mxu0 0.0
  %319 = vmatprep.subr.mxu0 0.0
  %320 = vmatpush1.msra.mxu0 0.0
  %321 = vmatprep.subr.mxu0 0.0
  %322 = vmatpush1.msra.mxu0 0.0
  %323 = vmatprep.subr.mxu0 0.0
  %324 = vmatpush1.msra.mxu0 0.0
  %325 = vmatprep.mubr.f32.mxu0 0.0
  %326 = vmatmul.mubr.f32.gmra.mrb[0].mxu0 %v259
  %v327 = vpop.f32.mrb[0].mxu0
  %v328 = vadd.f32 %v255, %v327
  %v329 = vpop.f32.mrb[0].mxu0
  %v330 = vadd.f32 %v256, %v329
  %331 = vdwg.mxu0
  %v333 = vlaneseq
  %v334 = vshrl.u32 %v333, 7
  %v335 = vsub.s32 0, %v334
  %v336 = vrot.slane %v199, %v335
  %v337 = vlaneseq
  %v338 = vshrl.u32 %v337, 7
  %v339 = vsub.s32 1, %v338
  %v340 = vrot.slane %v199, %v339
  %v343 = vadd.f32 %v328, %v336
  %v344 = vadd.f32 %v330, %v340
  %v345 = vxor.u32 %v343, 2147483648
  %v346 = vxor.u32 %v344, 2147483648
  %v347 = vmul.f32 %v345, 1.442695
  %v348 = vpow.pop %v347
  %v349 = vmul.f32 %v346, 1.442695
  %v350 = vpow.pop %v349
  %v351 = vadd.f32 %v348, 1.0
  %v352 = vadd.f32 %v350, 1.0
  %v353 = vrcp.pop %v351
  %v354 = vmul.f32 1.0, %v353
  %v355 = vrcp.pop %v352
  %v356 = vmul.f32 1.0, %v355
  %v357 = vtanh.pop %v344
  %359 = vrot.lane.b32.xlu0 %v230, 64
  %v360 = vpop.permute.xlu0 %359
  %v362 = vmul.f32 %v354, %v360
  %v363 = vmul.f32 %v354, %v357
  %365 = vrot.lane.b32.xlu0 %v363, 64
  %v366 = vpop.permute.xlu0 %365
  %v368 = vadd.f32 %v362, %v366
  %v369 = vtanh.pop %v368
  %v370 = vmul.f32 %v356, %v369
  %372 = vrot.lane.b32.xlu0 %v370, 64
  %v373 = vpop.permute.xlu0 %372
  %375 = vst.msk [vmem:[#allocation3] sm:$0xff] %vm45, %v373
  %vm376 = vcmask 523520
  %377 = vst.msk [vmem:[#allocation3 + $0x38] sm:$0xff] %vm376, %v373
  %v378 = vld [vmem:[%s2] sm:$0xff]
  %v379 = vld [vmem:[%s2 + $0x8] sm:$0xff]
  %v380 = vld [vmem:[%s2 + $0x10] sm:$0xff]
  %v381 = vld [vmem:[%s2 + $0x18] sm:$0xff]
  %v382 = vld [vmem:[%s2 + $0x20] sm:$0xff]
  %v383 = vld [vmem:[%s2 + $0x28] sm:$0xff]
  %v384 = vld [vmem:[%s2 + $0x30] sm:$0xff]
  %v385 = vld [vmem:[%s2 + $0x38] sm:$0xff]
  %v386 = vld [vmem:[%s2 + $0x40] sm:$0xff]
  %v387 = vld [vmem:[%s2 + $0x48] sm:$0xff]
  %v388 = vld [vmem:[%s2 + $0x50] sm:$0xff]
  %v389 = vld [vmem:[%s2 + $0x58] sm:$0xff]
  %v390 = vld [vmem:[%s2 + $0x60] sm:$0xff]
  %v391 = vld [vmem:[%s2 + $0x68] sm:$0xff]
  %v392 = vld [vmem:[%s2 + $0x70] sm:$0xff]
  %v393 = vld [vmem:[%s2 + $0x78] sm:$0xff]
  %v394 = vld [vmem:[#allocation2 + $0x10] sm:$0xff]
  %v395 = vld [vmem:[#allocation2 + $0x18] sm:$0xff]
  %v396 = vld [vmem:[#allocation2 + $0x60] sm:$0xff]
  %v397 = vld [vmem:[#allocation2 + $0x68] sm:$0xff]
  %v398 = vsel %vm253, %v394, %v396
  %v399 = vsel %vm254, %v395, %v397
  %v400 = vsel %vm257, %v373, 0
  %402 = vmatprep.subr.mxu0 %v379
  %403 = vmatpush1.msra.mxu0 %v378
  %404 = vmatprep.subr.mxu0 %v381
  %405 = vmatpush1.msra.mxu0 %v380
  %406 = vmatprep.subr.mxu0 %v383
  %407 = vmatpush1.msra.mxu0 %v382
  %408 = vmatprep.subr.mxu0 %v385
  %409 = vmatpush1.msra.mxu0 %v384
  %410 = vmatprep.subr.mxu0 %v387
  %411 = vmatpush1.msra.mxu0 %v386
  %412 = vmatprep.subr.mxu0 %v389
  %413 = vmatpush1.msra.mxu0 %v388
  %414 = vmatprep.subr.mxu0 %v391
  %415 = vmatpush1.msra.mxu0 %v390
  %416 = vmatprep.subr.mxu0 %v393
  %417 = vmatpush1.msra.mxu0 %v392
  %418 = vmatprep.subr.mxu0 0.0
  %419 = vmatpush1.msra.mxu0 0.0
  %420 = vmatprep.subr.mxu0 0.0
  %421 = vmatpush1.msra.mxu0 0.0
  %422 = vmatprep.subr.mxu0 0.0
  %423 = vmatpush1.msra.mxu0 0.0
  %424 = vmatprep.subr.mxu0 0.0
  %425 = vmatpush1.msra.mxu0 0.0
  %426 = vmatprep.subr.mxu0 0.0
  %427 = vmatpush1.msra.mxu0 0.0
  %428 = vmatprep.subr.mxu0 0.0
  %429 = vmatpush1.msra.mxu0 0.0
  %430 = vmatprep.subr.mxu0 0.0
  %431 = vmatpush1.msra.mxu0 0.0
  %432 = vmatprep.subr.mxu0 0.0
  %433 = vmatpush1.msra.mxu0 0.0
  %434 = vmatprep.subr.mxu0 0.0
  %435 = vmatpush1.msra.mxu0 0.0
  %436 = vmatprep.subr.mxu0 0.0
  %437 = vmatpush1.msra.mxu0 0.0
  %438 = vmatprep.subr.mxu0 0.0
  %439 = vmatpush1.msra.mxu0 0.0
  %440 = vmatprep.subr.mxu0 0.0
  %441 = vmatpush1.msra.mxu0 0.0
  %442 = vmatprep.subr.mxu0 0.0
  %443 = vmatpush1.msra.mxu0 0.0
  %444 = vmatprep.subr.mxu0 0.0
  %445 = vmatpush1.msra.mxu0 0.0
  %446 = vmatprep.subr.mxu0 0.0
  %447 = vmatpush1.msra.mxu0 0.0
  %448 = vmatprep.subr.mxu0 0.0
  %449 = vmatpush1.msra.mxu0 0.0
  %450 = vmatprep.subr.mxu0 0.0
  %451 = vmatpush1.msra.mxu0 0.0
  %452 = vmatprep.subr.mxu0 0.0
  %453 = vmatpush1.msra.mxu0 0.0
  %454 = vmatprep.subr.mxu0 0.0
  %455 = vmatpush1.msra.mxu0 0.0
  %456 = vmatprep.subr.mxu0 0.0
  %457 = vmatpush1.msra.mxu0 0.0
  %458 = vmatprep.subr.mxu0 0.0
  %459 = vmatpush1.msra.mxu0 0.0
  %460 = vmatprep.subr.mxu0 0.0
  %461 = vmatpush1.msra.mxu0 0.0
  %462 = vmatprep.subr.mxu0 0.0
  %463 = vmatpush1.msra.mxu0 0.0
  %464 = vmatprep.subr.mxu0 0.0
  %465 = vmatpush1.msra.mxu0 0.0
  %466 = vmatprep.mubr.f32.mxu0 0.0
  %467 = vmatmul.mubr.f32.gmra.mrb[0].mxu0 %v400
  %v468 = vpop.f32.mrb[0].mxu0
  %v469 = vadd.f32 %v398, %v468
  %v470 = vpop.f32.mrb[0].mxu0
  %v471 = vadd.f32 %v399, %v470
  %472 = vdwg.mxu0
  %v473 = vadd.f32 %v469, %v336
  %v474 = vadd.f32 %v471, %v340
  %v475 = vxor.u32 %v473, 2147483648
  %v476 = vxor.u32 %v474, 2147483648
  %v477 = vmul.f32 %v475, 1.442695
  %v478 = vpow.pop %v477
  %v479 = vmul.f32 %v476, 1.442695
  %v480 = vpow.pop %v479
  %v481 = vadd.f32 %v478, 1.0
  %v482 = vadd.f32 %v480, 1.0
  %v483 = vrcp.pop %v481
  %v484 = vmul.f32 1.0, %v483
  %v485 = vrcp.pop %v482
  %v486 = vmul.f32 1.0, %v485
  %v487 = vtanh.pop %v474
  %v488 = vmul.f32 %v484, %v368
  %v489 = vmul.f32 %v484, %v487
  %491 = vrot.lane.b32.xlu0 %v489, 64
  %v492 = vpop.permute.xlu0 %491
  %v494 = vadd.f32 %v488, %v492
  %v495 = vtanh.pop %v494
  %v496 = vmul.f32 %v486, %v495
  %498 = vrot.lane.b32.xlu0 %v496, 64
  %v499 = vpop.permute.xlu0 %498
  %501 = vst.msk [vmem:[#allocation3 + $0x8] sm:$0xff] %vm45, %v499
  %502 = vst.msk [vmem:[#allocation3 + $0x30] sm:$0xff] %vm376, %v499
  %v503 = vld [vmem:[%s2] sm:$0xff]
  %v504 = vld [vmem:[%s2 + $0x8] sm:$0xff]
  %v505 = vld [vmem:[%s2 + $0x10] sm:$0xff]
  %v506 = vld [vmem:[%s2 + $0x18] sm:$0xff]
  %v507 = vld [vmem:[%s2 + $0x20] sm:$0xff]
  %v508 = vld [vmem:[%s2 + $0x28] sm:$0xff]
  %v509 = vld [vmem:[%s2 + $0x30] sm:$0xff]
  %v510 = vld [vmem:[%s2 + $0x38] sm:$0xff]
  %v511 = vld [vmem:[%s2 + $0x40] sm:$0xff]
  %v512 = vld [vmem:[%s2 + $0x48] sm:$0xff]
  %v513 = vld [vmem:[%s2 + $0x50] sm:$0xff]
  %v514 = vld [vmem:[%s2 + $0x58] sm:$0xff]
  %v515 = vld [vmem:[%s2 + $0x60] sm:$0xff]
  %v516 = vld [vmem:[%s2 + $0x68] sm:$0xff]
  %v517 = vld [vmem:[%s2 + $0x70] sm:$0xff]
  %v518 = vld [vmem:[%s2 + $0x78] sm:$0xff]
  %v519 = vld [vmem:[#allocation2 + $0x20] sm:$0xff]
  %v520 = vld [vmem:[#allocation2 + $0x28] sm:$0xff]
  %v521 = vld [vmem:[#allocation2 + $0x50] sm:$0xff]
  %v522 = vld [vmem:[#allocation2 + $0x58] sm:$0xff]
  %v523 = vsel %vm253, %v519, %v521
  %v524 = vsel %vm254, %v520, %v522
  %v525 = vsel %vm257, %v499, 0
  %527 = vmatprep.subr.mxu0 %v504
  %528 = vmatpush1.msra.mxu0 %v503
  %529 = vmatprep.subr.mxu0 %v506
  %530 = vmatpush1.msra.mxu0 %v505
  %531 = vmatprep.subr.mxu0 %v508
  %532 = vmatpush1.msra.mxu0 %v507
  %533 = vmatprep.subr.mxu0 %v510
  %534 = vmatpush1.msra.mxu0 %v509
  %535 = vmatprep.subr.mxu0 %v512
  %536 = vmatpush1.msra.mxu0 %v511
  %537 = vmatprep.subr.mxu0 %v514
  %538 = vmatpush1.msra.mxu0 %v513
  %539 = vmatprep.subr.mxu0 %v516
  %540 = vmatpush1.msra.mxu0 %v515
  %541 = vmatprep.subr.mxu0 %v518
  %542 = vmatpush1.msra.mxu0 %v517
  %543 = vmatprep.subr.mxu0 0.0
  %544 = vmatpush1.msra.mxu0 0.0
  %545 = vmatprep.subr.mxu0 0.0
  %546 = vmatpush1.msra.mxu0 0.0
  %547 = vmatprep.subr.mxu0 0.0
  %548 = vmatpush1.msra.mxu0 0.0
  %549 = vmatprep.subr.mxu0 0.0
  %550 = vmatpush1.msra.mxu0 0.0
  %551 = vmatprep.subr.mxu0 0.0
  %552 = vmatpush1.msra.mxu0 0.0
  %553 = vmatprep.subr.mxu0 0.0
  %554 = vmatpush1.msra.mxu0 0.0
  %555 = vmatprep.subr.mxu0 0.0
  %556 = vmatpush1.msra.mxu0 0.0
  %557 = vmatprep.subr.mxu0 0.0
  %558 = vmatpush1.msra.mxu0 0.0
  %559 = vmatprep.subr.mxu0 0.0
  %560 = vmatpush1.msra.mxu0 0.0
  %561 = vmatprep.subr.mxu0 0.0
  %562 = vmatpush1.msra.mxu0 0.0
  %563 = vmatprep.subr.mxu0 0.0
  %564 = vmatpush1.msra.mxu0 0.0
  %565 = vmatprep.subr.mxu0 0.0
  %566 = vmatpush1.msra.mxu0 0.0
  %567 = vmatprep.subr.mxu0 0.0
  %568 = vmatpush1.msra.mxu0 0.0
  %569 = vmatprep.subr.mxu0 0.0
  %570 = vmatpush1.msra.mxu0 0.0
  %571 = vmatprep.subr.mxu0 0.0
  %572 = vmatpush1.msra.mxu0 0.0
  %573 = vmatprep.subr.mxu0 0.0
  %574 = vmatpush1.msra.mxu0 0.0
  %575 = vmatprep.subr.mxu0 0.0
  %576 = vmatpush1.msra.mxu0 0.0
  %577 = vmatprep.subr.mxu0 0.0
  %578 = vmatpush1.msra.mxu0 0.0
  %579 = vmatprep.subr.mxu0 0.0
  %580 = vmatpush1.msra.mxu0 0.0
  %581 = vmatprep.subr.mxu0 0.0
  %582 = vmatpush1.msra.mxu0 0.0
  %583 = vmatprep.subr.mxu0 0.0
  %584 = vmatpush1.msra.mxu0 0.0
  %585 = vmatprep.subr.mxu0 0.0
  %586 = vmatpush1.msra.mxu0 0.0
  %587 = vmatprep.subr.mxu0 0.0
  %588 = vmatpush1.msra.mxu0 0.0
  %589 = vmatprep.subr.mxu0 0.0
  %590 = vmatpush1.msra.mxu0 0.0
  %591 = vmatprep.mubr.f32.mxu0 0.0
  %592 = vmatmul.mubr.f32.gmra.mrb[0].mxu0 %v525
  %v593 = vpop.f32.mrb[0].mxu0
  %v594 = vadd.f32 %v523, %v593
  %v595 = vpop.f32.mrb[0].mxu0
  %v596 = vadd.f32 %v524, %v595
  %597 = vdwg.mxu0
  %v598 = vadd.f32 %v594, %v336
  %v599 = vadd.f32 %v596, %v340
  %v600 = vxor.u32 %v598, 2147483648
  %v601 = vxor.u32 %v599, 2147483648
  %v602 = vmul.f32 %v600, 1.442695
  %v603 = vpow.pop %v602
  %v604 = vmul.f32 %v601, 1.442695
  %v605 = vpow.pop %v604
  %v606 = vadd.f32 %v603, 1.0
  %v607 = vadd.f32 %v605, 1.0
  %v608 = vrcp.pop %v606
  %v609 = vmul.f32 1.0, %v608
  %v610 = vrcp.pop %v607
  %v611 = vmul.f32 1.0, %v610
  %v612 = vtanh.pop %v599
  %v613 = vmul.f32 %v609, %v494
  %v614 = vmul.f32 %v609, %v612
  %616 = vrot.lane.b32.xlu0 %v614, 64
  %v617 = vpop.permute.xlu0 %616
  %v619 = vadd.f32 %v613, %v617
  %v620 = vtanh.pop %v619
  %v621 = vmul.f32 %v611, %v620
  %623 = vrot.lane.b32.xlu0 %v621, 64
  %v624 = vpop.permute.xlu0 %623
  %626 = vst.msk [vmem:[#allocation3 + $0x10] sm:$0xff] %vm45, %v624
  %627 = vst.msk [vmem:[#allocation3 + $0x28] sm:$0xff] %vm376, %v624
  %v628 = vld [vmem:[%s2] sm:$0xff]
  %v629 = vld [vmem:[%s2 + $0x8] sm:$0xff]
  %v630 = vld [vmem:[%s2 + $0x10] sm:$0xff]
  %v631 = vld [vmem:[%s2 + $0x18] sm:$0xff]
  %v632 = vld [vmem:[%s2 + $0x20] sm:$0xff]
  %v633 = vld [vmem:[%s2 + $0x28] sm:$0xff]
  %v634 = vld [vmem:[%s2 + $0x30] sm:$0xff]
  %v635 = vld [vmem:[%s2 + $0x38] sm:$0xff]
  %v636 = vld [vmem:[%s2 + $0x40] sm:$0xff]
  %v637 = vld [vmem:[%s2 + $0x48] sm:$0xff]
  %v638 = vld [vmem:[%s2 + $0x50] sm:$0xff]
  %v639 = vld [vmem:[%s2 + $0x58] sm:$0xff]
  %v640 = vld [vmem:[%s2 + $0x60] sm:$0xff]
  %v641 = vld [vmem:[%s2 + $0x68] sm:$0xff]
  %v642 = vld [vmem:[%s2 + $0x70] sm:$0xff]
  %v643 = vld [vmem:[%s2 + $0x78] sm:$0xff]
  %v644 = vld [vmem:[#allocation2 + $0x30] sm:$0xff]
  %v645 = vld [vmem:[#allocation2 + $0x38] sm:$0xff]
  %v646 = vld [vmem:[#allocation2 + $0x40] sm:$0xff]
  %v647 = vld [vmem:[#allocation2 + $0x48] sm:$0xff]
  %v648 = vsel %vm253, %v644, %v646
  %v649 = vsel %vm254, %v645, %v647
  %v650 = vsel %vm257, %v624, 0
  %652 = vmatprep.subr.mxu0 %v629
  %653 = vmatpush1.msra.mxu0 %v628
  %654 = vmatprep.subr.mxu0 %v631
  %655 = vmatpush1.msra.mxu0 %v630
  %656 = vmatprep.subr.mxu0 %v633
  %657 = vmatpush1.msra.mxu0 %v632
  %658 = vmatprep.subr.mxu0 %v635
  %659 = vmatpush1.msra.mxu0 %v634
  %660 = vmatprep.subr.mxu0 %v637
  %661 = vmatpush1.msra.mxu0 %v636
  %662 = vmatprep.subr.mxu0 %v639
  %663 = vmatpush1.msra.mxu0 %v638
  %664 = vmatprep.subr.mxu0 %v641
  %665 = vmatpush1.msra.mxu0 %v640
  %666 = vmatprep.subr.mxu0 %v643
  %667 = vmatpush1.msra.mxu0 %v642
  %668 = vmatprep.subr.mxu0 0.0
  %669 = vmatpush1.msra.mxu0 0.0
  %670 = vmatprep.subr.mxu0 0.0
  %671 = vmatpush1.msra.mxu0 0.0
  %672 = vmatprep.subr.mxu0 0.0
  %673 = vmatpush1.msra.mxu0 0.0
  %674 = vmatprep.subr.mxu0 0.0
  %675 = vmatpush1.msra.mxu0 0.0
  %676 = vmatprep.subr.mxu0 0.0
  %677 = vmatpush1.msra.mxu0 0.0
  %678 = vmatprep.subr.mxu0 0.0
  %679 = vmatpush1.msra.mxu0 0.0
  %680 = vmatprep.subr.mxu0 0.0
  %681 = vmatpush1.msra.mxu0 0.0
  %682 = vmatprep.subr.mxu0 0.0
  %683 = vmatpush1.msra.mxu0 0.0
  %684 = vmatprep.subr.mxu0 0.0
  %685 = vmatpush1.msra.mxu0 0.0
  %686 = vmatprep.subr.mxu0 0.0
  %687 = vmatpush1.msra.mxu0 0.0
  %688 = vmatprep.subr.mxu0 0.0
  %689 = vmatpush1.msra.mxu0 0.0
  %690 = vmatprep.subr.mxu0 0.0
  %691 = vmatpush1.msra.mxu0 0.0
  %692 = vmatprep.subr.mxu0 0.0
  %693 = vmatpush1.msra.mxu0 0.0
  %694 = vmatprep.subr.mxu0 0.0
  %695 = vmatpush1.msra.mxu0 0.0
  %696 = vmatprep.subr.mxu0 0.0
  %697 = vmatpush1.msra.mxu0 0.0
  %698 = vmatprep.subr.mxu0 0.0
  %699 = vmatpush1.msra.mxu0 0.0
  %700 = vmatprep.subr.mxu0 0.0
  %701 = vmatpush1.msra.mxu0 0.0
  %702 = vmatprep.subr.mxu0 0.0
  %703 = vmatpush1.msra.mxu0 0.0
  %704 = vmatprep.subr.mxu0 0.0
  %705 = vmatpush1.msra.mxu0 0.0
  %706 = vmatprep.subr.mxu0 0.0
  %707 = vmatpush1.msra.mxu0 0.0
  %708 = vmatprep.subr.mxu0 0.0
  %709 = vmatpush1.msra.mxu0 0.0
  %710 = vmatprep.subr.mxu0 0.0
  %711 = vmatpush1.msra.mxu0 0.0
  %712 = vmatprep.subr.mxu0 0.0
  %713 = vmatpush1.msra.mxu0 0.0
  %714 = vmatprep.subr.mxu0 0.0
  %715 = vmatpush1.msra.mxu0 0.0
  %716 = vmatprep.mubr.f32.mxu0 0.0
  %717 = vmatmul.mubr.f32.gmra.mrb[0].mxu0 %v650
  %v718 = vpop.f32.mrb[0].mxu0
  %v719 = vadd.f32 %v648, %v718
  %v720 = vpop.f32.mrb[0].mxu0
  %v721 = vadd.f32 %v649, %v720
  %722 = vdwg.mxu0
  %v723 = vadd.f32 %v719, %v336
  %v724 = vadd.f32 %v721, %v340
  %v725 = vxor.u32 %v723, 2147483648
  %v726 = vxor.u32 %v724, 2147483648
  %v727 = vmul.f32 %v725, 1.442695
  %v728 = vpow.pop %v727
  %v729 = vmul.f32 %v726, 1.442695
  %v730 = vpow.pop %v729
  %v731 = vadd.f32 %v728, 1.0
  %v732 = vadd.f32 %v730, 1.0
  %v733 = vrcp.pop %v731
  %v734 = vmul.f32 1.0, %v733
  %v735 = vrcp.pop %v732
  %v736 = vmul.f32 1.0, %v735
  %v737 = vtanh.pop %v724
  %v738 = vmul.f32 %v734, %v619
  %v739 = vmul.f32 %v734, %v737
  %741 = vrot.lane.b32.xlu0 %v739, 64
  %v742 = vpop.permute.xlu0 %741
  %v744 = vadd.f32 %v738, %v742
  %v745 = vtanh.pop %v744
  %v746 = vmul.f32 %v736, %v745
  %748 = vrot.lane.b32.xlu0 %v746, 64
  %v749 = vpop.permute.xlu0 %748
  %751 = vst.msk [vmem:[#allocation3 + $0x18] sm:$0xff] %vm45, %v749
  %752 = vst.msk [vmem:[#allocation3 + $0x20] sm:$0xff] %vm376, %v749
  %v753 = vld [vmem:[%s2] sm:$0xff]
  %v754 = vld [vmem:[%s2 + $0x8] sm:$0xff]
  %v755 = vld [vmem:[%s2 + $0x10] sm:$0xff]
  %v756 = vld [vmem:[%s2 + $0x18] sm:$0xff]
  %v757 = vld [vmem:[%s2 + $0x20] sm:$0xff]
  %v758 = vld [vmem:[%s2 + $0x28] sm:$0xff]
  %v759 = vld [vmem:[%s2 + $0x30] sm:$0xff]
  %v760 = vld [vmem:[%s2 + $0x38] sm:$0xff]
  %v761 = vld [vmem:[%s2 + $0x40] sm:$0xff]
  %v762 = vld [vmem:[%s2 + $0x48] sm:$0xff]
  %v763 = vld [vmem:[%s2 + $0x50] sm:$0xff]
  %v764 = vld [vmem:[%s2 + $0x58] sm:$0xff]
  %v765 = vld [vmem:[%s2 + $0x60] sm:$0xff]
  %v766 = vld [vmem:[%s2 + $0x68] sm:$0xff]
  %v767 = vld [vmem:[%s2 + $0x70] sm:$0xff]
  %v768 = vld [vmem:[%s2 + $0x78] sm:$0xff]
  %v769 = vld [vmem:[#allocation2 + $0x40] sm:$0xff]
  %v770 = vld [vmem:[#allocation2 + $0x48] sm:$0xff]
  %v771 = vld [vmem:[#allocation2 + $0x30] sm:$0xff]
  %v772 = vld [vmem:[#allocation2 + $0x38] sm:$0xff]
  %v773 = vsel %vm253, %v769, %v771
  %v774 = vsel %vm254, %v770, %v772
  %v775 = vsel %vm257, %v749, 0
  %777 = vmatprep.subr.mxu0 %v754
  %778 = vmatpush1.msra.mxu0 %v753
  %779 = vmatprep.subr.mxu0 %v756
  %780 = vmatpush1.msra.mxu0 %v755
  %781 = vmatprep.subr.mxu0 %v758
  %782 = vmatpush1.msra.mxu0 %v757
  %783 = vmatprep.subr.mxu0 %v760
  %784 = vmatpush1.msra.mxu0 %v759
  %785 = vmatprep.subr.mxu0 %v762
  %786 = vmatpush1.msra.mxu0 %v761
  %787 = vmatprep.subr.mxu0 %v764
  %788 = vmatpush1.msra.mxu0 %v763
  %789 = vmatprep.subr.mxu0 %v766
  %790 = vmatpush1.msra.mxu0 %v765
  %791 = vmatprep.subr.mxu0 %v768
  %792 = vmatpush1.msra.mxu0 %v767
  %793 = vmatprep.subr.mxu0 0.0
  %794 = vmatpush1.msra.mxu0 0.0
  %795 = vmatprep.subr.mxu0 0.0
  %796 = vmatpush1.msra.mxu0 0.0
  %797 = vmatprep.subr.mxu0 0.0
  %798 = vmatpush1.msra.mxu0 0.0
  %799 = vmatprep.subr.mxu0 0.0
  %800 = vmatpush1.msra.mxu0 0.0
  %801 = vmatprep.subr.mxu0 0.0
  %802 = vmatpush1.msra.mxu0 0.0
  %803 = vmatprep.subr.mxu0 0.0
  %804 = vmatpush1.msra.mxu0 0.0
  %805 = vmatprep.subr.mxu0 0.0
  %806 = vmatpush1.msra.mxu0 0.0
  %807 = vmatprep.subr.mxu0 0.0
  %808 = vmatpush1.msra.mxu0 0.0
  %809 = vmatprep.subr.mxu0 0.0
  %810 = vmatpush1.msra.mxu0 0.0
  %811 = vmatprep.subr.mxu0 0.0
  %812 = vmatpush1.msra.mxu0 0.0
  %813 = vmatprep.subr.mxu0 0.0
  %814 = vmatpush1.msra.mxu0 0.0
  %815 = vmatprep.subr.mxu0 0.0
  %816 = vmatpush1.msra.mxu0 0.0
  %817 = vmatprep.subr.mxu0 0.0
  %818 = vmatpush1.msra.mxu0 0.0
  %819 = vmatprep.subr.mxu0 0.0
  %820 = vmatpush1.msra.mxu0 0.0
  %821 = vmatprep.subr.mxu0 0.0
  %822 = vmatpush1.msra.mxu0 0.0
  %823 = vmatprep.subr.mxu0 0.0
  %824 = vmatpush1.msra.mxu0 0.0
  %825 = vmatprep.subr.mxu0 0.0
  %826 = vmatpush1.msra.mxu0 0.0
  %827 = vmatprep.subr.mxu0 0.0
  %828 = vmatpush1.msra.mxu0 0.0
  %829 = vmatprep.subr.mxu0 0.0
  %830 = vmatpush1.msra.mxu0 0.0
  %831 = vmatprep.subr.mxu0 0.0
  %832 = vmatpush1.msra.mxu0 0.0
  %833 = vmatprep.subr.mxu0 0.0
  %834 = vmatpush1.msra.mxu0 0.0
  %835 = vmatprep.subr.mxu0 0.0
  %836 = vmatpush1.msra.mxu0 0.0
  %837 = vmatprep.subr.mxu0 0.0
  %838 = vmatpush1.msra.mxu0 0.0
  %839 = vmatprep.subr.mxu0 0.0
  %840 = vmatpush1.msra.mxu0 0.0
  %841 = vmatprep.mubr.f32.mxu0 0.0
  %842 = vmatmul.mubr.f32.gmra.mrb[0].mxu0 %v775
  %v843 = vpop.f32.mrb[0].mxu0
  %v844 = vadd.f32 %v773, %v843
  %v845 = vpop.f32.mrb[0].mxu0
  %v846 = vadd.f32 %v774, %v845
  %847 = vdwg.mxu0
  %v848 = vadd.f32 %v844, %v336
  %v849 = vadd.f32 %v846, %v340
  %v850 = vxor.u32 %v848, 2147483648
  %v851 = vxor.u32 %v849, 2147483648
  %v852 = vmul.f32 %v850, 1.442695
  %v853 = vpow.pop %v852
  %v854 = vmul.f32 %v851, 1.442695
  %v855 = vpow.pop %v854
  %v856 = vadd.f32 %v853, 1.0
  %v857 = vadd.f32 %v855, 1.0
  %v858 = vrcp.pop %v856
  %v859 = vmul.f32 1.0, %v858
  %v860 = vrcp.pop %v857
  %v861 = vmul.f32 1.0, %v860
  %v862 = vtanh.pop %v849
  %v863 = vmul.f32 %v859, %v744
  %v864 = vmul.f32 %v859, %v862
  %866 = vrot.lane.b32.xlu0 %v864, 64
  %v867 = vpop.permute.xlu0 %866
  %v869 = vadd.f32 %v863, %v867
  %v870 = vtanh.pop %v869
  %v871 = vmul.f32 %v861, %v870
  %873 = vrot.lane.b32.xlu0 %v871, 64
  %v874 = vpop.permute.xlu0 %873
  %876 = vst.msk [vmem:[#allocation3 + $0x20] sm:$0xff] %vm45, %v874
  %877 = vst.msk [vmem:[#allocation3 + $0x18] sm:$0xff] %vm376, %v874
  %v878 = vld [vmem:[%s2] sm:$0xff]
  %v879 = vld [vmem:[%s2 + $0x8] sm:$0xff]
  %v880 = vld [vmem:[%s2 + $0x10] sm:$0xff]
  %v881 = vld [vmem:[%s2 + $0x18] sm:$0xff]
  %v882 = vld [vmem:[%s2 + $0x20] sm:$0xff]
  %v883 = vld [vmem:[%s2 + $0x28] sm:$0xff]
  %v884 = vld [vmem:[%s2 + $0x30] sm:$0xff]
  %v885 = vld [vmem:[%s2 + $0x38] sm:$0xff]
  %v886 = vld [vmem:[%s2 + $0x40] sm:$0xff]
  %v887 = vld [vmem:[%s2 + $0x48] sm:$0xff]
  %v888 = vld [vmem:[%s2 + $0x50] sm:$0xff]
  %v889 = vld [vmem:[%s2 + $0x58] sm:$0xff]
  %v890 = vld [vmem:[%s2 + $0x60] sm:$0xff]
  %v891 = vld [vmem:[%s2 + $0x68] sm:$0xff]
  %v892 = vld [vmem:[%s2 + $0x70] sm:$0xff]
  %v893 = vld [vmem:[%s2 + $0x78] sm:$0xff]
  %v894 = vld [vmem:[#allocation2 + $0x50] sm:$0xff]
  %v895 = vld [vmem:[#allocation2 + $0x58] sm:$0xff]
  %v896 = vld [vmem:[#allocation2 + $0x20] sm:$0xff]
  %v897 = vld [vmem:[#allocation2 + $0x28] sm:$0xff]
  %v898 = vsel %vm253, %v894, %v896
  %v899 = vsel %vm254, %v895, %v897
  %v900 = vsel %vm257, %v874, 0
  %902 = vmatprep.subr.mxu0 %v879
  %903 = vmatpush1.msra.mxu0 %v878
  %904 = vmatprep.subr.mxu0 %v881
  %905 = vmatpush1.msra.mxu0 %v880
  %906 = vmatprep.subr.mxu0 %v883
  %907 = vmatpush1.msra.mxu0 %v882
  %908 = vmatprep.subr.mxu0 %v885
  %909 = vmatpush1.msra.mxu0 %v884
  %910 = vmatprep.subr.mxu0 %v887
  %911 = vmatpush1.msra.mxu0 %v886
  %912 = vmatprep.subr.mxu0 %v889
  %913 = vmatpush1.msra.mxu0 %v888
  %914 = vmatprep.subr.mxu0 %v891
  %915 = vmatpush1.msra.mxu0 %v890
  %916 = vmatprep.subr.mxu0 %v893
  %917 = vmatpush1.msra.mxu0 %v892
  %918 = vmatprep.subr.mxu0 0.0
  %919 = vmatpush1.msra.mxu0 0.0
  %920 = vmatprep.subr.mxu0 0.0
  %921 = vmatpush1.msra.mxu0 0.0
  %922 = vmatprep.subr.mxu0 0.0
  %923 = vmatpush1.msra.mxu0 0.0
  %924 = vmatprep.subr.mxu0 0.0
  %925 = vmatpush1.msra.mxu0 0.0
  %926 = vmatprep.subr.mxu0 0.0
  %927 = vmatpush1.msra.mxu0 0.0
  %928 = vmatprep.subr.mxu0 0.0
  %929 = vmatpush1.msra.mxu0 0.0
  %930 = vmatprep.subr.mxu0 0.0
  %931 = vmatpush1.msra.mxu0 0.0
  %932 = vmatprep.subr.mxu0 0.0
  %933 = vmatpush1.msra.mxu0 0.0
  %934 = vmatprep.subr.mxu0 0.0
  %935 = vmatpush1.msra.mxu0 0.0
  %936 = vmatprep.subr.mxu0 0.0
  %937 = vmatpush1.msra.mxu0 0.0
  %938 = vmatprep.subr.mxu0 0.0
  %939 = vmatpush1.msra.mxu0 0.0
  %940 = vmatprep.subr.mxu0 0.0
  %941 = vmatpush1.msra.mxu0 0.0
  %942 = vmatprep.subr.mxu0 0.0
  %943 = vmatpush1.msra.mxu0 0.0
  %944 = vmatprep.subr.mxu0 0.0
  %945 = vmatpush1.msra.mxu0 0.0
  %946 = vmatprep.subr.mxu0 0.0
  %947 = vmatpush1.msra.mxu0 0.0
  %948 = vmatprep.subr.mxu0 0.0
  %949 = vmatpush1.msra.mxu0 0.0
  %950 = vmatprep.subr.mxu0 0.0
  %951 = vmatpush1.msra.mxu0 0.0
  %952 = vmatprep.subr.mxu0 0.0
  %953 = vmatpush1.msra.mxu0 0.0
  %954 = vmatprep.subr.mxu0 0.0
  %955 = vmatpush1.msra.mxu0 0.0
  %956 = vmatprep.subr.mxu0 0.0
  %957 = vmatpush1.msra.mxu0 0.0
  %958 = vmatprep.subr.mxu0 0.0
  %959 = vmatpush1.msra.mxu0 0.0
  %960 = vmatprep.subr.mxu0 0.0
  %961 = vmatpush1.msra.mxu0 0.0
  %962 = vmatprep.subr.mxu0 0.0
  %963 = vmatpush1.msra.mxu0 0.0
  %964 = vmatprep.subr.mxu0 0.0
  %965 = vmatpush1.msra.mxu0 0.0
  %966 = vmatprep.mubr.f32.mxu0 0.0
  %967 = vmatmul.mubr.f32.gmra.mrb[0].mxu0 %v900
  %v968 = vpop.f32.mrb[0].mxu0
  %v969 = vadd.f32 %v898, %v968
  %v970 = vpop.f32.mrb[0].mxu0
  %v971 = vadd.f32 %v899, %v970
  %972 = vdwg.mxu0
  %v973 = vadd.f32 %v969, %v336
  %v974 = vadd.f32 %v971, %v340
  %v975 = vxor.u32 %v973, 2147483648
  %v976 = vxor.u32 %v974, 2147483648
  %v977 = vmul.f32 %v975, 1.442695
  %v978 = vpow.pop %v977
  %v979 = vmul.f32 %v976, 1.442695
  %v980 = vpow.pop %v979
  %v981 = vadd.f32 %v978, 1.0
  %v982 = vadd.f32 %v980, 1.0
  %v983 = vrcp.pop %v981
  %v984 = vmul.f32 1.0, %v983
  %v985 = vrcp.pop %v982
  %v986 = vmul.f32 1.0, %v985
  %v987 = vtanh.pop %v974
  %v988 = vmul.f32 %v984, %v869
  %v989 = vmul.f32 %v984, %v987
  %991 = vrot.lane.b32.xlu0 %v989, 64
  %v992 = vpop.permute.xlu0 %991
  %v994 = vadd.f32 %v988, %v992
  %v995 = vtanh.pop %v994
  %v996 = vmul.f32 %v986, %v995
  %998 = vrot.lane.b32.xlu0 %v996, 64
  %v999 = vpop.permute.xlu0 %998
  %1001 = vst.msk [vmem:[#allocation3 + $0x28] sm:$0xff] %vm45, %v999
  %1002 = vst.msk [vmem:[#allocation3 + $0x10] sm:$0xff] %vm376, %v999
  %v1003 = vld [vmem:[%s2] sm:$0xff]
  %v1004 = vld [vmem:[%s2 + $0x8] sm:$0xff]
  %v1005 = vld [vmem:[%s2 + $0x10] sm:$0xff]
  %v1006 = vld [vmem:[%s2 + $0x18] sm:$0xff]
  %v1007 = vld [vmem:[%s2 + $0x20] sm:$0xff]
  %v1008 = vld [vmem:[%s2 + $0x28] sm:$0xff]
  %v1009 = vld [vmem:[%s2 + $0x30] sm:$0xff]
  %v1010 = vld [vmem:[%s2 + $0x38] sm:$0xff]
  %v1011 = vld [vmem:[%s2 + $0x40] sm:$0xff]
  %v1012 = vld [vmem:[%s2 + $0x48] sm:$0xff]
  %v1013 = vld [vmem:[%s2 + $0x50] sm:$0xff]
  %v1014 = vld [vmem:[%s2 + $0x58] sm:$0xff]
  %v1015 = vld [vmem:[%s2 + $0x60] sm:$0xff]
  %v1016 = vld [vmem:[%s2 + $0x68] sm:$0xff]
  %v1017 = vld [vmem:[%s2 + $0x70] sm:$0xff]
  %v1018 = vld [vmem:[%s2 + $0x78] sm:$0xff]
  %v1019 = vld [vmem:[#allocation2 + $0x60] sm:$0xff]
  %v1020 = vld [vmem:[#allocation2 + $0x68] sm:$0xff]
  %v1021 = vld [vmem:[#allocation2 + $0x10] sm:$0xff]
  %v1022 = vld [vmem:[#allocation2 + $0x18] sm:$0xff]
  %v1023 = vsel %vm253, %v1019, %v1021
  %v1024 = vsel %vm254, %v1020, %v1022
  %v1025 = vsel %vm257, %v999, 0
  %1027 = vmatprep.subr.mxu0 %v1004
  %1028 = vmatpush1.msra.mxu0 %v1003
  %1029 = vmatprep.subr.mxu0 %v1006
  %1030 = vmatpush1.msra.mxu0 %v1005
  %1031 = vmatprep.subr.mxu0 %v1008
  %1032 = vmatpush1.msra.mxu0 %v1007
  %1033 = vmatprep.subr.mxu0 %v1010
  %1034 = vmatpush1.msra.mxu0 %v1009
  %1035 = vmatprep.subr.mxu0 %v1012
  %1036 = vmatpush1.msra.mxu0 %v1011
  %1037 = vmatprep.subr.mxu0 %v1014
  %1038 = vmatpush1.msra.mxu0 %v1013
  %1039 = vmatprep.subr.mxu0 %v1016
  %1040 = vmatpush1.msra.mxu0 %v1015
  %1041 = vmatprep.subr.mxu0 %v1018
  %1042 = vmatpush1.msra.mxu0 %v1017
  %1043 = vmatprep.subr.mxu0 0.0
  %1044 = vmatpush1.msra.mxu0 0.0
  %1045 = vmatprep.subr.mxu0 0.0
  %1046 = vmatpush1.msra.mxu0 0.0
  %1047 = vmatprep.subr.mxu0 0.0
  %1048 = vmatpush1.msra.mxu0 0.0
  %1049 = vmatprep.subr.mxu0 0.0
  %1050 = vmatpush1.msra.mxu0 0.0
  %1051 = vmatprep.subr.mxu0 0.0
  %1052 = vmatpush1.msra.mxu0 0.0
  %1053 = vmatprep.subr.mxu0 0.0
  %1054 = vmatpush1.msra.mxu0 0.0
  %1055 = vmatprep.subr.mxu0 0.0
  %1056 = vmatpush1.msra.mxu0 0.0
  %1057 = vmatprep.subr.mxu0 0.0
  %1058 = vmatpush1.msra.mxu0 0.0
  %1059 = vmatprep.subr.mxu0 0.0
  %1060 = vmatpush1.msra.mxu0 0.0
  %1061 = vmatprep.subr.mxu0 0.0
  %1062 = vmatpush1.msra.mxu0 0.0
  %1063 = vmatprep.subr.mxu0 0.0
  %1064 = vmatpush1.msra.mxu0 0.0
  %1065 = vmatprep.subr.mxu0 0.0
  %1066 = vmatpush1.msra.mxu0 0.0
  %1067 = vmatprep.subr.mxu0 0.0
  %1068 = vmatpush1.msra.mxu0 0.0
  %1069 = vmatprep.subr.mxu0 0.0
  %1070 = vmatpush1.msra.mxu0 0.0
  %1071 = vmatprep.subr.mxu0 0.0
  %1072 = vmatpush1.msra.mxu0 0.0
  %1073 = vmatprep.subr.mxu0 0.0
  %1074 = vmatpush1.msra.mxu0 0.0
  %1075 = vmatprep.subr.mxu0 0.0
  %1076 = vmatpush1.msra.mxu0 0.0
  %1077 = vmatprep.subr.mxu0 0.0
  %1078 = vmatpush1.msra.mxu0 0.0
  %1079 = vmatprep.subr.mxu0 0.0
  %1080 = vmatpush1.msra.mxu0 0.0
  %1081 = vmatprep.subr.mxu0 0.0
  %1082 = vmatpush1.msra.mxu0 0.0
  %1083 = vmatprep.subr.mxu0 0.0
  %1084 = vmatpush1.msra.mxu0 0.0
  %1085 = vmatprep.subr.mxu0 0.0
  %1086 = vmatpush1.msra.mxu0 0.0
  %1087 = vmatprep.subr.mxu0 0.0
  %1088 = vmatpush1.msra.mxu0 0.0
  %1089 = vmatprep.subr.mxu0 0.0
  %1090 = vmatpush1.msra.mxu0 0.0
  %1091 = vmatprep.mubr.f32.mxu0 0.0
  %1092 = vmatmul.mubr.f32.gmra.mrb[0].mxu0 %v1025
  %v1093 = vpop.f32.mrb[0].mxu0
  %v1094 = vadd.f32 %v1023, %v1093
  %v1095 = vpop.f32.mrb[0].mxu0
  %v1096 = vadd.f32 %v1024, %v1095
  %1097 = vdwg.mxu0
  %v1098 = vadd.f32 %v1094, %v336
  %v1099 = vadd.f32 %v1096, %v340
  %v1100 = vxor.u32 %v1098, 2147483648
  %v1101 = vxor.u32 %v1099, 2147483648
  %v1102 = vmul.f32 %v1100, 1.442695
  %v1103 = vpow.pop %v1102
  %v1104 = vmul.f32 %v1101, 1.442695
  %v1105 = vpow.pop %v1104
  %v1106 = vadd.f32 %v1103, 1.0
  %v1107 = vadd.f32 %v1105, 1.0
  %v1108 = vrcp.pop %v1106
  %v1109 = vmul.f32 1.0, %v1108
  %v1110 = vrcp.pop %v1107
  %v1111 = vmul.f32 1.0, %v1110
  %v1112 = vtanh.pop %v1099
  %v1113 = vmul.f32 %v1109, %v994
  %v1114 = vmul.f32 %v1109, %v1112
  %1116 = vrot.lane.b32.xlu0 %v1114, 64
  %v1117 = vpop.permute.xlu0 %1116
  %v1119 = vadd.f32 %v1113, %v1117
  %v1120 = vtanh.pop %v1119
  %v1121 = vmul.f32 %v1111, %v1120
  %1123 = vrot.lane.b32.xlu0 %v1121, 64
  %v1124 = vpop.permute.xlu0 %1123
  %1126 = vst.msk [vmem:[#allocation3 + $0x30] sm:$0xff] %vm45, %v1124
  %1127 = vst.msk [vmem:[#allocation3 + $0x8] sm:$0xff] %vm376, %v1124
  %v1128 = vld [vmem:[%s2] sm:$0xff]
  %v1129 = vld [vmem:[%s2 + $0x8] sm:$0xff]
  %v1130 = vld [vmem:[%s2 + $0x10] sm:$0xff]
  %v1131 = vld [vmem:[%s2 + $0x18] sm:$0xff]
  %v1132 = vld [vmem:[%s2 + $0x20] sm:$0xff]
  %v1133 = vld [vmem:[%s2 + $0x28] sm:$0xff]
  %v1134 = vld [vmem:[%s2 + $0x30] sm:$0xff]
  %v1135 = vld [vmem:[%s2 + $0x38] sm:$0xff]
  %v1136 = vld [vmem:[%s2 + $0x40] sm:$0xff]
  %v1137 = vld [vmem:[%s2 + $0x48] sm:$0xff]
  %v1138 = vld [vmem:[%s2 + $0x50] sm:$0xff]
  %v1139 = vld [vmem:[%s2 + $0x58] sm:$0xff]
  %v1140 = vld [vmem:[%s2 + $0x60] sm:$0xff]
  %v1141 = vld [vmem:[%s2 + $0x68] sm:$0xff]
  %v1142 = vld [vmem:[%s2 + $0x70] sm:$0xff]
  %v1143 = vld [vmem:[%s2 + $0x78] sm:$0xff]
  %v1144 = vld [vmem:[#allocation2 + $0x70] sm:$0xff]
  %v1145 = vld [vmem:[#allocation2 + $0x78] sm:$0xff]
  %v1146 = vld [vmem:[#allocation2] sm:$0xff]
  %v1147 = vld [vmem:[#allocation2 + $0x8] sm:$0xff]
  %v1148 = vsel %vm253, %v1144, %v1146
  %v1149 = vsel %vm254, %v1145, %v1147
  %v1150 = vsel %vm257, %v1124, 0
  %1152 = vmatprep.subr.mxu0 %v1129
  %1153 = vmatpush1.msra.mxu0 %v1128
  %1154 = vmatprep.subr.mxu0 %v1131
  %1155 = vmatpush1.msra.mxu0 %v1130
  %1156 = vmatprep.subr.mxu0 %v1133
  %1157 = vmatpush1.msra.mxu0 %v1132
  %1158 = vmatprep.subr.mxu0 %v1135
  %1159 = vmatpush1.msra.mxu0 %v1134
  %1160 = vmatprep.subr.mxu0 %v1137
  %1161 = vmatpush1.msra.mxu0 %v1136
  %1162 = vmatprep.subr.mxu0 %v1139
  %1163 = vmatpush1.msra.mxu0 %v1138
  %1164 = vmatprep.subr.mxu0 %v1141
  %1165 = vmatpush1.msra.mxu0 %v1140
  %1166 = vmatprep.subr.mxu0 %v1143
  %1167 = vmatpush1.msra.mxu0 %v1142
  %1168 = vmatprep.subr.mxu0 0.0
  %1169 = vmatpush1.msra.mxu0 0.0
  %1170 = vmatprep.subr.mxu0 0.0
  %1171 = vmatpush1.msra.mxu0 0.0
  %1172 = vmatprep.subr.mxu0 0.0
  %1173 = vmatpush1.msra.mxu0 0.0
  %1174 = vmatprep.subr.mxu0 0.0
  %1175 = vmatpush1.msra.mxu0 0.0
  %1176 = vmatprep.subr.mxu0 0.0
  %1177 = vmatpush1.msra.mxu0 0.0
  %1178 = vmatprep.subr.mxu0 0.0
  %1179 = vmatpush1.msra.mxu0 0.0
  %1180 = vmatprep.subr.mxu0 0.0
  %1181 = vmatpush1.msra.mxu0 0.0
  %1182 = vmatprep.subr.mxu0 0.0
  %1183 = vmatpush1.msra.mxu0 0.0
  %1184 = vmatprep.subr.mxu0 0.0
  %1185 = vmatpush1.msra.mxu0 0.0
  %1186 = vmatprep.subr.mxu0 0.0
  %1187 = vmatpush1.msra.mxu0 0.0
  %1188 = vmatprep.subr.mxu0 0.0
  %1189 = vmatpush1.msra.mxu0 0.0
  %1190 = vmatprep.subr.mxu0 0.0
  %1191 = vmatpush1.msra.mxu0 0.0
  %1192 = vmatprep.subr.mxu0 0.0
  %1193 = vmatpush1.msra.mxu0 0.0
  %1194 = vmatprep.subr.mxu0 0.0
  %1195 = vmatpush1.msra.mxu0 0.0
  %1196 = vmatprep.subr.mxu0 0.0
  %1197 = vmatpush1.msra.mxu0 0.0
  %1198 = vmatprep.subr.mxu0 0.0
  %1199 = vmatpush1.msra.mxu0 0.0
  %1200 = vmatprep.subr.mxu0 0.0
  %1201 = vmatpush1.msra.mxu0 0.0
  %1202 = vmatprep.subr.mxu0 0.0
  %1203 = vmatpush1.msra.mxu0 0.0
  %1204 = vmatprep.subr.mxu0 0.0
  %1205 = vmatpush1.msra.mxu0 0.0
  %1206 = vmatprep.subr.mxu0 0.0
  %1207 = vmatpush1.msra.mxu0 0.0
  %1208 = vmatprep.subr.mxu0 0.0
  %1209 = vmatpush1.msra.mxu0 0.0
  %1210 = vmatprep.subr.mxu0 0.0
  %1211 = vmatpush1.msra.mxu0 0.0
  %1212 = vmatprep.subr.mxu0 0.0
  %1213 = vmatpush1.msra.mxu0 0.0
  %1214 = vmatprep.subr.mxu0 0.0
  %1215 = vmatpush1.msra.mxu0 0.0
  %1216 = vmatprep.mubr.f32.mxu0 0.0
  %1217 = vmatmul.mubr.f32.gmra.mrb[0].mxu0 %v1150
  %v1218 = vpop.f32.mrb[0].mxu0
  %v1219 = vadd.f32 %v1148, %v1218
  %v1220 = vpop.f32.mrb[0].mxu0
  %v1221 = vadd.f32 %v1149, %v1220
  %1222 = vdwg.mxu0
  %v1223 = vadd.f32 %v1219, %v336
  %v1224 = vadd.f32 %v1221, %v340
  %v1225 = vxor.u32 %v1223, 2147483648
  %v1226 = vxor.u32 %v1224, 2147483648
  %v1227 = vmul.f32 %v1225, 1.442695
  %v1228 = vpow.pop %v1227
  %v1229 = vmul.f32 %v1226, 1.442695
  %v1230 = vpow.pop %v1229
  %v1231 = vadd.f32 %v1228, 1.0
  %v1232 = vadd.f32 %v1230, 1.0
  %v1233 = vrcp.pop %v1231
  %v1234 = vmul.f32 1.0, %v1233
  %v1235 = vrcp.pop %v1232
  %v1236 = vmul.f32 1.0, %v1235
  %v1237 = vtanh.pop %v1224
  %v1238 = vmul.f32 %v1234, %v1119
  %v1239 = vmul.f32 %v1234, %v1237
  %1241 = vrot.lane.b32.xlu0 %v1239, 64
  %v1242 = vpop.permute.xlu0 %1241
  %v1244 = vadd.f32 %v1238, %v1242
  %v1245 = vtanh.pop %v1244
  %v1246 = vmul.f32 %v1236, %v1245
  %1248 = vrot.lane.b32.xlu0 %v1246, 64
  %v1249 = vpop.permute.xlu0 %1248
  %1251 = vst.msk [vmem:[#allocation3 + $0x38] sm:$0xff] %vm45, %v1249
  %1252 = vst.msk [vmem:[#allocation3] sm:$0xff] %vm376, %v1249
  %v1253 = vld [vmem:[#allocation3] sm:$0xff]
  %v1254 = vld [vmem:[#allocation3 + $0x8] sm:$0xff]
  %v1255 = vld [vmem:[#allocation3 + $0x10] sm:$0xff]
  %v1256 = vld [vmem:[#allocation3 + $0x18] sm:$0xff]
  %v1257 = vld [vmem:[#allocation3 + $0x20] sm:$0xff]
  %v1258 = vld [vmem:[#allocation3 + $0x28] sm:$0xff]
  %v1259 = vld [vmem:[#allocation3 + $0x30] sm:$0xff]
  %v1260 = vld [vmem:[#allocation3 + $0x38] sm:$0xff]
  %v1261 = vld [vmem:[%s6] sm:$0xff]
  %v1262 = vld [vmem:[%s6 + $0x8] sm:$0xff]
  %v1263 = vld [vmem:[%s6 + $0x10] sm:$0xff]
  %v1264 = vld [vmem:[%s6 + $0x18] sm:$0xff]
  %v1265 = vld [vmem:[%s6 + $0x20] sm:$0xff]
  %v1266 = vld [vmem:[%s6 + $0x28] sm:$0xff]
  %v1267 = vld [vmem:[%s6 + $0x30] sm:$0xff]
  %v1268 = vld [vmem:[%s6 + $0x38] sm:$0xff]
  %v1269 = vld [vmem:[%s7] sm:$0x1]
  %v1271 = vlaneseq
  %v1272 = vshrl.u32 %v1271, 7
  %v1273 = vsub.s32 0, %v1272
  %v1274 = vrot.slane %v1269, %v1273
  %v1277 = vsel %vm257, %v1253, 0
  %v1280 = vsel %vm257, %v1254, 0
  %v1283 = vsel %vm257, %v1255, 0
  %v1286 = vsel %vm257, %v1256, 0
  %v1289 = vsel %vm257, %v1257, 0
  %v1292 = vsel %vm257, %v1258, 0
  %v1295 = vsel %vm257, %v1259, 0
  %v1298 = vsel %vm257, %v1260, 0
  %1300 = vmatprep.subr.mxu0 0.0
  %1301 = vmatpush1.msra.mxu0 %v1261
  %1302 = vmatprep.subr.mxu0 0.0
  %1303 = vmatpush1.msra.mxu0 %v1262
  %1304 = vmatprep.subr.mxu0 0.0
  %1305 = vmatpush1.msra.mxu0 %v1263
  %1306 = vmatprep.subr.mxu0 0.0
  %1307 = vmatpush1.msra.mxu0 %v1264
  %1308 = vmatprep.subr.mxu0 0.0
  %1309 = vmatpush1.msra.mxu0 %v1265
  %1310 = vmatprep.subr.mxu0 0.0
  %1311 = vmatpush1.msra.mxu0 %v1266
  %1312 = vmatprep.subr.mxu0 0.0
  %1313 = vmatpush1.msra.mxu0 %v1267
  %1314 = vmatprep.subr.mxu0 0.0
  %1315 = vmatpush1.msra.mxu0 %v1268
  %1316 = vmatprep.subr.mxu0 0.0
  %1317 = vmatpush1.msra.mxu0 0.0
  %1318 = vmatprep.subr.mxu0 0.0
  %1319 = vmatpush1.msra.mxu0 0.0
  %1320 = vmatprep.subr.mxu0 0.0
  %1321 = vmatpush1.msra.mxu0 0.0
  %1322 = vmatprep.subr.mxu0 0.0
  %1323 = vmatpush1.msra.mxu0 0.0
  %1324 = vmatprep.subr.mxu0 0.0
  %1325 = vmatpush1.msra.mxu0 0.0
  %1326 = vmatprep.subr.mxu0 0.0
  %1327 = vmatpush1.msra.mxu0 0.0
  %1328 = vmatprep.subr.mxu0 0.0
  %1329 = vmatpush1.msra.mxu0 0.0
  %1330 = vmatprep.subr.mxu0 0.0
  %1331 = vmatpush1.msra.mxu0 0.0
  %1332 = vmatprep.subr.mxu0 0.0
  %1333 = vmatpush1.msra.mxu0 0.0
  %1334 = vmatprep.subr.mxu0 0.0
  %1335 = vmatpush1.msra.mxu0 0.0
  %1336 = vmatprep.subr.mxu0 0.0
  %1337 = vmatpush1.msra.mxu0 0.0
  %1338 = vmatprep.subr.mxu0 0.0
  %1339 = vmatpush1.msra.mxu0 0.0
  %1340 = vmatprep.subr.mxu0 0.0
  %1341 = vmatpush1.msra.mxu0 0.0
  %1342 = vmatprep.subr.mxu0 0.0
  %1343 = vmatpush1.msra.mxu0 0.0
  %1344 = vmatprep.subr.mxu0 0.0
  %1345 = vmatpush1.msra.mxu0 0.0
  %1346 = vmatprep.subr.mxu0 0.0
  %1347 = vmatpush1.msra.mxu0 0.0
  %1348 = vmatprep.subr.mxu0 0.0
  %1349 = vmatpush1.msra.mxu0 0.0
  %1350 = vmatprep.subr.mxu0 0.0
  %1351 = vmatpush1.msra.mxu0 0.0
  %1352 = vmatprep.subr.mxu0 0.0
  %1353 = vmatpush1.msra.mxu0 0.0
  %1354 = vmatprep.subr.mxu0 0.0
  %1355 = vmatpush1.msra.mxu0 0.0
  %1356 = vmatprep.subr.mxu0 0.0
  %1357 = vmatpush1.msra.mxu0 0.0
  %1358 = vmatprep.subr.mxu0 0.0
  %1359 = vmatpush1.msra.mxu0 0.0
  %1360 = vmatprep.subr.mxu0 0.0
  %1361 = vmatpush1.msra.mxu0 0.0
  %1362 = vmatprep.subr.mxu0 0.0
  %1363 = vmatpush1.msra.mxu0 0.0
  %1364 = vmatprep.mubr.f32.mxu0 0.0
  %1365 = vmatmul.mubr.f32.gmra.mrb[0].mxu0 %v1277
  %v1366 = vpop.f32.mrb[0].mxu0
  %v1367 = vadd.f32 %v1274, %v1366
  %v1368 = vpop.f32.mrb[0].mxu0
  %1369 = vmatprep.mubr.f32.mxu0 0.0
  %1370 = vmatmul.mubr.f32.gmra.mrb[0].mxu0 %v1280
  %v1371 = vpop.f32.mrb[0].mxu0
  %v1372 = vadd.f32 %v1274, %v1371
  %v1373 = vpop.f32.mrb[0].mxu0
  %1374 = vmatprep.mubr.f32.mxu0 0.0
  %1375 = vmatmul.mubr.f32.gmra.mrb[0].mxu0 %v1283
  %v1376 = vpop.f32.mrb[0].mxu0
  %v1377 = vadd.f32 %v1274, %v1376
  %v1378 = vpop.f32.mrb[0].mxu0
  %1379 = vmatprep.mubr.f32.mxu0 0.0
  %1380 = vmatmul.mubr.f32.gmra.mrb[0].mxu0 %v1286
  %v1381 = vpop.f32.mrb[0].mxu0
  %v1382 = vadd.f32 %v1274, %v1381
  %v1383 = vpop.f32.mrb[0].mxu0
  %1384 = vmatprep.mubr.f32.mxu0 0.0
  %1385 = vmatmul.mubr.f32.gmra.mrb[0].mxu0 %v1289
  %v1386 = vpop.f32.mrb[0].mxu0
  %v1387 = vadd.f32 %v1274, %v1386
  %v1388 = vpop.f32.mrb[0].mxu0
  %1389 = vmatprep.mubr.f32.mxu0 0.0
  %1390 = vmatmul.mubr.f32.gmra.mrb[0].mxu0 %v1292
  %v1391 = vpop.f32.mrb[0].mxu0
  %v1392 = vadd.f32 %v1274, %v1391
  %v1393 = vpop.f32.mrb[0].mxu0
  %1394 = vmatprep.mubr.f32.mxu0 0.0
  %1395 = vmatmul.mubr.f32.gmra.mrb[0].mxu0 %v1295
  %v1396 = vpop.f32.mrb[0].mxu0
  %v1397 = vadd.f32 %v1274, %v1396
  %v1398 = vpop.f32.mrb[0].mxu0
  %1399 = vmatprep.mubr.f32.mxu0 0.0
  %1400 = vmatmul.mubr.f32.gmra.mrb[0].mxu0 %v1298
  %v1401 = vpop.f32.mrb[0].mxu0
  %v1402 = vadd.f32 %v1274, %v1401
  %v1403 = vpop.f32.mrb[0].mxu0
  %1404 = vdwg.mxu0
  %1405 = vst [vmem:[%s8] sm:$0xff] %v1367
  %1406 = vst [vmem:[%s8 + $0x8] sm:$0xff] %v1372
  %1407 = vst [vmem:[%s8 + $0x10] sm:$0xff] %v1377
  %1408 = vst [vmem:[%s8 + $0x18] sm:$0xff] %v1382
  %1409 = vst [vmem:[%s8 + $0x20] sm:$0xff] %v1387
  %1410 = vst [vmem:[%s8 + $0x28] sm:$0xff] %v1392
  %1411 = vst [vmem:[%s8 + $0x30] sm:$0xff] %v1397
  %1412 = vst [vmem:[%s8 + $0x38] sm:$0xff] %v1402
  // Predicated region
  $region34: #{bert_lstm_crf_forward.2} parent=0 // pred_check
    _
  $region35: #{bert_lstm_crf_forward.2} parent=0 // pred_check_branch
    %1414 = sbr.rel (0) target = $region37
  $region36: #{bert_lstm_crf_forward.2} parent=0 // pred_region
    _
  $region37: #{bert_lstm_crf_forward.2} parent=0 // pred_fallthru
    _
  // Predicated region
  $region38: #{bert_lstm_crf_forward.2} parent=0 // pred_check
    _
  $region39: #{bert_lstm_crf_forward.2} parent=0 // pred_check_branch
    %1416 = sbr.rel (0) target = $region41
  $region40: #{bert_lstm_crf_forward.2} parent=0 // pred_region
    _
  $region41: #{bert_lstm_crf_forward.2} parent=0 // pred_fallthru
    _

</llo_original>
